<compile_context>
chip_gen: v6e
topology: v6e:2x2x1
jax: 0.10.0
libtpu: 0.0.40
codegen_flags: <defaults>
</compile_context>

<pallas_src>
import jax
import jax.numpy as jnp
from jax import lax
from jax.experimental import pallas as pl
from jax.experimental.pallas import tpu as pltpu

# ----- small config consistent with CrossModalGeneratorArgs (scaled down) -----
HIDDEN = 32                      # args.hidden_size
NUM_HEADS = 4                    # args.num_heads
HEAD_DIM = HIDDEN // NUM_HEADS
NUM_LAYERS = 4                   # args.num_layers -> num_layers // 2 fusion layers
NUM_FUSION = NUM_LAYERS // 2
IMG_DIM = 64                     # args.image_encoder_dim
TEXT_DIM = 128                   # args.text_encoder_dim (multiple of 128 -> lane-dense output)
FFN_DIM = 4 * HIDDEN
DEC_DIM = 2 * HIDDEN
BATCH = 2
SEQ = 8
BS = BATCH * SEQ
LN_EPS = 1e-5                    # PyTorch nn.LayerNorm default
LANES = 128

KV_WIDTH = 2 * NUM_FUSION * HIDDEN
assert KV_WIDTH <= LANES and FFN_DIM <= LANES and TEXT_DIM <= LANES and DEC_DIM <= LANES

# Dropout layers are identity in eval mode (dropout_p == 0.0 at inference) and are omitted.
# TODO(synk): nn.GELU() defaults to the exact erf form; kernel AND reference use the tanh
# approximation since erf has no guaranteed Mosaic lowering.

# ---------------- packed-slab row layout (static Python constants) ----------------
# Weight slab `w_all` (W_ROWS, 128): every matrix stored transposed to (in, out), lane-padded.
RW_ENC1 = 0                                # (IMG_DIM, HIDDEN)
RW_ENC2 = RW_ENC1 + IMG_DIM                # (HIDDEN, HIDDEN)
RW_KV = RW_ENC2 + HIDDEN                   # (HIDDEN, KV_WIDTH)  [Wk_l0 | Wv_l0 | Wk_l1 | Wv_l1]
RW_LAYER0 = RW_KV + HIDDEN
LAYER_W_ROWS = 3 * HIDDEN + FFN_DIM        # wq(32) + wo(32) + ffn_w1(32) + ffn_w2(128) rows


def RW_Q(l): return RW_LAYER0 + l * LAYER_W_ROWS
def RW_O(l): return RW_Q(l) + HIDDEN
def RW_F1(l): return RW_O(l) + HIDDEN
def RW_F2(l): return RW_F1(l) + HIDDEN


RW_DEC1 = RW_LAYER0 + NUM_FUSION * LAYER_W_ROWS   # (HIDDEN, DEC_DIM)
RW_DEC2 = RW_DEC1 + HIDDEN                        # (DEC_DIM, TEXT_DIM)
W_ROWS = RW_DEC2 + DEC_DIM                        # 672 rows total (multiple of 8)

# Bias/LN slab `vecs` (V_ROWS, 128): one vector per row, lane-padded with zeros.
RV_ENC = 0          # b1, ln1_g, ln1_b, b2, ln2_g, ln2_b
RV_KV = 6           # [bk_l0 | bv_l0 | bk_l1 | bv_l1]
RV_LAYER0 = 7       # per layer: ln1_g, ln1_b, bq, bo, ln2_g, ln2_b, ffn_b1, ffn_b2
RV_DEC = RV_LAYER0 + NUM_FUSION * 8   # b1, b2, ln_g, ln_b
V_ROWS = 32


def _gelu_tanh(x):
    c = 0.7978845608028654  # sqrt(2/pi)
    return 0.5 * x * (1.0 + jnp.tanh(c * (x + 0.044715 * (x * x * x))))


def _layer_norm(x, gamma, beta):
    """x: (N, D); gamma/beta: (1, D).  One-pass mean / mean-of-squares (back-to-back reduces)."""
    mean = jnp.mean(x, axis=-1, keepdims=True)
    mean_sq = jnp.mean(x * x, axis=-1, keepdims=True)
    var = mean_sq - mean * mean
    return (x - mean) * lax.rsqrt(var + LN_EPS) * gamma + beta


def _bmm_nt(a, b):
    """(G, M, K) x (G, N, K) -> (G, M, N)."""
    return lax.dot_general(a, b, (((2,), (2,)), ((0,), (0,))),
                           preferred_element_type=jnp.float32)


def _bmm_nn(a, b):
    """(G, M, K) x (G, K, N) -> (G, M, N)."""
    return lax.dot_general(a, b, (((2,), (1,)), ((0,), (0,))),
                           preferred_element_type=jnp.float32)


def image_to_text_kernel(
    x_ref,       # (BS, IMG_DIM)   flattened image features
    w_ref,       # (W_ROWS, 128)   packed weight slab (all matrices, (in,out), lane-padded)
    v_ref,       # (V_ROWS, 128)   packed bias / LayerNorm vector slab
    out_ref,     # (BS, TEXT_DIM)
):
    f32 = jnp.float32
    H, hd, NH, NF = HIDDEN, HEAD_DIM, NUM_HEADS, NUM_FUSION

    vecs = v_ref[...]                                   # (32, 128): tiny, keep resident

    def vrow(r, width):
        return vecs[r:r + 1, :width]                    # (1, width) broadcast row

    def weight(r, rows, width):
        return w_ref[r:r + rows, :width]                # static 8-aligned window load

    # ---------------- image encoder (ModalityEncoder) ----------------
    x = x_ref[...]
    h = jnp.dot(x, weight(RW_ENC1, IMG_DIM, H), preferred_element_type=f32) + vrow(RV_ENC + 0, H)
    h = _layer_norm(h, vrow(RV_ENC + 1, H), vrow(RV_ENC + 2, H))
    h = jnp.maximum(h, 0.0)                             # ReLU
    h = jnp.dot(h, weight(RW_ENC2, H, H), preferred_element_type=f32) + vrow(RV_ENC + 3, H)
    encoded = _layer_norm(h, vrow(RV_ENC + 4, H), vrow(RV_ENC + 5, H))      # (BS, H)

    # ---- hoisted K/V projection for ALL fusion layers: one lane-dense (H, 128) matmul ----
    kv_all = jnp.dot(encoded, weight(RW_KV, H, KV_WIDTH),
                     preferred_element_type=f32) + vrow(RV_KV, KV_WIDTH)    # (BS, 128)

    def to_groups(x2):
        """(BS, H) with head-major columns -> (NH*B, S, hd); group index g = h*B + b."""
        parts = [x2[b * SEQ:(b + 1) * SEQ, g * hd:(g + 1) * hd]
                 for g in range(NH) for b in range(BATCH)]
        return jnp.stack(parts, axis=0)

    def from_groups(o_g):
        """(NH*B, S, hd) -> (BS, H) with head-major columns (== PyTorch concat of heads)."""
        rows = [jnp.concatenate([o_g[g * BATCH + b] for g in range(NH)], axis=-1)   # (S, H)
                for b in range(BATCH)]
        return jnp.concatenate(rows, axis=0)            # (BS, H)

    scale = 1.0 / (hd ** 0.5)
    fused = encoded

    for l in range(NF):          # small static constant -> clean Python unroll
        rv = RV_LAYER0 + l * 8

        # ---- cross-modal attention (pre-LN on the query side only) ----
        qn = _layer_norm(fused, vrow(rv + 0, H), vrow(rv + 1, H))
        q2 = jnp.dot(qn, weight(RW_Q(l), H, H), preferred_element_type=f32) + vrow(rv + 2, H)
        k2 = kv_all[:, l * 2 * H:l * 2 * H + H]          # (BS, H)  K for this layer
        v2 = kv_all[:, l * 2 * H + H:(l + 1) * 2 * H]    # (BS, H)  V for this layer

        q_g = to_groups(q2)                              # (NH*B, S, hd)
        k_g = to_groups(k2)
        v_g = to_groups(v2)

        # Batch is kept separate (no flattened-BS softmax, no block-diagonal bias).
        # An optional user attention_mask would be added to `s` here.
        s = _bmm_nt(q_g, k_g) * scale                    # (NH*B, S, S)
        m = jnp.max(s, axis=-1, keepdims=True)
        p = jnp.exp(s - m)
        denom = jnp.sum(p, axis=-1, keepdims=True)       # >= 1, no guard needed without masks
        o_g = _bmm_nn(p, v_g) * pl.reciprocal(denom, approx=True)   # (NH*B, S, hd)

        # out_proj: single K=H matmul on the head-concatenated output.
        o_cat = from_groups(o_g)                         # (BS, H)
        attn_out = jnp.dot(o_cat, weight(RW_O(l), H, H),
                           preferred_element_type=f32) + vrow(rv + 3, H)
        fused = fused + attn_out                         # residual 1

        # ---- feed-forward block ----
        fn = _layer_norm(fused, vrow(rv + 4, H), vrow(rv + 5, H))
        f1 = jnp.dot(fn, weight(RW_F1(l), H, FFN_DIM),
                     preferred_element_type=f32) + vrow(rv + 6, FFN_DIM)    # lane-dense (BS,128)
        f1 = _gelu_tanh(f1)
        f2 = jnp.dot(f1, weight(RW_F2(l), FFN_DIM, H),
                     preferred_element_type=f32) + vrow(rv + 7, H)
        fused = fused + f2                               # residual 2

    # ---------------- text decoder ----------------
    d = jnp.dot(fused, weight(RW_DEC1, H, DEC_DIM),
                preferred_element_type=f32) + vrow(RV_DEC + 0, DEC_DIM)
    d = jnp.maximum(d, 0.0)
    d = jnp.dot(d, weight(RW_DEC2, DEC_DIM, TEXT_DIM),
                preferred_element_type=f32) + vrow(RV_DEC + 1, TEXT_DIM)    # lane-dense (BS,128)
    out = _layer_norm(d, vrow(RV_DEC + 2, TEXT_DIM), vrow(RV_DEC + 3, TEXT_DIM))

    out_ref[...] = out.astype(out_ref.dtype)             # (BS, 128): full-lane, unmasked stores


def pack_params(params):
    """Pack PyTorch-layout parameters into two lane-dense slabs (1 weight DMA + 1 vector DMA)."""
    enc, fus, dec = params["enc"], params["fusion"], params["dec"]

    def pad_w(w_t):                                       # (rows, out) -> (rows, 128)
        return jnp.pad(w_t, ((0, 0), (0, LANES - w_t.shape[1])))

    w_blocks = [pad_w(enc["w1"].T),                       # RW_ENC1
                pad_w(enc["w2"].T)]                       # RW_ENC2
    w_kv = jnp.concatenate(
        [jnp.concatenate([fl["wk"].T, fl["wv"].T], axis=1) for fl in fus], axis=1)
    w_blocks.append(pad_w(w_kv))                          # RW_KV  (32, 128), genuinely dense
    for fl in fus:                                        # RW_Q/RW_O/RW_F1/RW_F2 per layer
        w_blocks += [pad_w(fl["wq"].T), pad_w(fl["wo"].T),
                     pad_w(fl["ffn_w1"].T), pad_w(fl["ffn_w2"].T)]
    w_blocks += [pad_w(dec["w1"].T), pad_w(dec["w2"].T)]  # RW_DEC1, RW_DEC2
    w_all = jnp.concatenate(w_blocks, axis=0)
    assert w_all.shape == (W_ROWS, LANES)

    def row(v):                                           # 1-D vector -> (1, 128) padded row
        return jnp.pad(v, (0, LANES - v.shape[0]))[None, :]

    rows = [row(enc["b1"]), row(enc["ln1_g"]), row(enc["ln1_b"]),
            row(enc["b2"]), row(enc["ln2_g"]), row(enc["ln2_b"])]
    b_kv = jnp.concatenate([jnp.concatenate([fl["bk"], fl["bv"]]) for fl in fus])
    rows.append(row(b_kv))
    for fl in fus:
        rows += [row(fl["ln1_g"]), row(fl["ln1_b"]), row(fl["bq"]), row(fl["bo"]),
                 row(fl["ln2_g"]), row(fl["ln2_b"]), row(fl["ffn_b1"]), row(fl["ffn_b2"])]
    rows += [row(dec["b1"]), row(dec["b2"]), row(dec["ln_g"]), row(dec["ln_b"])]
    vecs = jnp.concatenate(rows, axis=0)
    vecs = jnp.pad(vecs, ((0, V_ROWS - vecs.shape[0]), (0, 0)))
    return w_all, vecs


def image_to_text_generator(image_features, params):
    B, S, img_dim = image_features.shape
    assert img_dim == IMG_DIM and B == BATCH and S == SEQ
    x_flat = image_features.reshape(B * S, img_dim)
    w_all, vecs = pack_params(params)

    vmem_spec = pl.BlockSpec(memory_space=pltpu.MemorySpace.VMEM)
    out_flat = pl.pallas_call(
        image_to_text_kernel,
        out_shape=jax.ShapeDtypeStruct((B * S, TEXT_DIM), jnp.float32),
        in_specs=[vmem_spec, vmem_spec, vmem_spec],
        out_specs=vmem_spec,
        # No grid: whole problem (<0.5 MiB of operands) fits in VMEM; a single invocation
        # avoids per-grid-step pipeline overhead entirely at this toy size.
    )(x_flat, w_all, vecs)

    return out_flat.reshape(B, S, TEXT_DIM)


def reference_forward(image_features, params):
    """Plain-JAX mirror of ImageToTextGenerator.forward (eval mode)."""
    B, S, _ = image_features.shape
    hp = lax.Precision.HIGHEST

    def lin(t, w, b):
        return jnp.dot(t, w.T, precision=hp) + b

    def ln(t, g, b):
        mu = jnp.mean(t, axis=-1, keepdims=True)
        var = jnp.mean((t - mu) ** 2, axis=-1, keepdims=True)
        return (t - mu) / jnp.sqrt(var + LN_EPS) * g + b

    enc = params["enc"]
    e = lin(image_features, enc["w1"], enc["b1"])
    e = ln(e, enc["ln1_g"], enc["ln1_b"])
    e = jnp.maximum(e, 0.0)
    e = lin(e, enc["w2"], enc["b2"])
    encoded = ln(e, enc["ln2_g"], enc["ln2_b"])

    fused = encoded
    for fl in params["fusion"]:
        qn = ln(fused, fl["ln1_g"], fl["ln1_b"])
        q = lin(qn, fl["wq"], fl["bq"]).reshape(B, S, NUM_HEADS, HEAD_DIM).transpose(0, 2, 1, 3)
        k = lin(encoded, fl["wk"], fl["bk"]).reshape(B, S, NUM_HEADS, HEAD_DIM).transpose(0, 2, 1, 3)
        v = lin(encoded, fl["wv"], fl["bv"]).reshape(B, S, NUM_HEADS, HEAD_DIM).transpose(0, 2, 1, 3)
        scores = jnp.einsum("bhqd,bhkd->bhqk", q, k, precision=hp) / (HEAD_DIM ** 0.5)
        probs = jax.nn.softmax(scores, axis=-1)
        attn = jnp.einsum("bhqk,bhkd->bhqd", probs, v, precision=hp)
        attn = attn.transpose(0, 2, 1, 3).reshape(B, S, HIDDEN)
        fused = fused + lin(attn, fl["wo"], fl["bo"])

        fn = ln(fused, fl["ln2_g"], fl["ln2_b"])
        f = lin(fn, fl["ffn_w1"], fl["ffn_b1"])
        f = _gelu_tanh(f)
        f = lin(f, fl["ffn_w2"], fl["ffn_b2"])
        fused = fused + f

    dec = params["dec"]
    d = lin(fused, dec["w1"], dec["b1"])
    d = jnp.maximum(d, 0.0)
    d = lin(d, dec["w2"], dec["b2"])
    return ln(d, dec["ln_g"], dec["ln_b"])


def init_params(key):
    keys = iter(jax.random.split(key, 64))
    scale = 0.1

    def w(*shape):
        return scale * jax.random.normal(next(keys), shape, jnp.float32)

    def gamma(n):
        return 1.0 + 0.1 * jax.random.normal(next(keys), (n,), jnp.float32)

    def beta(n):
        return 0.1 * jax.random.normal(next(keys), (n,), jnp.float32)

    enc = {"w1": w(HIDDEN, IMG_DIM), "b1": w(HIDDEN),
           "ln1_g": gamma(HIDDEN), "ln1_b": beta(HIDDEN),
           "w2": w(HIDDEN, HIDDEN), "b2": w(HIDDEN),
           "ln2_g": gamma(HIDDEN), "ln2_b": beta(HIDDEN)}

    fusion = []
    for _ in range(NUM_FUSION):
        fusion.append({
            "ln1_g": gamma(HIDDEN), "ln1_b": beta(HIDDEN),
            "wq": w(HIDDEN, HIDDEN), "bq": w(HIDDEN),
            "wk": w(HIDDEN, HIDDEN), "bk": w(HIDDEN),
            "wv": w(HIDDEN, HIDDEN), "bv": w(HIDDEN),
            "wo": w(HIDDEN, HIDDEN), "bo": w(HIDDEN),
            "ln2_g": gamma(HIDDEN), "ln2_b": beta(HIDDEN),
            "ffn_w1": w(FFN_DIM, HIDDEN), "ffn_b1": w(FFN_DIM),
            "ffn_w2": w(HIDDEN, FFN_DIM), "ffn_b2": w(HIDDEN),
        })

    dec = {"w1": w(DEC_DIM, HIDDEN), "b1": w(DEC_DIM),
           "w2": w(TEXT_DIM, DEC_DIM), "b2": w(TEXT_DIM),
           "ln_g": gamma(TEXT_DIM), "ln_b": beta(TEXT_DIM)}

    return {"enc": enc, "fusion": fusion, "dec": dec}


if __name__ == "__main__":
    root = jax.random.PRNGKey(0)
    k_params, k_x = jax.random.split(root)

    params = init_params(k_params)
    image_features = jax.random.normal(k_x, (BATCH, SEQ, IMG_DIM), jnp.float32)

    out = image_to_text_generator(image_features, params)
    out = jax.block_until_ready(out)

    ref = reference_forward(image_features, params)
    assert out.shape == (BATCH, SEQ, TEXT_DIM)
    max_err = jnp.max(jnp.abs(out - ref))
    assert jnp.allclose(out, ref, atol=2e-3, rtol=2e-3), f"mismatch vs reference (max abs err {max_err})"

    print("KERNEL_OK")
</pallas_src>

<mosaic_0001>
module attributes {stable_mosaic.version = 11 : i64} {
  func.func @image_to_text_kernel(%arg0: memref<16x64xf32, #tpu.memory_space<vmem>>, %arg1: memref<672x128xf32, #tpu.memory_space<vmem>>, %arg2: memref<32x128xf32, #tpu.memory_space<vmem>>, %arg3: memref<16x128xf32, #tpu.memory_space<vmem>>) attributes {dimension_semantics = [], scalar_prefetch = 0 : i64, scratch_operands = 0 : i64, tpu.core_type = #tpu.core_type<tc>} {
    %c0 = arith.constant 0 : index
    %c0_0 = arith.constant 0 : index
    %0 = vector.load %arg2[%c0, %c0_0] : memref<32x128xf32, #tpu.memory_space<vmem>>, vector<32x128xf32>
    %c0_1 = arith.constant 0 : index
    %c0_2 = arith.constant 0 : index
    %1 = vector.load %arg0[%c0_1, %c0_2] : memref<16x64xf32, #tpu.memory_space<vmem>>, vector<16x64xf32>
    %c0_3 = arith.constant 0 : index
    %c0_4 = arith.constant 0 : index
    %2 = vector.load %arg1[%c0_3, %c0_4] : memref<672x128xf32, #tpu.memory_space<vmem>>, vector<64x32xf32>
    %cst = arith.constant dense<0.000000e+00> : vector<16x32xf32>
    %3 = tpu.matmul %1, %2, %cst {dimension_numbers = #tpu.dot_dimension_numbers<[1], [0], [0], [1], [0, 0, 1, 1], [], []>} : vector<16x64xf32>, vector<64x32xf32>, vector<16x32xf32> -> vector<16x32xf32>
    %4 = vector.extract_strided_slice %0 {offsets = [0, 0], sizes = [1, 32], strides = [1, 1]} : vector<32x128xf32> to vector<1x32xf32>
    %5 = vector.broadcast %4 : vector<1x32xf32> to vector<16x32xf32>
    %6 = arith.addf %3, %5 : vector<16x32xf32>
    %7 = vector.extract_strided_slice %0 {offsets = [1, 0], sizes = [1, 32], strides = [1, 1]} : vector<32x128xf32> to vector<1x32xf32>
    %8 = vector.extract_strided_slice %0 {offsets = [2, 0], sizes = [1, 32], strides = [1, 1]} : vector<32x128xf32> to vector<1x32xf32>
    %cst_5 = arith.constant dense<0.000000e+00> : vector<16xf32>
    %9 = vector.multi_reduction <add>, %6, %cst_5 [1] : vector<16x32xf32> to vector<16xf32>
    %10 = vector.shape_cast %9 : vector<16xf32> to vector<16x1xf32>
    %cst_6 = arith.constant 3.200000e+01 : f32
    %11 = vector.broadcast %cst_6 : f32 to vector<16x1xf32>
    %12 = arith.divf %10, %11 : vector<16x1xf32>
    %13 = arith.mulf %6, %6 : vector<16x32xf32>
    %cst_7 = arith.constant dense<0.000000e+00> : vector<16xf32>
    %14 = vector.multi_reduction <add>, %13, %cst_7 [1] : vector<16x32xf32> to vector<16xf32>
    %15 = vector.shape_cast %14 : vector<16xf32> to vector<16x1xf32>
    %cst_8 = arith.constant 3.200000e+01 : f32
    %16 = vector.broadcast %cst_8 : f32 to vector<16x1xf32>
    %17 = arith.divf %15, %16 : vector<16x1xf32>
    %18 = arith.mulf %12, %12 : vector<16x1xf32>
    %19 = arith.subf %17, %18 : vector<16x1xf32>
    %20 = vector.broadcast %12 : vector<16x1xf32> to vector<16x32xf32>
    %21 = arith.subf %6, %20 : vector<16x32xf32>
    %cst_9 = arith.constant 9.99999974E-6 : f32
    %22 = vector.broadcast %cst_9 : f32 to vector<16x1xf32>
    %23 = arith.addf %19, %22 : vector<16x1xf32>
    %24 = math.rsqrt %23 : vector<16x1xf32>
    %25 = vector.broadcast %24 : vector<16x1xf32> to vector<16x32xf32>
    %26 = arith.mulf %21, %25 : vector<16x32xf32>
    %27 = vector.broadcast %7 : vector<1x32xf32> to vector<16x32xf32>
    %28 = arith.mulf %26, %27 : vector<16x32xf32>
    %29 = vector.broadcast %8 : vector<1x32xf32> to vector<16x32xf32>
    %30 = arith.addf %28, %29 : vector<16x32xf32>
    %cst_10 = arith.constant 0.000000e+00 : f32
    %31 = vector.broadcast %cst_10 : f32 to vector<16x32xf32>
    %32 = arith.maximumf %30, %31 : vector<16x32xf32>
    %c64 = arith.constant 64 : index
    %c0_11 = arith.constant 0 : index
    %33 = vector.load %arg1[%c64, %c0_11] : memref<672x128xf32, #tpu.memory_space<vmem>>, vector<32x32xf32>
    %cst_12 = arith.constant dense<0.000000e+00> : vector<16x32xf32>
    %34 = tpu.matmul %32, %33, %cst_12 {dimension_numbers = #tpu.dot_dimension_numbers<[1], [0], [0], [1], [0, 0, 1, 1], [], []>} : vector<16x32xf32>, vector<32x32xf32>, vector<16x32xf32> -> vector<16x32xf32>
    %35 = vector.extract_strided_slice %0 {offsets = [3, 0], sizes = [1, 32], strides = [1, 1]} : vector<32x128xf32> to vector<1x32xf32>
    %36 = vector.broadcast %35 : vector<1x32xf32> to vector<16x32xf32>
    %37 = arith.addf %34, %36 : vector<16x32xf32>
    %38 = vector.extract_strided_slice %0 {offsets = [4, 0], sizes = [1, 32], strides = [1, 1]} : vector<32x128xf32> to vector<1x32xf32>
    %39 = vector.extract_strided_slice %0 {offsets = [5, 0], sizes = [1, 32], strides = [1, 1]} : vector<32x128xf32> to vector<1x32xf32>
    %cst_13 = arith.constant dense<0.000000e+00> : vector<16xf32>
    %40 = vector.multi_reduction <add>, %37, %cst_13 [1] : vector<16x32xf32> to vector<16xf32>
    %41 = vector.shape_cast %40 : vector<16xf32> to vector<16x1xf32>
    %cst_14 = arith.constant 3.200000e+01 : f32
    %42 = vector.broadcast %cst_14 : f32 to vector<16x1xf32>
    %43 = arith.divf %41, %42 : vector<16x1xf32>
    %44 = arith.mulf %37, %37 : vector<16x32xf32>
    %cst_15 = arith.constant dense<0.000000e+00> : vector<16xf32>
    %45 = vector.multi_reduction <add>, %44, %cst_15 [1] : vector<16x32xf32> to vector<16xf32>
    %46 = vector.shape_cast %45 : vector<16xf32> to vector<16x1xf32>
    %cst_16 = arith.constant 3.200000e+01 : f32
    %47 = vector.broadcast %cst_16 : f32 to vector<16x1xf32>
    %48 = arith.divf %46, %47 : vector<16x1xf32>
    %49 = arith.mulf %43, %43 : vector<16x1xf32>
    %50 = arith.subf %48, %49 : vector<16x1xf32>
    %51 = vector.broadcast %43 : vector<16x1xf32> to vector<16x32xf32>
    %52 = arith.subf %37, %51 : vector<16x32xf32>
    %cst_17 = arith.constant 9.99999974E-6 : f32
    %53 = vector.broadcast %cst_17 : f32 to vector<16x1xf32>
    %54 = arith.addf %50, %53 : vector<16x1xf32>
    %55 = math.rsqrt %54 : vector<16x1xf32>
    %56 = vector.broadcast %55 : vector<16x1xf32> to vector<16x32xf32>
    %57 = arith.mulf %52, %56 : vector<16x32xf32>
    %58 = vector.broadcast %38 : vector<1x32xf32> to vector<16x32xf32>
    %59 = arith.mulf %57, %58 : vector<16x32xf32>
    %60 = vector.broadcast %39 : vector<1x32xf32> to vector<16x32xf32>
    %61 = arith.addf %59, %60 : vector<16x32xf32>
    %c96 = arith.constant 96 : index
    %c0_18 = arith.constant 0 : index
    %62 = vector.load %arg1[%c96, %c0_18] : memref<672x128xf32, #tpu.memory_space<vmem>>, vector<32x128xf32>
    %cst_19 = arith.constant dense<0.000000e+00> : vector<16x128xf32>
    %63 = tpu.matmul %61, %62, %cst_19 {dimension_numbers = #tpu.dot_dimension_numbers<[1], [0], [0], [1], [0, 0, 1, 1], [], []>} : vector<16x32xf32>, vector<32x128xf32>, vector<16x128xf32> -> vector<16x128xf32>
    %64 = vector.extract_strided_slice %0 {offsets = [6, 0], sizes = [1, 128], strides = [1, 1]} : vector<32x128xf32> to vector<1x128xf32>
    %65 = vector.broadcast %64 : vector<1x128xf32> to vector<16x128xf32>
    %66 = arith.addf %63, %65 : vector<16x128xf32>
    %67 = vector.extract_strided_slice %0 {offsets = [7, 0], sizes = [1, 32], strides = [1, 1]} : vector<32x128xf32> to vector<1x32xf32>
    %68 = vector.extract_strided_slice %0 {offsets = [8, 0], sizes = [1, 32], strides = [1, 1]} : vector<32x128xf32> to vector<1x32xf32>
    %cst_20 = arith.constant dense<0.000000e+00> : vector<16xf32>
    %69 = vector.multi_reduction <add>, %61, %cst_20 [1] : vector<16x32xf32> to vector<16xf32>
    %70 = vector.shape_cast %69 : vector<16xf32> to vector<16x1xf32>
    %cst_21 = arith.constant 3.200000e+01 : f32
    %71 = vector.broadcast %cst_21 : f32 to vector<16x1xf32>
    %72 = arith.divf %70, %71 : vector<16x1xf32>
    %73 = arith.mulf %61, %61 : vector<16x32xf32>
    %cst_22 = arith.constant dense<0.000000e+00> : vector<16xf32>
    %74 = vector.multi_reduction <add>, %73, %cst_22 [1] : vector<16x32xf32> to vector<16xf32>
    %75 = vector.shape_cast %74 : vector<16xf32> to vector<16x1xf32>
    %cst_23 = arith.constant 3.200000e+01 : f32
    %76 = vector.broadcast %cst_23 : f32 to vector<16x1xf32>
    %77 = arith.divf %75, %76 : vector<16x1xf32>
    %78 = arith.mulf %72, %72 : vector<16x1xf32>
    %79 = arith.subf %77, %78 : vector<16x1xf32>
    %80 = vector.broadcast %72 : vector<16x1xf32> to vector<16x32xf32>
    %81 = arith.subf %61, %80 : vector<16x32xf32>
    %cst_24 = arith.constant 9.99999974E-6 : f32
    %82 = vector.broadcast %cst_24 : f32 to vector<16x1xf32>
    %83 = arith.addf %79, %82 : vector<16x1xf32>
    %84 = math.rsqrt %83 : vector<16x1xf32>
    %85 = vector.broadcast %84 : vector<16x1xf32> to vector<16x32xf32>
    %86 = arith.mulf %81, %85 : vector<16x32xf32>
    %87 = vector.broadcast %67 : vector<1x32xf32> to vector<16x32xf32>
    %88 = arith.mulf %86, %87 : vector<16x32xf32>
    %89 = vector.broadcast %68 : vector<1x32xf32> to vector<16x32xf32>
    %90 = arith.addf %88, %89 : vector<16x32xf32>
    %c128 = arith.constant 128 : index
    %c0_25 = arith.constant 0 : index
    %91 = vector.load %arg1[%c128, %c0_25] : memref<672x128xf32, #tpu.memory_space<vmem>>, vector<32x32xf32>
    %cst_26 = arith.constant dense<0.000000e+00> : vector<16x32xf32>
    %92 = tpu.matmul %90, %91, %cst_26 {dimension_numbers = #tpu.dot_dimension_numbers<[1], [0], [0], [1], [0, 0, 1, 1], [], []>} : vector<16x32xf32>, vector<32x32xf32>, vector<16x32xf32> -> vector<16x32xf32>
    %93 = vector.extract_strided_slice %0 {offsets = [9, 0], sizes = [1, 32], strides = [1, 1]} : vector<32x128xf32> to vector<1x32xf32>
    %94 = vector.broadcast %93 : vector<1x32xf32> to vector<16x32xf32>
    %95 = arith.addf %92, %94 : vector<16x32xf32>
    %96 = vector.extract_strided_slice %66 {offsets = [0, 0], sizes = [16, 32], strides = [1, 1]} : vector<16x128xf32> to vector<16x32xf32>
    %97 = vector.extract_strided_slice %66 {offsets = [0, 32], sizes = [16, 32], strides = [1, 1]} : vector<16x128xf32> to vector<16x32xf32>
    %98 = vector.extract_strided_slice %95 {offsets = [0, 0], sizes = [8, 8], strides = [1, 1]} : vector<16x32xf32> to vector<8x8xf32>
    %99 = vector.extract_strided_slice %95 {offsets = [8, 0], sizes = [8, 8], strides = [1, 1]} : vector<16x32xf32> to vector<8x8xf32>
    %100 = vector.extract_strided_slice %95 {offsets = [0, 8], sizes = [8, 8], strides = [1, 1]} : vector<16x32xf32> to vector<8x8xf32>
    %101 = vector.extract_strided_slice %95 {offsets = [8, 8], sizes = [8, 8], strides = [1, 1]} : vector<16x32xf32> to vector<8x8xf32>
    %102 = vector.extract_strided_slice %95 {offsets = [0, 16], sizes = [8, 8], strides = [1, 1]} : vector<16x32xf32> to vector<8x8xf32>
    %103 = vector.extract_strided_slice %95 {offsets = [8, 16], sizes = [8, 8], strides = [1, 1]} : vector<16x32xf32> to vector<8x8xf32>
    %104 = vector.extract_strided_slice %95 {offsets = [0, 24], sizes = [8, 8], strides = [1, 1]} : vector<16x32xf32> to vector<8x8xf32>
    %105 = vector.extract_strided_slice %95 {offsets = [8, 24], sizes = [8, 8], strides = [1, 1]} : vector<16x32xf32> to vector<8x8xf32>
    %106 = vector.shape_cast %98 : vector<8x8xf32> to vector<1x8x8xf32>
    %107 = vector.shape_cast %99 : vector<8x8xf32> to vector<1x8x8xf32>
    %108 = vector.shape_cast %100 : vector<8x8xf32> to vector<1x8x8xf32>
    %109 = vector.shape_cast %101 : vector<8x8xf32> to vector<1x8x8xf32>
    %110 = vector.shape_cast %102 : vector<8x8xf32> to vector<1x8x8xf32>
    %111 = vector.shape_cast %103 : vector<8x8xf32> to vector<1x8x8xf32>
    %112 = vector.shape_cast %104 : vector<8x8xf32> to vector<1x8x8xf32>
    %113 = vector.shape_cast %105 : vector<8x8xf32> to vector<1x8x8xf32>
    %114 = tpu.concatenate %106, %107, %108, %109, %110, %111, %112, %113 in 0 : vector<1x8x8xf32>, vector<1x8x8xf32>, vector<1x8x8xf32>, vector<1x8x8xf32>, vector<1x8x8xf32>, vector<1x8x8xf32>, vector<1x8x8xf32>, vector<1x8x8xf32> -> vector<8x8x8xf32>
    %115 = vector.extract_strided_slice %96 {offsets = [0, 0], sizes = [8, 8], strides = [1, 1]} : vector<16x32xf32> to vector<8x8xf32>
    %116 = vector.extract_strided_slice %96 {offsets = [8, 0], sizes = [8, 8], strides = [1, 1]} : vector<16x32xf32> to vector<8x8xf32>
    %117 = vector.extract_strided_slice %96 {offsets = [0, 8], sizes = [8, 8], strides = [1, 1]} : vector<16x32xf32> to vector<8x8xf32>
    %118 = vector.extract_strided_slice %96 {offsets = [8, 8], sizes = [8, 8], strides = [1, 1]} : vector<16x32xf32> to vector<8x8xf32>
    %119 = vector.extract_strided_slice %96 {offsets = [0, 16], sizes = [8, 8], strides = [1, 1]} : vector<16x32xf32> to vector<8x8xf32>
    %120 = vector.extract_strided_slice %96 {offsets = [8, 16], sizes = [8, 8], strides = [1, 1]} : vector<16x32xf32> to vector<8x8xf32>
    %121 = vector.extract_strided_slice %96 {offsets = [0, 24], sizes = [8, 8], strides = [1, 1]} : vector<16x32xf32> to vector<8x8xf32>
    %122 = vector.extract_strided_slice %96 {offsets = [8, 24], sizes = [8, 8], strides = [1, 1]} : vector<16x32xf32> to vector<8x8xf32>
    %123 = vector.shape_cast %115 : vector<8x8xf32> to vector<1x8x8xf32>
    %124 = vector.shape_cast %116 : vector<8x8xf32> to vector<1x8x8xf32>
    %125 = vector.shape_cast %117 : vector<8x8xf32> to vector<1x8x8xf32>
    %126 = vector.shape_cast %118 : vector<8x8xf32> to vector<1x8x8xf32>
    %127 = vector.shape_cast %119 : vector<8x8xf32> to vector<1x8x8xf32>
    %128 = vector.shape_cast %120 : vector<8x8xf32> to vector<1x8x8xf32>
    %129 = vector.shape_cast %121 : vector<8x8xf32> to vector<1x8x8xf32>
    %130 = vector.shape_cast %122 : vector<8x8xf32> to vector<1x8x8xf32>
    %131 = tpu.concatenate %123, %124, %125, %126, %127, %128, %129, %130 in 0 : vector<1x8x8xf32>, vector<1x8x8xf32>, vector<1x8x8xf32>, vector<1x8x8xf32>, vector<1x8x8xf32>, vector<1x8x8xf32>, vector<1x8x8xf32>, vector<1x8x8xf32> -> vector<8x8x8xf32>
    %132 = vector.extract_strided_slice %97 {offsets = [0, 0], sizes = [8, 8], strides = [1, 1]} : vector<16x32xf32> to vector<8x8xf32>
    %133 = vector.extract_strided_slice %97 {offsets = [8, 0], sizes = [8, 8], strides = [1, 1]} : vector<16x32xf32> to vector<8x8xf32>
    %134 = vector.extract_strided_slice %97 {offsets = [0, 8], sizes = [8, 8], strides = [1, 1]} : vector<16x32xf32> to vector<8x8xf32>
    %135 = vector.extract_strided_slice %97 {offsets = [8, 8], sizes = [8, 8], strides = [1, 1]} : vector<16x32xf32> to vector<8x8xf32>
    %136 = vector.extract_strided_slice %97 {offsets = [0, 16], sizes = [8, 8], strides = [1, 1]} : vector<16x32xf32> to vector<8x8xf32>
    %137 = vector.extract_strided_slice %97 {offsets = [8, 16], sizes = [8, 8], strides = [1, 1]} : vector<16x32xf32> to vector<8x8xf32>
    %138 = vector.extract_strided_slice %97 {offsets = [0, 24], sizes = [8, 8], strides = [1, 1]} : vector<16x32xf32> to vector<8x8xf32>
    %139 = vector.extract_strided_slice %97 {offsets = [8, 24], sizes = [8, 8], strides = [1, 1]} : vector<16x32xf32> to vector<8x8xf32>
    %140 = vector.shape_cast %132 : vector<8x8xf32> to vector<1x8x8xf32>
    %141 = vector.shape_cast %133 : vector<8x8xf32> to vector<1x8x8xf32>
    %142 = vector.shape_cast %134 : vector<8x8xf32> to vector<1x8x8xf32>
    %143 = vector.shape_cast %135 : vector<8x8xf32> to vector<1x8x8xf32>
    %144 = vector.shape_cast %136 : vector<8x8xf32> to vector<1x8x8xf32>
    %145 = vector.shape_cast %137 : vector<8x8xf32> to vector<1x8x8xf32>
    %146 = vector.shape_cast %138 : vector<8x8xf32> to vector<1x8x8xf32>
    %147 = vector.shape_cast %139 : vector<8x8xf32> to vector<1x8x8xf32>
    %148 = tpu.concatenate %140, %141, %142, %143, %144, %145, %146, %147 in 0 : vector<1x8x8xf32>, vector<1x8x8xf32>, vector<1x8x8xf32>, vector<1x8x8xf32>, vector<1x8x8xf32>, vector<1x8x8xf32>, vector<1x8x8xf32>, vector<1x8x8xf32> -> vector<8x8x8xf32>
    %cst_27 = arith.constant dense<0.000000e+00> : vector<8x8x8xf32>
    %149 = tpu.matmul %114, %131, %cst_27 {dimension_numbers = #tpu.dot_dimension_numbers<[2], [2], [1], [1], [0, 0, 0, 1, 1, 1], [0], [0]>} : vector<8x8x8xf32>, vector<8x8x8xf32>, vector<8x8x8xf32> -> vector<8x8x8xf32>
    %cst_28 = arith.constant 0.353553385 : f32
    %150 = vector.broadcast %cst_28 : f32 to vector<8x8x8xf32>
    %151 = arith.mulf %149, %150 : vector<8x8x8xf32>
    %cst_29 = arith.constant dense<0xFF800000> : vector<8x8xf32>
    %152 = vector.multi_reduction <maximumf>, %151, %cst_29 [2] : vector<8x8x8xf32> to vector<8x8xf32>
    %153 = vector.shape_cast %152 : vector<8x8xf32> to vector<8x8x1xf32>
    %154 = vector.broadcast %153 : vector<8x8x1xf32> to vector<8x8x8xf32>
    %155 = arith.subf %151, %154 : vector<8x8x8xf32>
    %156 = math.exp %155 : vector<8x8x8xf32>
    %cst_30 = arith.constant dense<0.000000e+00> : vector<8x8xf32>
    %157 = vector.multi_reduction <add>, %156, %cst_30 [2] : vector<8x8x8xf32> to vector<8x8xf32>
    %158 = vector.shape_cast %157 : vector<8x8xf32> to vector<8x8x1xf32>
    %cst_31 = arith.constant dense<0.000000e+00> : vector<8x8x8xf32>
    %159 = tpu.matmul %156, %148, %cst_31 {dimension_numbers = #tpu.dot_dimension_numbers<[2], [1], [1], [2], [0, 0, 0, 1, 1, 2], [0], [0]>} : vector<8x8x8xf32>, vector<8x8x8xf32>, vector<8x8x8xf32> -> vector<8x8x8xf32>
    %160 = tpu.reciprocal %158 {approx = true} : vector<8x8x1xf32> -> vector<8x8x1xf32>
    %161 = vector.broadcast %160 : vector<8x8x1xf32> to vector<8x8x8xf32>
    %162 = arith.mulf %159, %161 : vector<8x8x8xf32>
    %163 = vector.extract_strided_slice %162 {offsets = [0, 0, 0], sizes = [1, 8, 8], strides = [1, 1, 1]} : vector<8x8x8xf32> to vector<1x8x8xf32>
    %164 = vector.shape_cast %163 : vector<1x8x8xf32> to vector<8x8xf32>
    %165 = vector.extract_strided_slice %162 {offsets = [2, 0, 0], sizes = [1, 8, 8], strides = [1, 1, 1]} : vector<8x8x8xf32> to vector<1x8x8xf32>
    %166 = vector.shape_cast %165 : vector<1x8x8xf32> to vector<8x8xf32>
    %167 = vector.extract_strided_slice %162 {offsets = [4, 0, 0], sizes = [1, 8, 8], strides = [1, 1, 1]} : vector<8x8x8xf32> to vector<1x8x8xf32>
    %168 = vector.shape_cast %167 : vector<1x8x8xf32> to vector<8x8xf32>
    %169 = vector.extract_strided_slice %162 {offsets = [6, 0, 0], sizes = [1, 8, 8], strides = [1, 1, 1]} : vector<8x8x8xf32> to vector<1x8x8xf32>
    %170 = vector.shape_cast %169 : vector<1x8x8xf32> to vector<8x8xf32>
    %171 = tpu.concatenate %164, %166, %168, %170 in 1 : vector<8x8xf32>, vector<8x8xf32>, vector<8x8xf32>, vector<8x8xf32> -> vector<8x32xf32>
    %172 = vector.extract_strided_slice %162 {offsets = [1, 0, 0], sizes = [1, 8, 8], strides = [1, 1, 1]} : vector<8x8x8xf32> to vector<1x8x8xf32>
    %173 = vector.shape_cast %172 : vector<1x8x8xf32> to vector<8x8xf32>
    %174 = vector.extract_strided_slice %162 {offsets = [3, 0, 0], sizes = [1, 8, 8], strides = [1, 1, 1]} : vector<8x8x8xf32> to vector<1x8x8xf32>
    %175 = vector.shape_cast %174 : vector<1x8x8xf32> to vector<8x8xf32>
    %176 = vector.extract_strided_slice %162 {offsets = [5, 0, 0], sizes = [1, 8, 8], strides = [1, 1, 1]} : vector<8x8x8xf32> to vector<1x8x8xf32>
    %177 = vector.shape_cast %176 : vector<1x8x8xf32> to vector<8x8xf32>
    %178 = vector.extract_strided_slice %162 {offsets = [7, 0, 0], sizes = [1, 8, 8], strides = [1, 1, 1]} : vector<8x8x8xf32> to vector<1x8x8xf32>
    %179 = vector.shape_cast %178 : vector<1x8x8xf32> to vector<8x8xf32>
    %180 = tpu.concatenate %173, %175, %177, %179 in 1 : vector<8x8xf32>, vector<8x8xf32>, vector<8x8xf32>, vector<8x8xf32> -> vector<8x32xf32>
    %181 = tpu.concatenate %171, %180 in 0 : vector<8x32xf32>, vector<8x32xf32> -> vector<16x32xf32>
    %c160 = arith.constant 160 : index
    %c0_32 = arith.constant 0 : index
    %182 = vector.load %arg1[%c160, %c0_32] : memref<672x128xf32, #tpu.memory_space<vmem>>, vector<32x32xf32>
    %cst_33 = arith.constant dense<0.000000e+00> : vector<16x32xf32>
    %183 = tpu.matmul %181, %182, %cst_33 {dimension_numbers = #tpu.dot_dimension_numbers<[1], [0], [0], [1], [0, 0, 1, 1], [], []>} : vector<16x32xf32>, vector<32x32xf32>, vector<16x32xf32> -> vector<16x32xf32>
    %184 = vector.extract_strided_slice %0 {offsets = [10, 0], sizes = [1, 32], strides = [1, 1]} : vector<32x128xf32> to vector<1x32xf32>
    %185 = vector.broadcast %184 : vector<1x32xf32> to vector<16x32xf32>
    %186 = arith.addf %183, %185 : vector<16x32xf32>
    %187 = arith.addf %61, %186 : vector<16x32xf32>
    %188 = vector.extract_strided_slice %0 {offsets = [11, 0], sizes = [1, 32], strides = [1, 1]} : vector<32x128xf32> to vector<1x32xf32>
    %189 = vector.extract_strided_slice %0 {offsets = [12, 0], sizes = [1, 32], strides = [1, 1]} : vector<32x128xf32> to vector<1x32xf32>
    %cst_34 = arith.constant dense<0.000000e+00> : vector<16xf32>
    %190 = vector.multi_reduction <add>, %187, %cst_34 [1] : vector<16x32xf32> to vector<16xf32>
    %191 = vector.shape_cast %190 : vector<16xf32> to vector<16x1xf32>
    %cst_35 = arith.constant 3.200000e+01 : f32
    %192 = vector.broadcast %cst_35 : f32 to vector<16x1xf32>
    %193 = arith.divf %191, %192 : vector<16x1xf32>
    %194 = arith.mulf %187, %187 : vector<16x32xf32>
    %cst_36 = arith.constant dense<0.000000e+00> : vector<16xf32>
    %195 = vector.multi_reduction <add>, %194, %cst_36 [1] : vector<16x32xf32> to vector<16xf32>
    %196 = vector.shape_cast %195 : vector<16xf32> to vector<16x1xf32>
    %cst_37 = arith.constant 3.200000e+01 : f32
    %197 = vector.broadcast %cst_37 : f32 to vector<16x1xf32>
    %198 = arith.divf %196, %197 : vector<16x1xf32>
    %199 = arith.mulf %193, %193 : vector<16x1xf32>
    %200 = arith.subf %198, %199 : vector<16x1xf32>
    %201 = vector.broadcast %193 : vector<16x1xf32> to vector<16x32xf32>
    %202 = arith.subf %187, %201 : vector<16x32xf32>
    %cst_38 = arith.constant 9.99999974E-6 : f32
    %203 = vector.broadcast %cst_38 : f32 to vector<16x1xf32>
    %204 = arith.addf %200, %203 : vector<16x1xf32>
    %205 = math.rsqrt %204 : vector<16x1xf32>
    %206 = vector.broadcast %205 : vector<16x1xf32> to vector<16x32xf32>
    %207 = arith.mulf %202, %206 : vector<16x32xf32>
    %208 = vector.broadcast %188 : vector<1x32xf32> to vector<16x32xf32>
    %209 = arith.mulf %207, %208 : vector<16x32xf32>
    %210 = vector.broadcast %189 : vector<1x32xf32> to vector<16x32xf32>
    %211 = arith.addf %209, %210 : vector<16x32xf32>
    %c192 = arith.constant 192 : index
    %c0_39 = arith.constant 0 : index
    %212 = vector.load %arg1[%c192, %c0_39] : memref<672x128xf32, #tpu.memory_space<vmem>>, vector<32x128xf32>
    %cst_40 = arith.constant dense<0.000000e+00> : vector<16x128xf32>
    %213 = tpu.matmul %211, %212, %cst_40 {dimension_numbers = #tpu.dot_dimension_numbers<[1], [0], [0], [1], [0, 0, 1, 1], [], []>} : vector<16x32xf32>, vector<32x128xf32>, vector<16x128xf32> -> vector<16x128xf32>
    %214 = vector.extract_strided_slice %0 {offsets = [13, 0], sizes = [1, 128], strides = [1, 1]} : vector<32x128xf32> to vector<1x128xf32>
    %215 = vector.broadcast %214 : vector<1x128xf32> to vector<16x128xf32>
    %216 = arith.addf %213, %215 : vector<16x128xf32>
    %cst_41 = arith.constant 5.000000e-01 : f32
    %217 = vector.broadcast %cst_41 : f32 to vector<16x128xf32>
    %218 = arith.mulf %217, %216 : vector<16x128xf32>
    %219 = arith.mulf %216, %216 : vector<16x128xf32>
    %220 = arith.mulf %219, %216 : vector<16x128xf32>
    %cst_42 = arith.constant 4.471500e-02 : f32
    %221 = vector.broadcast %cst_42 : f32 to vector<16x128xf32>
    %222 = arith.mulf %221, %220 : vector<16x128xf32>
    %223 = arith.addf %216, %222 : vector<16x128xf32>
    %cst_43 = arith.constant 0.797884583 : f32
    %224 = vector.broadcast %cst_43 : f32 to vector<16x128xf32>
    %225 = arith.mulf %224, %223 : vector<16x128xf32>
    %226 = math.tanh %225 : vector<16x128xf32>
    %cst_44 = arith.constant 1.000000e+00 : f32
    %227 = vector.broadcast %cst_44 : f32 to vector<16x128xf32>
    %228 = arith.addf %227, %226 : vector<16x128xf32>
    %229 = arith.mulf %218, %228 : vector<16x128xf32>
    %c224 = arith.constant 224 : index
    %c0_45 = arith.constant 0 : index
    %230 = vector.load %arg1[%c224, %c0_45] : memref<672x128xf32, #tpu.memory_space<vmem>>, vector<128x32xf32>
    %cst_46 = arith.constant dense<0.000000e+00> : vector<16x32xf32>
    %231 = tpu.matmul %229, %230, %cst_46 {dimension_numbers = #tpu.dot_dimension_numbers<[1], [0], [0], [1], [0, 0, 1, 1], [], []>} : vector<16x128xf32>, vector<128x32xf32>, vector<16x32xf32> -> vector<16x32xf32>
    %232 = vector.extract_strided_slice %0 {offsets = [14, 0], sizes = [1, 32], strides = [1, 1]} : vector<32x128xf32> to vector<1x32xf32>
    %233 = vector.broadcast %232 : vector<1x32xf32> to vector<16x32xf32>
    %234 = arith.addf %231, %233 : vector<16x32xf32>
    %235 = arith.addf %187, %234 : vector<16x32xf32>
    %236 = vector.extract_strided_slice %0 {offsets = [15, 0], sizes = [1, 32], strides = [1, 1]} : vector<32x128xf32> to vector<1x32xf32>
    %237 = vector.extract_strided_slice %0 {offsets = [16, 0], sizes = [1, 32], strides = [1, 1]} : vector<32x128xf32> to vector<1x32xf32>
    %cst_47 = arith.constant dense<0.000000e+00> : vector<16xf32>
    %238 = vector.multi_reduction <add>, %235, %cst_47 [1] : vector<16x32xf32> to vector<16xf32>
    %239 = vector.shape_cast %238 : vector<16xf32> to vector<16x1xf32>
    %cst_48 = arith.constant 3.200000e+01 : f32
    %240 = vector.broadcast %cst_48 : f32 to vector<16x1xf32>
    %241 = arith.divf %239, %240 : vector<16x1xf32>
    %242 = arith.mulf %235, %235 : vector<16x32xf32>
    %cst_49 = arith.constant dense<0.000000e+00> : vector<16xf32>
    %243 = vector.multi_reduction <add>, %242, %cst_49 [1] : vector<16x32xf32> to vector<16xf32>
    %244 = vector.shape_cast %243 : vector<16xf32> to vector<16x1xf32>
    %cst_50 = arith.constant 3.200000e+01 : f32
    %245 = vector.broadcast %cst_50 : f32 to vector<16x1xf32>
    %246 = arith.divf %244, %245 : vector<16x1xf32>
    %247 = arith.mulf %241, %241 : vector<16x1xf32>
    %248 = arith.subf %246, %247 : vector<16x1xf32>
    %249 = vector.broadcast %241 : vector<16x1xf32> to vector<16x32xf32>
    %250 = arith.subf %235, %249 : vector<16x32xf32>
    %cst_51 = arith.constant 9.99999974E-6 : f32
    %251 = vector.broadcast %cst_51 : f32 to vector<16x1xf32>
    %252 = arith.addf %248, %251 : vector<16x1xf32>
    %253 = math.rsqrt %252 : vector<16x1xf32>
    %254 = vector.broadcast %253 : vector<16x1xf32> to vector<16x32xf32>
    %255 = arith.mulf %250, %254 : vector<16x32xf32>
    %256 = vector.broadcast %236 : vector<1x32xf32> to vector<16x32xf32>
    %257 = arith.mulf %255, %256 : vector<16x32xf32>
    %258 = vector.broadcast %237 : vector<1x32xf32> to vector<16x32xf32>
    %259 = arith.addf %257, %258 : vector<16x32xf32>
    %c352 = arith.constant 352 : index
    %c0_52 = arith.constant 0 : index
    %260 = vector.load %arg1[%c352, %c0_52] : memref<672x128xf32, #tpu.memory_space<vmem>>, vector<32x32xf32>
    %cst_53 = arith.constant dense<0.000000e+00> : vector<16x32xf32>
    %261 = tpu.matmul %259, %260, %cst_53 {dimension_numbers = #tpu.dot_dimension_numbers<[1], [0], [0], [1], [0, 0, 1, 1], [], []>} : vector<16x32xf32>, vector<32x32xf32>, vector<16x32xf32> -> vector<16x32xf32>
    %262 = vector.extract_strided_slice %0 {offsets = [17, 0], sizes = [1, 32], strides = [1, 1]} : vector<32x128xf32> to vector<1x32xf32>
    %263 = vector.broadcast %262 : vector<1x32xf32> to vector<16x32xf32>
    %264 = arith.addf %261, %263 : vector<16x32xf32>
    %265 = vector.extract_strided_slice %66 {offsets = [0, 64], sizes = [16, 32], strides = [1, 1]} : vector<16x128xf32> to vector<16x32xf32>
    %266 = vector.extract_strided_slice %66 {offsets = [0, 96], sizes = [16, 32], strides = [1, 1]} : vector<16x128xf32> to vector<16x32xf32>
    %267 = vector.extract_strided_slice %264 {offsets = [0, 0], sizes = [8, 8], strides = [1, 1]} : vector<16x32xf32> to vector<8x8xf32>
    %268 = vector.extract_strided_slice %264 {offsets = [8, 0], sizes = [8, 8], strides = [1, 1]} : vector<16x32xf32> to vector<8x8xf32>
    %269 = vector.extract_strided_slice %264 {offsets = [0, 8], sizes = [8, 8], strides = [1, 1]} : vector<16x32xf32> to vector<8x8xf32>
    %270 = vector.extract_strided_slice %264 {offsets = [8, 8], sizes = [8, 8], strides = [1, 1]} : vector<16x32xf32> to vector<8x8xf32>
    %271 = vector.extract_strided_slice %264 {offsets = [0, 16], sizes = [8, 8], strides = [1, 1]} : vector<16x32xf32> to vector<8x8xf32>
    %272 = vector.extract_strided_slice %264 {offsets = [8, 16], sizes = [8, 8], strides = [1, 1]} : vector<16x32xf32> to vector<8x8xf32>
    %273 = vector.extract_strided_slice %264 {offsets = [0, 24], sizes = [8, 8], strides = [1, 1]} : vector<16x32xf32> to vector<8x8xf32>
    %274 = vector.extract_strided_slice %264 {offsets = [8, 24], sizes = [8, 8], strides = [1, 1]} : vector<16x32xf32> to vector<8x8xf32>
    %275 = vector.shape_cast %267 : vector<8x8xf32> to vector<1x8x8xf32>
    %276 = vector.shape_cast %268 : vector<8x8xf32> to vector<1x8x8xf32>
    %277 = vector.shape_cast %269 : vector<8x8xf32> to vector<1x8x8xf32>
    %278 = vector.shape_cast %270 : vector<8x8xf32> to vector<1x8x8xf32>
    %279 = vector.shape_cast %271 : vector<8x8xf32> to vector<1x8x8xf32>
    %280 = vector.shape_cast %272 : vector<8x8xf32> to vector<1x8x8xf32>
    %281 = vector.shape_cast %273 : vector<8x8xf32> to vector<1x8x8xf32>
    %282 = vector.shape_cast %274 : vector<8x8xf32> to vector<1x8x8xf32>
    %283 = tpu.concatenate %275, %276, %277, %278, %279, %280, %281, %282 in 0 : vector<1x8x8xf32>, vector<1x8x8xf32>, vector<1x8x8xf32>, vector<1x8x8xf32>, vector<1x8x8xf32>, vector<1x8x8xf32>, vector<1x8x8xf32>, vector<1x8x8xf32> -> vector<8x8x8xf32>
    %284 = vector.extract_strided_slice %265 {offsets = [0, 0], sizes = [8, 8], strides = [1, 1]} : vector<16x32xf32> to vector<8x8xf32>
    %285 = vector.extract_strided_slice %265 {offsets = [8, 0], sizes = [8, 8], strides = [1, 1]} : vector<16x32xf32> to vector<8x8xf32>
    %286 = vector.extract_strided_slice %265 {offsets = [0, 8], sizes = [8, 8], strides = [1, 1]} : vector<16x32xf32> to vector<8x8xf32>
    %287 = vector.extract_strided_slice %265 {offsets = [8, 8], sizes = [8, 8], strides = [1, 1]} : vector<16x32xf32> to vector<8x8xf32>
    %288 = vector.extract_strided_slice %265 {offsets = [0, 16], sizes = [8, 8], strides = [1, 1]} : vector<16x32xf32> to vector<8x8xf32>
    %289 = vector.extract_strided_slice %265 {offsets = [8, 16], sizes = [8, 8], strides = [1, 1]} : vector<16x32xf32> to vector<8x8xf32>
    %290 = vector.extract_strided_slice %265 {offsets = [0, 24], sizes = [8, 8], strides = [1, 1]} : vector<16x32xf32> to vector<8x8xf32>
    %291 = vector.extract_strided_slice %265 {offsets = [8, 24], sizes = [8, 8], strides = [1, 1]} : vector<16x32xf32> to vector<8x8xf32>
    %292 = vector.shape_cast %284 : vector<8x8xf32> to vector<1x8x8xf32>
    %293 = vector.shape_cast %285 : vector<8x8xf32> to vector<1x8x8xf32>
    %294 = vector.shape_cast %286 : vector<8x8xf32> to vector<1x8x8xf32>
    %295 = vector.shape_cast %287 : vector<8x8xf32> to vector<1x8x8xf32>
    %296 = vector.shape_cast %288 : vector<8x8xf32> to vector<1x8x8xf32>
    %297 = vector.shape_cast %289 : vector<8x8xf32> to vector<1x8x8xf32>
    %298 = vector.shape_cast %290 : vector<8x8xf32> to vector<1x8x8xf32>
    %299 = vector.shape_cast %291 : vector<8x8xf32> to vector<1x8x8xf32>
    %300 = tpu.concatenate %292, %293, %294, %295, %296, %297, %298, %299 in 0 : vector<1x8x8xf32>, vector<1x8x8xf32>, vector<1x8x8xf32>, vector<1x8x8xf32>, vector<1x8x8xf32>, vector<1x8x8xf32>, vector<1x8x8xf32>, vector<1x8x8xf32> -> vector<8x8x8xf32>
    %301 = vector.extract_strided_slice %266 {offsets = [0, 0], sizes = [8, 8], strides = [1, 1]} : vector<16x32xf32> to vector<8x8xf32>
    %302 = vector.extract_strided_slice %266 {offsets = [8, 0], sizes = [8, 8], strides = [1, 1]} : vector<16x32xf32> to vector<8x8xf32>
    %303 = vector.extract_strided_slice %266 {offsets = [0, 8], sizes = [8, 8], strides = [1, 1]} : vector<16x32xf32> to vector<8x8xf32>
    %304 = vector.extract_strided_slice %266 {offsets = [8, 8], sizes = [8, 8], strides = [1, 1]} : vector<16x32xf32> to vector<8x8xf32>
    %305 = vector.extract_strided_slice %266 {offsets = [0, 16], sizes = [8, 8], strides = [1, 1]} : vector<16x32xf32> to vector<8x8xf32>
    %306 = vector.extract_strided_slice %266 {offsets = [8, 16], sizes = [8, 8], strides = [1, 1]} : vector<16x32xf32> to vector<8x8xf32>
    %307 = vector.extract_strided_slice %266 {offsets = [0, 24], sizes = [8, 8], strides = [1, 1]} : vector<16x32xf32> to vector<8x8xf32>
    %308 = vector.extract_strided_slice %266 {offsets = [8, 24], sizes = [8, 8], strides = [1, 1]} : vector<16x32xf32> to vector<8x8xf32>
    %309 = vector.shape_cast %301 : vector<8x8xf32> to vector<1x8x8xf32>
    %310 = vector.shape_cast %302 : vector<8x8xf32> to vector<1x8x8xf32>
    %311 = vector.shape_cast %303 : vector<8x8xf32> to vector<1x8x8xf32>
    %312 = vector.shape_cast %304 : vector<8x8xf32> to vector<1x8x8xf32>
    %313 = vector.shape_cast %305 : vector<8x8xf32> to vector<1x8x8xf32>
    %314 = vector.shape_cast %306 : vector<8x8xf32> to vector<1x8x8xf32>
    %315 = vector.shape_cast %307 : vector<8x8xf32> to vector<1x8x8xf32>
    %316 = vector.shape_cast %308 : vector<8x8xf32> to vector<1x8x8xf32>
    %317 = tpu.concatenate %309, %310, %311, %312, %313, %314, %315, %316 in 0 : vector<1x8x8xf32>, vector<1x8x8xf32>, vector<1x8x8xf32>, vector<1x8x8xf32>, vector<1x8x8xf32>, vector<1x8x8xf32>, vector<1x8x8xf32>, vector<1x8x8xf32> -> vector<8x8x8xf32>
    %cst_54 = arith.constant dense<0.000000e+00> : vector<8x8x8xf32>
    %318 = tpu.matmul %283, %300, %cst_54 {dimension_numbers = #tpu.dot_dimension_numbers<[2], [2], [1], [1], [0, 0, 0, 1, 1, 1], [0], [0]>} : vector<8x8x8xf32>, vector<8x8x8xf32>, vector<8x8x8xf32> -> vector<8x8x8xf32>
    %cst_55 = arith.constant 0.353553385 : f32
    %319 = vector.broadcast %cst_55 : f32 to vector<8x8x8xf32>
    %320 = arith.mulf %318, %319 : vector<8x8x8xf32>
    %cst_56 = arith.constant dense<0xFF800000> : vector<8x8xf32>
    %321 = vector.multi_reduction <maximumf>, %320, %cst_56 [2] : vector<8x8x8xf32> to vector<8x8xf32>
    %322 = vector.shape_cast %321 : vector<8x8xf32> to vector<8x8x1xf32>
    %323 = vector.broadcast %322 : vector<8x8x1xf32> to vector<8x8x8xf32>
    %324 = arith.subf %320, %323 : vector<8x8x8xf32>
    %325 = math.exp %324 : vector<8x8x8xf32>
    %cst_57 = arith.constant dense<0.000000e+00> : vector<8x8xf32>
    %326 = vector.multi_reduction <add>, %325, %cst_57 [2] : vector<8x8x8xf32> to vector<8x8xf32>
    %327 = vector.shape_cast %326 : vector<8x8xf32> to vector<8x8x1xf32>
    %cst_58 = arith.constant dense<0.000000e+00> : vector<8x8x8xf32>
    %328 = tpu.matmul %325, %317, %cst_58 {dimension_numbers = #tpu.dot_dimension_numbers<[2], [1], [1], [2], [0, 0, 0, 1, 1, 2], [0], [0]>} : vector<8x8x8xf32>, vector<8x8x8xf32>, vector<8x8x8xf32> -> vector<8x8x8xf32>
    %329 = tpu.reciprocal %327 {approx = true} : vector<8x8x1xf32> -> vector<8x8x1xf32>
    %330 = vector.broadcast %329 : vector<8x8x1xf32> to vector<8x8x8xf32>
    %331 = arith.mulf %328, %330 : vector<8x8x8xf32>
    %332 = vector.extract_strided_slice %331 {offsets = [0, 0, 0], sizes = [1, 8, 8], strides = [1, 1, 1]} : vector<8x8x8xf32> to vector<1x8x8xf32>
    %333 = vector.shape_cast %332 : vector<1x8x8xf32> to vector<8x8xf32>
    %334 = vector.extract_strided_slice %331 {offsets = [2, 0, 0], sizes = [1, 8, 8], strides = [1, 1, 1]} : vector<8x8x8xf32> to vector<1x8x8xf32>
    %335 = vector.shape_cast %334 : vector<1x8x8xf32> to vector<8x8xf32>
    %336 = vector.extract_strided_slice %331 {offsets = [4, 0, 0], sizes = [1, 8, 8], strides = [1, 1, 1]} : vector<8x8x8xf32> to vector<1x8x8xf32>
    %337 = vector.shape_cast %336 : vector<1x8x8xf32> to vector<8x8xf32>
    %338 = vector.extract_strided_slice %331 {offsets = [6, 0, 0], sizes = [1, 8, 8], strides = [1, 1, 1]} : vector<8x8x8xf32> to vector<1x8x8xf32>
    %339 = vector.shape_cast %338 : vector<1x8x8xf32> to vector<8x8xf32>
    %340 = tpu.concatenate %333, %335, %337, %339 in 1 : vector<8x8xf32>, vector<8x8xf32>, vector<8x8xf32>, vector<8x8xf32> -> vector<8x32xf32>
    %341 = vector.extract_strided_slice %331 {offsets = [1, 0, 0], sizes = [1, 8, 8], strides = [1, 1, 1]} : vector<8x8x8xf32> to vector<1x8x8xf32>
    %342 = vector.shape_cast %341 : vector<1x8x8xf32> to vector<8x8xf32>
    %343 = vector.extract_strided_slice %331 {offsets = [3, 0, 0], sizes = [1, 8, 8], strides = [1, 1, 1]} : vector<8x8x8xf32> to vector<1x8x8xf32>
    %344 = vector.shape_cast %343 : vector<1x8x8xf32> to vector<8x8xf32>
    %345 = vector.extract_strided_slice %331 {offsets = [5, 0, 0], sizes = [1, 8, 8], strides = [1, 1, 1]} : vector<8x8x8xf32> to vector<1x8x8xf32>
    %346 = vector.shape_cast %345 : vector<1x8x8xf32> to vector<8x8xf32>
    %347 = vector.extract_strided_slice %331 {offsets = [7, 0, 0], sizes = [1, 8, 8], strides = [1, 1, 1]} : vector<8x8x8xf32> to vector<1x8x8xf32>
    %348 = vector.shape_cast %347 : vector<1x8x8xf32> to vector<8x8xf32>
    %349 = tpu.concatenate %342, %344, %346, %348 in 1 : vector<8x8xf32>, vector<8x8xf32>, vector<8x8xf32>, vector<8x8xf32> -> vector<8x32xf32>
    %350 = tpu.concatenate %340, %349 in 0 : vector<8x32xf32>, vector<8x32xf32> -> vector<16x32xf32>
    %c384 = arith.constant 384 : index
    %c0_59 = arith.constant 0 : index
    %351 = vector.load %arg1[%c384, %c0_59] : memref<672x128xf32, #tpu.memory_space<vmem>>, vector<32x32xf32>
    %cst_60 = arith.constant dense<0.000000e+00> : vector<16x32xf32>
    %352 = tpu.matmul %350, %351, %cst_60 {dimension_numbers = #tpu.dot_dimension_numbers<[1], [0], [0], [1], [0, 0, 1, 1], [], []>} : vector<16x32xf32>, vector<32x32xf32>, vector<16x32xf32> -> vector<16x32xf32>
    %353 = vector.extract_strided_slice %0 {offsets = [18, 0], sizes = [1, 32], strides = [1, 1]} : vector<32x128xf32> to vector<1x32xf32>
    %354 = vector.broadcast %353 : vector<1x32xf32> to vector<16x32xf32>
    %355 = arith.addf %352, %354 : vector<16x32xf32>
    %356 = arith.addf %235, %355 : vector<16x32xf32>
    %357 = vector.extract_strided_slice %0 {offsets = [19, 0], sizes = [1, 32], strides = [1, 1]} : vector<32x128xf32> to vector<1x32xf32>
    %358 = vector.extract_strided_slice %0 {offsets = [20, 0], sizes = [1, 32], strides = [1, 1]} : vector<32x128xf32> to vector<1x32xf32>
    %cst_61 = arith.constant dense<0.000000e+00> : vector<16xf32>
    %359 = vector.multi_reduction <add>, %356, %cst_61 [1] : vector<16x32xf32> to vector<16xf32>
    %360 = vector.shape_cast %359 : vector<16xf32> to vector<16x1xf32>
    %cst_62 = arith.constant 3.200000e+01 : f32
    %361 = vector.broadcast %cst_62 : f32 to vector<16x1xf32>
    %362 = arith.divf %360, %361 : vector<16x1xf32>
    %363 = arith.mulf %356, %356 : vector<16x32xf32>
    %cst_63 = arith.constant dense<0.000000e+00> : vector<16xf32>
    %364 = vector.multi_reduction <add>, %363, %cst_63 [1] : vector<16x32xf32> to vector<16xf32>
    %365 = vector.shape_cast %364 : vector<16xf32> to vector<16x1xf32>
    %cst_64 = arith.constant 3.200000e+01 : f32
    %366 = vector.broadcast %cst_64 : f32 to vector<16x1xf32>
    %367 = arith.divf %365, %366 : vector<16x1xf32>
    %368 = arith.mulf %362, %362 : vector<16x1xf32>
    %369 = arith.subf %367, %368 : vector<16x1xf32>
    %370 = vector.broadcast %362 : vector<16x1xf32> to vector<16x32xf32>
    %371 = arith.subf %356, %370 : vector<16x32xf32>
    %cst_65 = arith.constant 9.99999974E-6 : f32
    %372 = vector.broadcast %cst_65 : f32 to vector<16x1xf32>
    %373 = arith.addf %369, %372 : vector<16x1xf32>
    %374 = math.rsqrt %373 : vector<16x1xf32>
    %375 = vector.broadcast %374 : vector<16x1xf32> to vector<16x32xf32>
    %376 = arith.mulf %371, %375 : vector<16x32xf32>
    %377 = vector.broadcast %357 : vector<1x32xf32> to vector<16x32xf32>
    %378 = arith.mulf %376, %377 : vector<16x32xf32>
    %379 = vector.broadcast %358 : vector<1x32xf32> to vector<16x32xf32>
    %380 = arith.addf %378, %379 : vector<16x32xf32>
    %c416 = arith.constant 416 : index
    %c0_66 = arith.constant 0 : index
    %381 = vector.load %arg1[%c416, %c0_66] : memref<672x128xf32, #tpu.memory_space<vmem>>, vector<32x128xf32>
    %cst_67 = arith.constant dense<0.000000e+00> : vector<16x128xf32>
    %382 = tpu.matmul %380, %381, %cst_67 {dimension_numbers = #tpu.dot_dimension_numbers<[1], [0], [0], [1], [0, 0, 1, 1], [], []>} : vector<16x32xf32>, vector<32x128xf32>, vector<16x128xf32> -> vector<16x128xf32>
    %383 = vector.extract_strided_slice %0 {offsets = [21, 0], sizes = [1, 128], strides = [1, 1]} : vector<32x128xf32> to vector<1x128xf32>
    %384 = vector.broadcast %383 : vector<1x128xf32> to vector<16x128xf32>
    %385 = arith.addf %382, %384 : vector<16x128xf32>
    %cst_68 = arith.constant 5.000000e-01 : f32
    %386 = vector.broadcast %cst_68 : f32 to vector<16x128xf32>
    %387 = arith.mulf %386, %385 : vector<16x128xf32>
    %388 = arith.mulf %385, %385 : vector<16x128xf32>
    %389 = arith.mulf %388, %385 : vector<16x128xf32>
    %cst_69 = arith.constant 4.471500e-02 : f32
    %390 = vector.broadcast %cst_69 : f32 to vector<16x128xf32>
    %391 = arith.mulf %390, %389 : vector<16x128xf32>
    %392 = arith.addf %385, %391 : vector<16x128xf32>
    %cst_70 = arith.constant 0.797884583 : f32
    %393 = vector.broadcast %cst_70 : f32 to vector<16x128xf32>
    %394 = arith.mulf %393, %392 : vector<16x128xf32>
    %395 = math.tanh %394 : vector<16x128xf32>
    %cst_71 = arith.constant 1.000000e+00 : f32
    %396 = vector.broadcast %cst_71 : f32 to vector<16x128xf32>
    %397 = arith.addf %396, %395 : vector<16x128xf32>
    %398 = arith.mulf %387, %397 : vector<16x128xf32>
    %c448 = arith.constant 448 : index
    %c0_72 = arith.constant 0 : index
    %399 = vector.load %arg1[%c448, %c0_72] : memref<672x128xf32, #tpu.memory_space<vmem>>, vector<128x32xf32>
    %cst_73 = arith.constant dense<0.000000e+00> : vector<16x32xf32>
    %400 = tpu.matmul %398, %399, %cst_73 {dimension_numbers = #tpu.dot_dimension_numbers<[1], [0], [0], [1], [0, 0, 1, 1], [], []>} : vector<16x128xf32>, vector<128x32xf32>, vector<16x32xf32> -> vector<16x32xf32>
    %401 = vector.extract_strided_slice %0 {offsets = [22, 0], sizes = [1, 32], strides = [1, 1]} : vector<32x128xf32> to vector<1x32xf32>
    %402 = vector.broadcast %401 : vector<1x32xf32> to vector<16x32xf32>
    %403 = arith.addf %400, %402 : vector<16x32xf32>
    %404 = arith.addf %356, %403 : vector<16x32xf32>
    %c576 = arith.constant 576 : index
    %c0_74 = arith.constant 0 : index
    %405 = vector.load %arg1[%c576, %c0_74] : memref<672x128xf32, #tpu.memory_space<vmem>>, vector<32x64xf32>
    %cst_75 = arith.constant dense<0.000000e+00> : vector<16x64xf32>
    %406 = tpu.matmul %404, %405, %cst_75 {dimension_numbers = #tpu.dot_dimension_numbers<[1], [0], [0], [1], [0, 0, 1, 1], [], []>} : vector<16x32xf32>, vector<32x64xf32>, vector<16x64xf32> -> vector<16x64xf32>
    %407 = vector.extract_strided_slice %0 {offsets = [23, 0], sizes = [1, 64], strides = [1, 1]} : vector<32x128xf32> to vector<1x64xf32>
    %408 = vector.broadcast %407 : vector<1x64xf32> to vector<16x64xf32>
    %409 = arith.addf %406, %408 : vector<16x64xf32>
    %cst_76 = arith.constant 0.000000e+00 : f32
    %410 = vector.broadcast %cst_76 : f32 to vector<16x64xf32>
    %411 = arith.maximumf %409, %410 : vector<16x64xf32>
    %c608 = arith.constant 608 : index
    %c0_77 = arith.constant 0 : index
    %412 = vector.load %arg1[%c608, %c0_77] : memref<672x128xf32, #tpu.memory_space<vmem>>, vector<64x128xf32>
    %cst_78 = arith.constant dense<0.000000e+00> : vector<16x128xf32>
    %413 = tpu.matmul %411, %412, %cst_78 {dimension_numbers = #tpu.dot_dimension_numbers<[1], [0], [0], [1], [0, 0, 1, 1], [], []>} : vector<16x64xf32>, vector<64x128xf32>, vector<16x128xf32> -> vector<16x128xf32>
    %414 = vector.extract_strided_slice %0 {offsets = [24, 0], sizes = [1, 128], strides = [1, 1]} : vector<32x128xf32> to vector<1x128xf32>
    %415 = vector.broadcast %414 : vector<1x128xf32> to vector<16x128xf32>
    %416 = arith.addf %413, %415 : vector<16x128xf32>
    %417 = vector.extract_strided_slice %0 {offsets = [25, 0], sizes = [1, 128], strides = [1, 1]} : vector<32x128xf32> to vector<1x128xf32>
    %418 = vector.extract_strided_slice %0 {offsets = [26, 0], sizes = [1, 128], strides = [1, 1]} : vector<32x128xf32> to vector<1x128xf32>
    %cst_79 = arith.constant dense<0.000000e+00> : vector<16xf32>
    %419 = vector.multi_reduction <add>, %416, %cst_79 [1] : vector<16x128xf32> to vector<16xf32>
    %420 = vector.shape_cast %419 : vector<16xf32> to vector<16x1xf32>
    %cst_80 = arith.constant 1.280000e+02 : f32
    %421 = vector.broadcast %cst_80 : f32 to vector<16x1xf32>
    %422 = arith.divf %420, %421 : vector<16x1xf32>
    %423 = arith.mulf %416, %416 : vector<16x128xf32>
    %cst_81 = arith.constant dense<0.000000e+00> : vector<16xf32>
    %424 = vector.multi_reduction <add>, %423, %cst_81 [1] : vector<16x128xf32> to vector<16xf32>
    %425 = vector.shape_cast %424 : vector<16xf32> to vector<16x1xf32>
    %cst_82 = arith.constant 1.280000e+02 : f32
    %426 = vector.broadcast %cst_82 : f32 to vector<16x1xf32>
    %427 = arith.divf %425, %426 : vector<16x1xf32>
    %428 = arith.mulf %422, %422 : vector<16x1xf32>
    %429 = arith.subf %427, %428 : vector<16x1xf32>
    %430 = vector.broadcast %422 : vector<16x1xf32> to vector<16x128xf32>
    %431 = arith.subf %416, %430 : vector<16x128xf32>
    %cst_83 = arith.constant 9.99999974E-6 : f32
    %432 = vector.broadcast %cst_83 : f32 to vector<16x1xf32>
    %433 = arith.addf %429, %432 : vector<16x1xf32>
    %434 = math.rsqrt %433 : vector<16x1xf32>
    %435 = vector.broadcast %434 : vector<16x1xf32> to vector<16x128xf32>
    %436 = arith.mulf %431, %435 : vector<16x128xf32>
    %437 = vector.broadcast %417 : vector<1x128xf32> to vector<16x128xf32>
    %438 = arith.mulf %436, %437 : vector<16x128xf32>
    %439 = vector.broadcast %418 : vector<1x128xf32> to vector<16x128xf32>
    %440 = arith.addf %438, %439 : vector<16x128xf32>
    %c0_84 = arith.constant 0 : index
    %c0_85 = arith.constant 0 : index
    %441 = vector.load %arg3[%c0_84, %c0_85] : memref<16x128xf32, #tpu.memory_space<vmem>>, vector<16x128xf32>
    tpu.vector_store %arg3[%c0_84, %c0_85], %440 {strides = array<i32>} : memref<16x128xf32, #tpu.memory_space<vmem>>, vector<16x128xf32>,
    return
  }
}

</mosaic_0001>

<llo_original>
// kernel: tpu_custom_call.1
$region0: #{tpu_custom_call.1}
  #allocation0 [shape = 'u32[]', space=smem, size = 0x4, offset = 0x4, fixed_abs, tag = 'smem constant byte address 0x4 - core index']
  #allocation1 [shape = 'u32[144,128]{1,0:T(1,128)}', space=vmem, size = 0x12000, scoped, tag = 'internal scratch']
  %s0 = inlined_call_operand.hbm [shape: f32[16,64], index: 0, kind: input, shape index: {}]
  %s1 = inlined_call_operand.hbm [shape: f32[672,128], index: 1, kind: input, shape index: {}]
  %s2 = inlined_call_operand.hbm [shape: f32[32,128], index: 2, kind: input, shape index: {}]
  %s3 = inlined_call_operand.hbm [shape: f32[16,128], index: 3, kind: output, shape index: {}]
  %s4 = sld [smem:[#allocation0]]
  $region34: #{tpu_custom_call.1} parent=0
    _
  %s6 = ssub.s32 1, %s4
  %s7 = scalar_select 0, %s6, %s4
  $region1: #{tpu_custom_call.1} parent=0
    #allocation2 [shape = 'u8[8192]{0}', space=vmem, size = 0x2000, scoped, tag = 'input window, operand 0, single buffered']
    #allocation3 [shape = 's32[1]{0}', space=sflag, size = 0x4, scoped, tag = 'scoped memory for tpu_custom_call.1']
    #allocation4 [shape = 's32[1]{0}', space=sflag, size = 0x4, scoped, tag = 'scoped memory for tpu_custom_call.1']
    #allocation5 [shape = 'u8[344064]{0}', space=vmem, size = 0x54000, scoped, tag = 'input window, operand 1, single buffered']
    #allocation6 [shape = 's32[1]{0}', space=sflag, size = 0x4, scoped, tag = 'scoped memory for tpu_custom_call.1']
    #allocation7 [shape = 'u8[16384]{0}', space=vmem, size = 0x4000, scoped, tag = 'input window, operand 2, single buffered']
    #allocation8 [shape = 'u8[8192]{0}', space=vmem, size = 0x2000, scoped, tag = 'output window, operand 0, single buffered']
    %8 = vsyncpa [#allocation3], 0
    %9 = vsyncpa [#allocation6], 0
    %10 = vsyncpa [#allocation4], 0
    // Predicated region
    $region2: #{tpu_custom_call.1} parent=1 // pred_check
      _
    $region3: #{tpu_custom_call.1} parent=1 // pred_check_branch
      %12 = sbr.rel (0) target = $region5
    $region4: #{tpu_custom_call.1} parent=1 // pred_region
      %s14 = ssub.s32 256, 256
      %15 = vsyncadd [#allocation3], %s14
      %s16 = sshll.u32 [#allocation2], 4
      %s17 = int_to_ptr.vmem [resolvable:$true] %s16
      %22 = dma.hbm_to_vmem [thread:$0]  %s0, 256, %s17, [#allocation3], 128, 128, 8
    $region5: #{tpu_custom_call.1} parent=1 // pred_fallthru
      _
    // Predicated region
    $region6: #{tpu_custom_call.1} parent=1 // pred_check
      _
    $region7: #{tpu_custom_call.1} parent=1 // pred_check_branch
      %24 = sbr.rel (0) target = $region9
    $region8: #{tpu_custom_call.1} parent=1 // pred_region
      %s26 = ssub.s32 10752, 10752
      %27 = vsyncadd [#allocation6], %s26
      %s28 = sshll.u32 [#allocation5], 4
      %s29 = int_to_ptr.vmem [resolvable:$true] %s28
      %34 = dma.hbm_to_vmem [thread:$0]  %s1, 10752, %s29, [#allocation6], 128, 128, 8
    $region9: #{tpu_custom_call.1} parent=1 // pred_fallthru
      _
    // Predicated region
    $region10: #{tpu_custom_call.1} parent=1 // pred_check
      _
    $region11: #{tpu_custom_call.1} parent=1 // pred_check_branch
      %36 = sbr.rel (0) target = $region13
    $region12: #{tpu_custom_call.1} parent=1 // pred_region
      %s38 = ssub.s32 512, 512
      %39 = vsyncadd [#allocation6], %s38
      %s40 = sshll.u32 [#allocation7], 4
      %s41 = int_to_ptr.vmem [resolvable:$true] %s40
      %46 = dma.hbm_to_vmem [thread:$0]  %s2, 512, %s41, [#allocation6], 128, 128, 8
    $region13: #{tpu_custom_call.1} parent=1 // pred_fallthru
      _
    // Predicated region
    $region14: #{tpu_custom_call.1} parent=1 // pred_check
      _
    $region15: #{tpu_custom_call.1} parent=1 // pred_check_branch
      %48 = sbr.rel (0) target = $region17
    $region16: #{tpu_custom_call.1} parent=1 // pred_region
      %49 = dma.done [#allocation3], 256
    $region17: #{tpu_custom_call.1} parent=1 // pred_fallthru
      _
    // Predicated region
    $region18: #{tpu_custom_call.1} parent=1 // pred_check
      _
    $region19: #{tpu_custom_call.1} parent=1 // pred_check_branch
      %51 = sbr.rel (0) target = $region21
    $region20: #{tpu_custom_call.1} parent=1 // pred_region
      %52 = dma.done [#allocation6], 10752
    $region21: #{tpu_custom_call.1} parent=1 // pred_fallthru
      _
    // Predicated region
    $region22: #{tpu_custom_call.1} parent=1 // pred_check
      _
    $region23: #{tpu_custom_call.1} parent=1 // pred_check_branch
      %54 = sbr.rel (0) target = $region25
    $region24: #{tpu_custom_call.1} parent=1 // pred_region
      %55 = dma.done [#allocation6], 512
    $region25: #{tpu_custom_call.1} parent=1 // pred_fallthru
      _
    %v56 = vld [vmem:[#allocation7] sm:$0xff]
    %v57 = vld [vmem:[#allocation7 + $0x8] sm:$0xff]
    %v58 = vld [vmem:[#allocation7 + $0x10] sm:$0xff]
    %v59 = vld [vmem:[#allocation7 + $0x18] sm:$0xff]
    %v60 = vld [vmem:[#allocation2] sm:$0xff]
    %v61 = vld [vmem:[#allocation2 + $0x8] sm:$0xff]
    %v62 = vld [vmem:[#allocation5] sm:$0xff]
    %v63 = vld [vmem:[#allocation5 + $0x8] sm:$0xff]
    %v64 = vld [vmem:[#allocation5 + $0x10] sm:$0xff]
    %v65 = vld [vmem:[#allocation5 + $0x18] sm:$0xff]
    %v66 = vld [vmem:[#allocation5 + $0x20] sm:$0xff]
    %v67 = vld [vmem:[#allocation5 + $0x28] sm:$0xff]
    %v68 = vld [vmem:[#allocation5 + $0x30] sm:$0xff]
    %v69 = vld [vmem:[#allocation5 + $0x38] sm:$0xff]
    %v70 = vlaneseq
    %v71 = vshrl.u32 %v70, 7
    %v72 = vsub.s32 0, %v71
    %v73 = vrot.slane %v56, %v72
    %vm74 = vcmask 523264
    %v76 = vsel %vm74, %v60, 0
    %v79 = vsel %vm74, %v61, 0
    %81 = vmatprep.subr.mxu0 0.0
    %82 = vmatpush1.msra.mxu0 0.0
    %83 = vmatprep.subr.mxu0 0.0
    %84 = vmatpush1.msra.mxu0 0.0
    %85 = vmatprep.subr.mxu0 0.0
    %86 = vmatpush1.msra.mxu0 0.0
    %87 = vmatprep.subr.mxu0 0.0
    %88 = vmatpush1.msra.mxu0 0.0
    %89 = vmatprep.subr.mxu0 0.0
    %90 = vmatpush1.msra.mxu0 0.0
    %91 = vmatprep.subr.mxu0 0.0
    %92 = vmatpush1.msra.mxu0 0.0
    %93 = vmatprep.subr.mxu0 0.0
    %94 = vmatpush1.msra.mxu0 0.0
    %95 = vmatprep.subr.mxu0 0.0
    %96 = vmatpush1.msra.mxu0 0.0
    %97 = vmatprep.subr.mxu0 0.0
    %98 = vmatpush1.msra.mxu0 %v69
    %99 = vmatprep.subr.mxu0 0.0
    %100 = vmatpush1.msra.mxu0 %v68
    %101 = vmatprep.subr.mxu0 0.0
    %102 = vmatpush1.msra.mxu0 %v67
    %103 = vmatprep.subr.mxu0 0.0
    %104 = vmatpush1.msra.mxu0 %v66
    %105 = vmatprep.subr.mxu0 0.0
    %106 = vmatpush1.msra.mxu0 %v65
    %107 = vmatprep.subr.mxu0 0.0
    %108 = vmatpush1.msra.mxu0 %v64
    %109 = vmatprep.subr.mxu0 0.0
    %110 = vmatpush1.msra.mxu0 %v63
    %111 = vmatprep.subr.mxu0 0.0
    %112 = vmatpush1.msra.mxu0 %v62
    %113 = vmatprep.subr.mxu0 0.0
    %114 = vmatpush2.msra.mxu0 0.0
    %115 = vmatprep.subr.mxu0 0.0
    %116 = vmatpush2.msra.mxu0 0.0
    %117 = vmatprep.subr.mxu0 0.0
    %118 = vmatpush2.msra.mxu0 0.0
    %119 = vmatprep.subr.mxu0 0.0
    %120 = vmatpush2.msra.mxu0 0.0
    %121 = vmatprep.subr.mxu0 0.0
    %122 = vmatpush2.msra.mxu0 0.0
    %123 = vmatprep.subr.mxu0 0.0
    %124 = vmatpush2.msra.mxu0 0.0
    %125 = vmatprep.subr.mxu0 0.0
    %126 = vmatpush2.msra.mxu0 0.0
    %127 = vmatprep.subr.mxu0 0.0
    %128 = vmatpush2.msra.mxu0 0.0
    %129 = vmatprep.subr.mxu0 0.0
    %130 = vmatpush2.msra.mxu0 0.0
    %131 = vmatprep.subr.mxu0 0.0
    %132 = vmatpush2.msra.mxu0 0.0
    %133 = vmatprep.subr.mxu0 0.0
    %134 = vmatpush2.msra.mxu0 0.0
    %135 = vmatprep.subr.mxu0 0.0
    %136 = vmatpush2.msra.mxu0 0.0
    %137 = vmatprep.subr.mxu0 0.0
    %138 = vmatpush2.msra.mxu0 0.0
    %139 = vmatprep.subr.mxu0 0.0
    %140 = vmatpush2.msra.mxu0 0.0
    %141 = vmatprep.subr.mxu0 0.0
    %142 = vmatpush2.msra.mxu0 0.0
    %143 = vmatprep.subr.mxu0 0.0
    %144 = vmatpush2.msra.mxu0 0.0
    %145 = vmatprep.mubr.f32.mxu0 0.0
    %146 = vmatmul.mubr.f32.gmra.mxu0 %v76
    %v147 = vpop.f32.mrf.mxu0
    %v148 = vadd.f32 %v73, %v147
    %v149 = vpop.f32.mrf.mxu0
    %150 = vmatprep.mubr.f32.mxu0 0.0
    %151 = vmatmul.mubr.f32.gmra.mxu0 %v79
    %v152 = vpop.f32.mrf.mxu0
    %v153 = vadd.f32 %v73, %v152
    %v154 = vpop.f32.mrf.mxu0
    %155 = vdwg.mxu0
    %vm156 = vcmask 261120
    %v157 = vsel %vm156, %v148, 0.0
    %158 = vadd.xlane.f32.xlu0 %v157
    %v159 = vpop.xlane.xlu0 %158
    %v160 = vsel %vm156, %v153, 0.0
    %161 = vadd.xlane.f32.xlu0 %v160
    %v162 = vpop.xlane.xlu0 %161
    %v163 = vrcp.pop 32.0
    %v164 = vmul.f32 %v159, %v163
    %v165 = vmul.f32 %v162, %v163
    %v166 = vmul.f32 %v148, %v148
    %v167 = vmul.f32 %v153, %v153
    %v168 = vsel %vm156, %v166, 0.0
    %169 = vadd.xlane.f32.xlu0 %v168
    %v170 = vpop.xlane.xlu0 %169
    %v171 = vsel %vm156, %v167, 0.0
    %172 = vadd.xlane.f32.xlu0 %v171
    %v173 = vpop.xlane.xlu0 %172
    %v174 = vmul.f32 %v170, %v163
    %v175 = vmul.f32 %v173, %v163
    %v176 = vmul.f32 %v164, %v164
    %v177 = vmul.f32 %v165, %v165
    %v178 = vsub.f32 %v174, %v176
    %v179 = vsub.f32 %v175, %v177
    %v180 = vsub.f32 %v148, %v164
    %v181 = vsub.f32 %v153, %v165
    %v182 = vadd.f32 %v178, 1e-05
    %v183 = vadd.f32 %v179, 1e-05
    %v184 = vrsqrt.pop %v182
    %v185 = vrsqrt.pop %v183
    %v186 = vmul.f32 %v180, %v184
    %v187 = vmul.f32 %v181, %v185
    %v188 = vlaneseq
    %v189 = vshrl.u32 %v188, 7
    %v190 = vsub.s32 1, %v189
    %v191 = vrot.slane %v56, %v190
    %v192 = vmul.f32 %v186, %v191
    %v193 = vmul.f32 %v187, %v191
    %v194 = vlaneseq
    %v195 = vshrl.u32 %v194, 7
    %v196 = vsub.s32 2, %v195
    %v197 = vrot.slane %v56, %v196
    %v198 = vadd.f32 %v192, %v197
    %v199 = vadd.f32 %v193, %v197
    %v200 = vmax.f32 %v198, 0.0
    %v201 = vmax.f32 %v199, 0.0
    %v202 = vld [vmem:[#allocation5 + $0x40] sm:$0xff]
    %v203 = vld [vmem:[#allocation5 + $0x48] sm:$0xff]
    %v204 = vld [vmem:[#allocation5 + $0x50] sm:$0xff]
    %v205 = vld [vmem:[#allocation5 + $0x58] sm:$0xff]
    %v206 = vlaneseq
    %v207 = vshrl.u32 %v206, 7
    %v208 = vsub.s32 3, %v207
    %v209 = vrot.slane %v56, %v208
    %v211 = vsel %vm156, %v200, 0
    %v214 = vsel %vm156, %v201, 0
    %216 = vmatprep.subr.mxu0 0.0
    %217 = vmatpush1.msra.mxu0 0.0
    %218 = vmatprep.subr.mxu0 0.0
    %219 = vmatpush1.msra.mxu0 0.0
    %220 = vmatprep.subr.mxu0 0.0
    %221 = vmatpush1.msra.mxu0 0.0
    %222 = vmatprep.subr.mxu0 0.0
    %223 = vmatpush1.msra.mxu0 0.0
    %224 = vmatprep.subr.mxu0 0.0
    %225 = vmatpush1.msra.mxu0 0.0
    %226 = vmatprep.subr.mxu0 0.0
    %227 = vmatpush1.msra.mxu0 0.0
    %228 = vmatprep.subr.mxu0 0.0
    %229 = vmatpush1.msra.mxu0 0.0
    %230 = vmatprep.subr.mxu0 0.0
    %231 = vmatpush1.msra.mxu0 0.0
    %232 = vmatprep.subr.mxu0 0.0
    %233 = vmatpush1.msra.mxu0 0.0
    %234 = vmatprep.subr.mxu0 0.0
    %235 = vmatpush1.msra.mxu0 0.0
    %236 = vmatprep.subr.mxu0 0.0
    %237 = vmatpush1.msra.mxu0 0.0
    %238 = vmatprep.subr.mxu0 0.0
    %239 = vmatpush1.msra.mxu0 0.0
    %240 = vmatprep.subr.mxu0 0.0
    %241 = vmatpush1.msra.mxu0 %v205
    %242 = vmatprep.subr.mxu0 0.0
    %243 = vmatpush1.msra.mxu0 %v204
    %244 = vmatprep.subr.mxu0 0.0
    %245 = vmatpush1.msra.mxu0 %v203
    %246 = vmatprep.subr.mxu0 0.0
    %247 = vmatpush1.msra.mxu0 %v202
    %248 = vmatprep.subr.mxu0 0.0
    %249 = vmatpush2.msra.mxu0 0.0
    %250 = vmatprep.subr.mxu0 0.0
    %251 = vmatpush2.msra.mxu0 0.0
    %252 = vmatprep.subr.mxu0 0.0
    %253 = vmatpush2.msra.mxu0 0.0
    %254 = vmatprep.subr.mxu0 0.0
    %255 = vmatpush2.msra.mxu0 0.0
    %256 = vmatprep.subr.mxu0 0.0
    %257 = vmatpush2.msra.mxu0 0.0
    %258 = vmatprep.subr.mxu0 0.0
    %259 = vmatpush2.msra.mxu0 0.0
    %260 = vmatprep.subr.mxu0 0.0
    %261 = vmatpush2.msra.mxu0 0.0
    %262 = vmatprep.subr.mxu0 0.0
    %263 = vmatpush2.msra.mxu0 0.0
    %264 = vmatprep.subr.mxu0 0.0
    %265 = vmatpush2.msra.mxu0 0.0
    %266 = vmatprep.subr.mxu0 0.0
    %267 = vmatpush2.msra.mxu0 0.0
    %268 = vmatprep.subr.mxu0 0.0
    %269 = vmatpush2.msra.mxu0 0.0
    %270 = vmatprep.subr.mxu0 0.0
    %271 = vmatpush2.msra.mxu0 0.0
    %272 = vmatprep.subr.mxu0 0.0
    %273 = vmatpush2.msra.mxu0 0.0
    %274 = vmatprep.subr.mxu0 0.0
    %275 = vmatpush2.msra.mxu0 0.0
    %276 = vmatprep.subr.mxu0 0.0
    %277 = vmatpush2.msra.mxu0 0.0
    %278 = vmatprep.subr.mxu0 0.0
    %279 = vmatpush2.msra.mxu0 0.0
    %280 = vmatprep.mubr.f32.mxu0 0.0
    %281 = vmatmul.mubr.f32.gmra.mxu0 %v211
    %v282 = vpop.f32.mrf.mxu0
    %v283 = vadd.f32 %v209, %v282
    %v284 = vpop.f32.mrf.mxu0
    %285 = vmatprep.mubr.f32.mxu0 0.0
    %286 = vmatmul.mubr.f32.gmra.mxu0 %v214
    %v287 = vpop.f32.mrf.mxu0
    %v288 = vadd.f32 %v209, %v287
    %v289 = vpop.f32.mrf.mxu0
    %290 = vdwg.mxu0
    %v291 = vsel %vm156, %v283, 0.0
    %292 = vadd.xlane.f32.xlu0 %v291
    %v293 = vpop.xlane.xlu0 %292
    %v294 = vsel %vm156, %v288, 0.0
    %295 = vadd.xlane.f32.xlu0 %v294
    %v296 = vpop.xlane.xlu0 %295
    %v297 = vmul.f32 %v293, %v163
    %v298 = vmul.f32 %v296, %v163
    %v299 = vmul.f32 %v283, %v283
    %v300 = vmul.f32 %v288, %v288
    %v301 = vsel %vm156, %v299, 0.0
    %302 = vadd.xlane.f32.xlu0 %v301
    %v303 = vpop.xlane.xlu0 %302
    %v304 = vsel %vm156, %v300, 0.0
    %305 = vadd.xlane.f32.xlu0 %v304
    %v306 = vpop.xlane.xlu0 %305
    %v307 = vmul.f32 %v303, %v163
    %v308 = vmul.f32 %v306, %v163
    %v309 = vmul.f32 %v297, %v297
    %v310 = vmul.f32 %v298, %v298
    %v311 = vsub.f32 %v307, %v309
    %v312 = vsub.f32 %v308, %v310
    %v313 = vsub.f32 %v283, %v297
    %v314 = vsub.f32 %v288, %v298
    %v315 = vadd.f32 %v311, 1e-05
    %v316 = vadd.f32 %v312, 1e-05
    %v317 = vrsqrt.pop %v315
    %v318 = vrsqrt.pop %v316
    %v319 = vmul.f32 %v313, %v317
    %v320 = vmul.f32 %v314, %v318
    %v321 = vlaneseq
    %v322 = vshrl.u32 %v321, 7
    %v323 = vsub.s32 4, %v322
    %v324 = vrot.slane %v56, %v323
    %v325 = vmul.f32 %v319, %v324
    %v326 = vmul.f32 %v320, %v324
    %v327 = vlaneseq
    %v328 = vshrl.u32 %v327, 7
    %v329 = vsub.s32 5, %v328
    %v330 = vrot.slane %v56, %v329
    %v331 = vadd.f32 %v325, %v330
    %v332 = vadd.f32 %v326, %v330
    %v333 = vld [vmem:[#allocation5 + $0x60] sm:$0xff]
    %v334 = vld [vmem:[#allocation5 + $0x68] sm:$0xff]
    %v335 = vld [vmem:[#allocation5 + $0x70] sm:$0xff]
    %v336 = vld [vmem:[#allocation5 + $0x78] sm:$0xff]
    %v337 = vlaneseq
    %v338 = vshrl.u32 %v337, 7
    %v339 = vsub.s32 6, %v338
    %v340 = vrot.slane %v56, %v339
    %v342 = vsel %vm156, %v331, 0
    %v345 = vsel %vm156, %v332, 0
    %347 = vmatprep.subr.mxu0 0.0
    %348 = vmatpush1.msra.mxu0 0.0
    %349 = vmatprep.subr.mxu0 0.0
    %350 = vmatpush1.msra.mxu0 0.0
    %351 = vmatprep.subr.mxu0 0.0
    %352 = vmatpush1.msra.mxu0 0.0
    %353 = vmatprep.subr.mxu0 0.0
    %354 = vmatpush1.msra.mxu0 0.0
    %355 = vmatprep.subr.mxu0 0.0
    %356 = vmatpush1.msra.mxu0 0.0
    %357 = vmatprep.subr.mxu0 0.0
    %358 = vmatpush1.msra.mxu0 0.0
    %359 = vmatprep.subr.mxu0 0.0
    %360 = vmatpush1.msra.mxu0 0.0
    %361 = vmatprep.subr.mxu0 0.0
    %362 = vmatpush1.msra.mxu0 0.0
    %363 = vmatprep.subr.mxu0 0.0
    %364 = vmatpush1.msra.mxu0 0.0
    %365 = vmatprep.subr.mxu0 0.0
    %366 = vmatpush1.msra.mxu0 0.0
    %367 = vmatprep.subr.mxu0 0.0
    %368 = vmatpush1.msra.mxu0 0.0
    %369 = vmatprep.subr.mxu0 0.0
    %370 = vmatpush1.msra.mxu0 0.0
    %371 = vmatprep.subr.mxu0 0.0
    %372 = vmatpush1.msra.mxu0 %v336
    %373 = vmatprep.subr.mxu0 0.0
    %374 = vmatpush1.msra.mxu0 %v335
    %375 = vmatprep.subr.mxu0 0.0
    %376 = vmatpush1.msra.mxu0 %v334
    %377 = vmatprep.subr.mxu0 0.0
    %378 = vmatpush1.msra.mxu0 %v333
    %379 = vmatprep.subr.mxu0 0.0
    %380 = vmatpush2.msra.mxu0 0.0
    %381 = vmatprep.subr.mxu0 0.0
    %382 = vmatpush2.msra.mxu0 0.0
    %383 = vmatprep.subr.mxu0 0.0
    %384 = vmatpush2.msra.mxu0 0.0
    %385 = vmatprep.subr.mxu0 0.0
    %386 = vmatpush2.msra.mxu0 0.0
    %387 = vmatprep.subr.mxu0 0.0
    %388 = vmatpush2.msra.mxu0 0.0
    %389 = vmatprep.subr.mxu0 0.0
    %390 = vmatpush2.msra.mxu0 0.0
    %391 = vmatprep.subr.mxu0 0.0
    %392 = vmatpush2.msra.mxu0 0.0
    %393 = vmatprep.subr.mxu0 0.0
    %394 = vmatpush2.msra.mxu0 0.0
    %395 = vmatprep.subr.mxu0 0.0
    %396 = vmatpush2.msra.mxu0 0.0
    %397 = vmatprep.subr.mxu0 0.0
    %398 = vmatpush2.msra.mxu0 0.0
    %399 = vmatprep.subr.mxu0 0.0
    %400 = vmatpush2.msra.mxu0 0.0
    %401 = vmatprep.subr.mxu0 0.0
    %402 = vmatpush2.msra.mxu0 0.0
    %403 = vmatprep.subr.mxu0 0.0
    %404 = vmatpush2.msra.mxu0 0.0
    %405 = vmatprep.subr.mxu0 0.0
    %406 = vmatpush2.msra.mxu0 0.0
    %407 = vmatprep.subr.mxu0 0.0
    %408 = vmatpush2.msra.mxu0 0.0
    %409 = vmatprep.subr.mxu0 0.0
    %410 = vmatpush2.msra.mxu0 0.0
    %411 = vmatprep.mubr.f32.mxu0 0.0
    %412 = vmatmul.mubr.f32.gmra.mxu0 %v342
    %v413 = vpop.f32.mrf.mxu0
    %v414 = vadd.f32 %v340, %v413
    %v415 = vpop.f32.mrf.mxu0
    %416 = vmatprep.mubr.f32.mxu0 0.0
    %417 = vmatmul.mubr.f32.gmra.mxu0 %v345
    %v418 = vpop.f32.mrf.mxu0
    %v419 = vadd.f32 %v340, %v418
    %v420 = vpop.f32.mrf.mxu0
    %421 = vdwg.mxu0
    %v422 = vsel %vm156, %v331, 0.0
    %423 = vadd.xlane.f32.xlu0 %v422
    %v424 = vpop.xlane.xlu0 %423
    %v425 = vsel %vm156, %v332, 0.0
    %426 = vadd.xlane.f32.xlu0 %v425
    %v427 = vpop.xlane.xlu0 %426
    %v428 = vmul.f32 %v424, %v163
    %v429 = vmul.f32 %v427, %v163
    %v430 = vmul.f32 %v331, %v331
    %v431 = vmul.f32 %v332, %v332
    %v432 = vsel %vm156, %v430, 0.0
    %433 = vadd.xlane.f32.xlu0 %v432
    %v434 = vpop.xlane.xlu0 %433
    %v435 = vsel %vm156, %v431, 0.0
    %436 = vadd.xlane.f32.xlu0 %v435
    %v437 = vpop.xlane.xlu0 %436
    %v438 = vmul.f32 %v434, %v163
    %v439 = vmul.f32 %v437, %v163
    %v440 = vmul.f32 %v428, %v428
    %v441 = vmul.f32 %v429, %v429
    %v442 = vsub.f32 %v438, %v440
    %v443 = vsub.f32 %v439, %v441
    %v444 = vsub.f32 %v331, %v428
    %v445 = vsub.f32 %v332, %v429
    %v446 = vadd.f32 %v442, 1e-05
    %v447 = vadd.f32 %v443, 1e-05
    %v448 = vrsqrt.pop %v446
    %v449 = vrsqrt.pop %v447
    %v450 = vmul.f32 %v444, %v448
    %v451 = vmul.f32 %v445, %v449
    %v452 = vlaneseq
    %v453 = vshrl.u32 %v452, 7
    %v454 = vsub.s32 7, %v453
    %v455 = vrot.slane %v56, %v454
    %v456 = vmul.f32 %v450, %v455
    %v457 = vmul.f32 %v451, %v455
    %v458 = vlaneseq
    %v459 = vshrl.u32 %v458, 7
    %v460 = vsub.s32 0, %v459
    %v461 = vrot.slane %v57, %v460
    %v462 = vadd.f32 %v456, %v461
    %v463 = vadd.f32 %v457, %v461
    %v464 = vld [vmem:[#allocation5 + $0x80] sm:$0xff]
    %v465 = vld [vmem:[#allocation5 + $0x88] sm:$0xff]
    %v466 = vld [vmem:[#allocation5 + $0x90] sm:$0xff]
    %v467 = vld [vmem:[#allocation5 + $0x98] sm:$0xff]
    %v468 = vlaneseq
    %v469 = vshrl.u32 %v468, 7
    %v470 = vsub.s32 1, %v469
    %v471 = vrot.slane %v57, %v470
    %v473 = vsel %vm156, %v462, 0
    %v476 = vsel %vm156, %v463, 0
    %478 = vmatprep.subr.mxu0 0.0
    %479 = vmatpush1.msra.mxu0 0.0
    %480 = vmatprep.subr.mxu0 0.0
    %481 = vmatpush1.msra.mxu0 0.0
    %482 = vmatprep.subr.mxu0 0.0
    %483 = vmatpush1.msra.mxu0 0.0
    %484 = vmatprep.subr.mxu0 0.0
    %485 = vmatpush1.msra.mxu0 0.0
    %486 = vmatprep.subr.mxu0 0.0
    %487 = vmatpush1.msra.mxu0 0.0
    %488 = vmatprep.subr.mxu0 0.0
    %489 = vmatpush1.msra.mxu0 0.0
    %490 = vmatprep.subr.mxu0 0.0
    %491 = vmatpush1.msra.mxu0 0.0
    %492 = vmatprep.subr.mxu0 0.0
    %493 = vmatpush1.msra.mxu0 0.0
    %494 = vmatprep.subr.mxu0 0.0
    %495 = vmatpush1.msra.mxu0 0.0
    %496 = vmatprep.subr.mxu0 0.0
    %497 = vmatpush1.msra.mxu0 0.0
    %498 = vmatprep.subr.mxu0 0.0
    %499 = vmatpush1.msra.mxu0 0.0
    %500 = vmatprep.subr.mxu0 0.0
    %501 = vmatpush1.msra.mxu0 0.0
    %502 = vmatprep.subr.mxu0 0.0
    %503 = vmatpush1.msra.mxu0 %v467
    %504 = vmatprep.subr.mxu0 0.0
    %505 = vmatpush1.msra.mxu0 %v466
    %506 = vmatprep.subr.mxu0 0.0
    %507 = vmatpush1.msra.mxu0 %v465
    %508 = vmatprep.subr.mxu0 0.0
    %509 = vmatpush1.msra.mxu0 %v464
    %510 = vmatprep.subr.mxu0 0.0
    %511 = vmatpush2.msra.mxu0 0.0
    %512 = vmatprep.subr.mxu0 0.0
    %513 = vmatpush2.msra.mxu0 0.0
    %514 = vmatprep.subr.mxu0 0.0
    %515 = vmatpush2.msra.mxu0 0.0
    %516 = vmatprep.subr.mxu0 0.0
    %517 = vmatpush2.msra.mxu0 0.0
    %518 = vmatprep.subr.mxu0 0.0
    %519 = vmatpush2.msra.mxu0 0.0
    %520 = vmatprep.subr.mxu0 0.0
    %521 = vmatpush2.msra.mxu0 0.0
    %522 = vmatprep.subr.mxu0 0.0
    %523 = vmatpush2.msra.mxu0 0.0
    %524 = vmatprep.subr.mxu0 0.0
    %525 = vmatpush2.msra.mxu0 0.0
    %526 = vmatprep.subr.mxu0 0.0
    %527 = vmatpush2.msra.mxu0 0.0
    %528 = vmatprep.subr.mxu0 0.0
    %529 = vmatpush2.msra.mxu0 0.0
    %530 = vmatprep.subr.mxu0 0.0
    %531 = vmatpush2.msra.mxu0 0.0
    %532 = vmatprep.subr.mxu0 0.0
    %533 = vmatpush2.msra.mxu0 0.0
    %534 = vmatprep.subr.mxu0 0.0
    %535 = vmatpush2.msra.mxu0 0.0
    %536 = vmatprep.subr.mxu0 0.0
    %537 = vmatpush2.msra.mxu0 0.0
    %538 = vmatprep.subr.mxu0 0.0
    %539 = vmatpush2.msra.mxu0 0.0
    %540 = vmatprep.subr.mxu0 0.0
    %541 = vmatpush2.msra.mxu0 0.0
    %542 = vmatprep.mubr.f32.mxu0 0.0
    %543 = vmatmul.mubr.f32.gmra.mxu0 %v473
    %v544 = vpop.f32.mrf.mxu0
    %v545 = vadd.f32 %v471, %v544
    %v546 = vpop.f32.mrf.mxu0
    %547 = vmatprep.mubr.f32.mxu0 0.0
    %548 = vmatmul.mubr.f32.gmra.mxu0 %v476
    %v549 = vpop.f32.mrf.mxu0
    %v550 = vadd.f32 %v471, %v549
    %v551 = vpop.f32.mrf.mxu0
    %552 = vdwg.mxu0
    %554 = vrot.lane.b32.xlu0 %v545, 120
    %v555 = vpop.permute.xlu0 %554
    %557 = vrot.lane.b32.xlu0 %v550, 120
    %v558 = vpop.permute.xlu0 %557
    %559 = vrot.lane.b32.xlu0 %v545, 112
    %v560 = vpop.permute.xlu0 %559
    %561 = vrot.lane.b32.xlu0 %v550, 112
    %v562 = vpop.permute.xlu0 %561
    %563 = vrot.lane.b32.xlu0 %v545, 104
    %v564 = vpop.permute.xlu0 %563
    %565 = vrot.lane.b32.xlu0 %v550, 104
    %v566 = vpop.permute.xlu0 %565
    %568 = vrot.lane.b32.xlu0 %v414, 120
    %v569 = vpop.permute.xlu0 %568
    %571 = vrot.lane.b32.xlu0 %v419, 120
    %v572 = vpop.permute.xlu0 %571
    %573 = vrot.lane.b32.xlu0 %v414, 112
    %v574 = vpop.permute.xlu0 %573
    %575 = vrot.lane.b32.xlu0 %v419, 112
    %v576 = vpop.permute.xlu0 %575
    %577 = vrot.lane.b32.xlu0 %v414, 104
    %v578 = vpop.permute.xlu0 %577
    %579 = vrot.lane.b32.xlu0 %v419, 104
    %v580 = vpop.permute.xlu0 %579
    %vm581 = vcmask 64512
    %v582 = vsel %vm581, %v545, 0
    %v584 = vsel %vm581, %v414, 0
    %586 = vmatprep.subr.mxu0 0.0
    %587 = vmatpush1.xpose.msra.mxu0 0.0
    %588 = vmatprep.subr.mxu0 0.0
    %589 = vmatpush1.xpose.msra.mxu0 0.0
    %590 = vmatprep.subr.mxu0 0.0
    %591 = vmatpush1.xpose.msra.mxu0 0.0
    %592 = vmatprep.subr.mxu0 0.0
    %593 = vmatpush1.xpose.msra.mxu0 0.0
    %594 = vmatprep.subr.mxu0 0.0
    %595 = vmatpush1.xpose.msra.mxu0 0.0
    %596 = vmatprep.subr.mxu0 0.0
    %597 = vmatpush1.xpose.msra.mxu0 0.0
    %598 = vmatprep.subr.mxu0 0.0
    %599 = vmatpush1.xpose.msra.mxu0 0.0
    %600 = vmatprep.subr.mxu0 0.0
    %601 = vmatpush1.xpose.msra.mxu0 0.0
    %602 = vmatprep.subr.mxu0 0.0
    %603 = vmatpush1.xpose.msra.mxu0 0.0
    %604 = vmatprep.subr.mxu0 0.0
    %605 = vmatpush1.xpose.msra.mxu0 0.0
    %606 = vmatprep.subr.mxu0 0.0
    %607 = vmatpush1.xpose.msra.mxu0 0.0
    %608 = vmatprep.subr.mxu0 0.0
    %609 = vmatpush1.xpose.msra.mxu0 0.0
    %610 = vmatprep.subr.mxu0 0.0
    %611 = vmatpush1.xpose.msra.mxu0 0.0
    %612 = vmatprep.subr.mxu0 0.0
    %613 = vmatpush1.xpose.msra.mxu0 0.0
    %614 = vmatprep.subr.mxu0 0.0
    %615 = vmatpush1.xpose.msra.mxu0 0.0
    %616 = vmatprep.subr.mxu0 0.0
    %617 = vmatpush1.xpose.msra.mxu0 %v584
    %618 = vmatprep.subr.mxu0 0.0
    %619 = vmatpush2.xpose.msra.mxu0 0.0
    %620 = vmatprep.subr.mxu0 0.0
    %621 = vmatpush2.xpose.msra.mxu0 0.0
    %622 = vmatprep.subr.mxu0 0.0
    %623 = vmatpush2.xpose.msra.mxu0 0.0
    %624 = vmatprep.subr.mxu0 0.0
    %625 = vmatpush2.xpose.msra.mxu0 0.0
    %626 = vmatprep.subr.mxu0 0.0
    %627 = vmatpush2.xpose.msra.mxu0 0.0
    %628 = vmatprep.subr.mxu0 0.0
    %629 = vmatpush2.xpose.msra.mxu0 0.0
    %630 = vmatprep.subr.mxu0 0.0
    %631 = vmatpush2.xpose.msra.mxu0 0.0
    %632 = vmatprep.subr.mxu0 0.0
    %633 = vmatpush2.xpose.msra.mxu0 0.0
    %634 = vmatprep.subr.mxu0 0.0
    %635 = vmatpush2.xpose.msra.mxu0 0.0
    %636 = vmatprep.subr.mxu0 0.0
    %637 = vmatpush2.xpose.msra.mxu0 0.0
    %638 = vmatprep.subr.mxu0 0.0
    %639 = vmatpush2.xpose.msra.mxu0 0.0
    %640 = vmatprep.subr.mxu0 0.0
    %641 = vmatpush2.xpose.msra.mxu0 0.0
    %642 = vmatprep.subr.mxu0 0.0
    %643 = vmatpush2.xpose.msra.mxu0 0.0
    %644 = vmatprep.subr.mxu0 0.0
    %645 = vmatpush2.xpose.msra.mxu0 0.0
    %646 = vmatprep.subr.mxu0 0.0
    %647 = vmatpush2.xpose.msra.mxu0 0.0
    %648 = vmatprep.subr.mxu0 0.0
    %649 = vmatpush2.xpose.msra.mxu0 0.0
    %650 = vmatprep.mubr.f32.mxu0 0.0
    %651 = vmatmul.mubr.f32.gmra.mxu0 %v582
    %v652 = vpop.f32.mrf.mxu0
    %v653 = vadd.f32 0.0, %v652
    %v654 = vpop.f32.mrf.mxu0
    %655 = vdwg.mxu0
    %v656 = vsel %vm581, %v550, 0
    %v658 = vsel %vm581, %v419, 0
    %660 = vmatprep.subr.mxu0 0.0
    %661 = vmatpush1.xpose.msra.mxu0 0.0
    %662 = vmatprep.subr.mxu0 0.0
    %663 = vmatpush1.xpose.msra.mxu0 0.0
    %664 = vmatprep.subr.mxu0 0.0
    %665 = vmatpush1.xpose.msra.mxu0 0.0
    %666 = vmatprep.subr.mxu0 0.0
    %667 = vmatpush1.xpose.msra.mxu0 0.0
    %668 = vmatprep.subr.mxu0 0.0
    %669 = vmatpush1.xpose.msra.mxu0 0.0
    %670 = vmatprep.subr.mxu0 0.0
    %671 = vmatpush1.xpose.msra.mxu0 0.0
    %672 = vmatprep.subr.mxu0 0.0
    %673 = vmatpush1.xpose.msra.mxu0 0.0
    %674 = vmatprep.subr.mxu0 0.0
    %675 = vmatpush1.xpose.msra.mxu0 0.0
    %676 = vmatprep.subr.mxu0 0.0
    %677 = vmatpush1.xpose.msra.mxu0 0.0
    %678 = vmatprep.subr.mxu0 0.0
    %679 = vmatpush1.xpose.msra.mxu0 0.0
    %680 = vmatprep.subr.mxu0 0.0
    %681 = vmatpush1.xpose.msra.mxu0 0.0
    %682 = vmatprep.subr.mxu0 0.0
    %683 = vmatpush1.xpose.msra.mxu0 0.0
    %684 = vmatprep.subr.mxu0 0.0
    %685 = vmatpush1.xpose.msra.mxu0 0.0
    %686 = vmatprep.subr.mxu0 0.0
    %687 = vmatpush1.xpose.msra.mxu0 0.0
    %688 = vmatprep.subr.mxu0 0.0
    %689 = vmatpush1.xpose.msra.mxu0 0.0
    %690 = vmatprep.subr.mxu0 0.0
    %691 = vmatpush1.xpose.msra.mxu0 %v658
    %692 = vmatprep.subr.mxu0 0.0
    %693 = vmatpush2.xpose.msra.mxu0 0.0
    %694 = vmatprep.subr.mxu0 0.0
    %695 = vmatpush2.xpose.msra.mxu0 0.0
    %696 = vmatprep.subr.mxu0 0.0
    %697 = vmatpush2.xpose.msra.mxu0 0.0
    %698 = vmatprep.subr.mxu0 0.0
    %699 = vmatpush2.xpose.msra.mxu0 0.0
    %700 = vmatprep.subr.mxu0 0.0
    %701 = vmatpush2.xpose.msra.mxu0 0.0
    %702 = vmatprep.subr.mxu0 0.0
    %703 = vmatpush2.xpose.msra.mxu0 0.0
    %704 = vmatprep.subr.mxu0 0.0
    %705 = vmatpush2.xpose.msra.mxu0 0.0
    %706 = vmatprep.subr.mxu0 0.0
    %707 = vmatpush2.xpose.msra.mxu0 0.0
    %708 = vmatprep.subr.mxu0 0.0
    %709 = vmatpush2.xpose.msra.mxu0 0.0
    %710 = vmatprep.subr.mxu0 0.0
    %711 = vmatpush2.xpose.msra.mxu0 0.0
    %712 = vmatprep.subr.mxu0 0.0
    %713 = vmatpush2.xpose.msra.mxu0 0.0
    %714 = vmatprep.subr.mxu0 0.0
    %715 = vmatpush2.xpose.msra.mxu0 0.0
    %716 = vmatprep.subr.mxu0 0.0
    %717 = vmatpush2.xpose.msra.mxu0 0.0
    %718 = vmatprep.subr.mxu0 0.0
    %719 = vmatpush2.xpose.msra.mxu0 0.0
    %720 = vmatprep.subr.mxu0 0.0
    %721 = vmatpush2.xpose.msra.mxu0 0.0
    %722 = vmatprep.subr.mxu0 0.0
    %723 = vmatpush2.xpose.msra.mxu0 0.0
    %724 = vmatprep.mubr.f32.mxu0 0.0
    %725 = vmatmul.mubr.f32.gmra.mxu0 %v656
    %v726 = vpop.f32.mrf.mxu0
    %v727 = vadd.f32 0.0, %v726
    %v728 = vpop.f32.mrf.mxu0
    %729 = vdwg.mxu0
    %v730 = vsel %vm581, %v555, 0
    %v732 = vsel %vm581, %v569, 0
    %734 = vmatprep.subr.mxu0 0.0
    %735 = vmatpush1.xpose.msra.mxu0 0.0
    %736 = vmatprep.subr.mxu0 0.0
    %737 = vmatpush1.xpose.msra.mxu0 0.0
    %738 = vmatprep.subr.mxu0 0.0
    %739 = vmatpush1.xpose.msra.mxu0 0.0
    %740 = vmatprep.subr.mxu0 0.0
    %741 = vmatpush1.xpose.msra.mxu0 0.0
    %742 = vmatprep.subr.mxu0 0.0
    %743 = vmatpush1.xpose.msra.mxu0 0.0
    %744 = vmatprep.subr.mxu0 0.0
    %745 = vmatpush1.xpose.msra.mxu0 0.0
    %746 = vmatprep.subr.mxu0 0.0
    %747 = vmatpush1.xpose.msra.mxu0 0.0
    %748 = vmatprep.subr.mxu0 0.0
    %749 = vmatpush1.xpose.msra.mxu0 0.0
    %750 = vmatprep.subr.mxu0 0.0
    %751 = vmatpush1.xpose.msra.mxu0 0.0
    %752 = vmatprep.subr.mxu0 0.0
    %753 = vmatpush1.xpose.msra.mxu0 0.0
    %754 = vmatprep.subr.mxu0 0.0
    %755 = vmatpush1.xpose.msra.mxu0 0.0
    %756 = vmatprep.subr.mxu0 0.0
    %757 = vmatpush1.xpose.msra.mxu0 0.0
    %758 = vmatprep.subr.mxu0 0.0
    %759 = vmatpush1.xpose.msra.mxu0 0.0
    %760 = vmatprep.subr.mxu0 0.0
    %761 = vmatpush1.xpose.msra.mxu0 0.0
    %762 = vmatprep.subr.mxu0 0.0
    %763 = vmatpush1.xpose.msra.mxu0 0.0
    %764 = vmatprep.subr.mxu0 0.0
    %765 = vmatpush1.xpose.msra.mxu0 %v732
    %766 = vmatprep.subr.mxu0 0.0
    %767 = vmatpush2.xpose.msra.mxu0 0.0
    %768 = vmatprep.subr.mxu0 0.0
    %769 = vmatpush2.xpose.msra.mxu0 0.0
    %770 = vmatprep.subr.mxu0 0.0
    %771 = vmatpush2.xpose.msra.mxu0 0.0
    %772 = vmatprep.subr.mxu0 0.0
    %773 = vmatpush2.xpose.msra.mxu0 0.0
    %774 = vmatprep.subr.mxu0 0.0
    %775 = vmatpush2.xpose.msra.mxu0 0.0
    %776 = vmatprep.subr.mxu0 0.0
    %777 = vmatpush2.xpose.msra.mxu0 0.0
    %778 = vmatprep.subr.mxu0 0.0
    %779 = vmatpush2.xpose.msra.mxu0 0.0
    %780 = vmatprep.subr.mxu0 0.0
    %781 = vmatpush2.xpose.msra.mxu0 0.0
    %782 = vmatprep.subr.mxu0 0.0
    %783 = vmatpush2.xpose.msra.mxu0 0.0
    %784 = vmatprep.subr.mxu0 0.0
    %785 = vmatpush2.xpose.msra.mxu0 0.0
    %786 = vmatprep.subr.mxu0 0.0
    %787 = vmatpush2.xpose.msra.mxu0 0.0
    %788 = vmatprep.subr.mxu0 0.0
    %789 = vmatpush2.xpose.msra.mxu0 0.0
    %790 = vmatprep.subr.mxu0 0.0
    %791 = vmatpush2.xpose.msra.mxu0 0.0
    %792 = vmatprep.subr.mxu0 0.0
    %793 = vmatpush2.xpose.msra.mxu0 0.0
    %794 = vmatprep.subr.mxu0 0.0
    %795 = vmatpush2.xpose.msra.mxu0 0.0
    %796 = vmatprep.subr.mxu0 0.0
    %797 = vmatpush2.xpose.msra.mxu0 0.0
    %798 = vmatprep.mubr.f32.mxu0 0.0
    %799 = vmatmul.mubr.f32.gmra.mxu0 %v730
    %v800 = vpop.f32.mrf.mxu0
    %v801 = vadd.f32 0.0, %v800
    %v802 = vpop.f32.mrf.mxu0
    %803 = vdwg.mxu0
    %v804 = vsel %vm581, %v558, 0
    %v806 = vsel %vm581, %v572, 0
    %808 = vmatprep.subr.mxu0 0.0
    %809 = vmatpush1.xpose.msra.mxu0 0.0
    %810 = vmatprep.subr.mxu0 0.0
    %811 = vmatpush1.xpose.msra.mxu0 0.0
    %812 = vmatprep.subr.mxu0 0.0
    %813 = vmatpush1.xpose.msra.mxu0 0.0
    %814 = vmatprep.subr.mxu0 0.0
    %815 = vmatpush1.xpose.msra.mxu0 0.0
    %816 = vmatprep.subr.mxu0 0.0
    %817 = vmatpush1.xpose.msra.mxu0 0.0
    %818 = vmatprep.subr.mxu0 0.0
    %819 = vmatpush1.xpose.msra.mxu0 0.0
    %820 = vmatprep.subr.mxu0 0.0
    %821 = vmatpush1.xpose.msra.mxu0 0.0
    %822 = vmatprep.subr.mxu0 0.0
    %823 = vmatpush1.xpose.msra.mxu0 0.0
    %824 = vmatprep.subr.mxu0 0.0
    %825 = vmatpush1.xpose.msra.mxu0 0.0
    %826 = vmatprep.subr.mxu0 0.0
    %827 = vmatpush1.xpose.msra.mxu0 0.0
    %828 = vmatprep.subr.mxu0 0.0
    %829 = vmatpush1.xpose.msra.mxu0 0.0
    %830 = vmatprep.subr.mxu0 0.0
    %831 = vmatpush1.xpose.msra.mxu0 0.0
    %832 = vmatprep.subr.mxu0 0.0
    %833 = vmatpush1.xpose.msra.mxu0 0.0
    %834 = vmatprep.subr.mxu0 0.0
    %835 = vmatpush1.xpose.msra.mxu0 0.0
    %836 = vmatprep.subr.mxu0 0.0
    %837 = vmatpush1.xpose.msra.mxu0 0.0
    %838 = vmatprep.subr.mxu0 0.0
    %839 = vmatpush1.xpose.msra.mxu0 %v806
    %840 = vmatprep.subr.mxu0 0.0
    %841 = vmatpush2.xpose.msra.mxu0 0.0
    %842 = vmatprep.subr.mxu0 0.0
    %843 = vmatpush2.xpose.msra.mxu0 0.0
    %844 = vmatprep.subr.mxu0 0.0
    %845 = vmatpush2.xpose.msra.mxu0 0.0
    %846 = vmatprep.subr.mxu0 0.0
    %847 = vmatpush2.xpose.msra.mxu0 0.0
    %848 = vmatprep.subr.mxu0 0.0
    %849 = vmatpush2.xpose.msra.mxu0 0.0
    %850 = vmatprep.subr.mxu0 0.0
    %851 = vmatpush2.xpose.msra.mxu0 0.0
    %852 = vmatprep.subr.mxu0 0.0
    %853 = vmatpush2.xpose.msra.mxu0 0.0
    %854 = vmatprep.subr.mxu0 0.0
    %855 = vmatpush2.xpose.msra.mxu0 0.0
    %856 = vmatprep.subr.mxu0 0.0
    %857 = vmatpush2.xpose.msra.mxu0 0.0
    %858 = vmatprep.subr.mxu0 0.0
    %859 = vmatpush2.xpose.msra.mxu0 0.0
    %860 = vmatprep.subr.mxu0 0.0
    %861 = vmatpush2.xpose.msra.mxu0 0.0
    %862 = vmatprep.subr.mxu0 0.0
    %863 = vmatpush2.xpose.msra.mxu0 0.0
    %864 = vmatprep.subr.mxu0 0.0
    %865 = vmatpush2.xpose.msra.mxu0 0.0
    %866 = vmatprep.subr.mxu0 0.0
    %867 = vmatpush2.xpose.msra.mxu0 0.0
    %868 = vmatprep.subr.mxu0 0.0
    %869 = vmatpush2.xpose.msra.mxu0 0.0
    %870 = vmatprep.subr.mxu0 0.0
    %871 = vmatpush2.xpose.msra.mxu0 0.0
    %872 = vmatprep.mubr.f32.mxu0 0.0
    %873 = vmatmul.mubr.f32.gmra.mxu0 %v804
    %v874 = vpop.f32.mrf.mxu0
    %v875 = vadd.f32 0.0, %v874
    %v876 = vpop.f32.mrf.mxu0
    %877 = vdwg.mxu0
    %v878 = vsel %vm581, %v560, 0
    %v880 = vsel %vm581, %v574, 0
    %882 = vmatprep.subr.mxu0 0.0
    %883 = vmatpush1.xpose.msra.mxu0 0.0
    %884 = vmatprep.subr.mxu0 0.0
    %885 = vmatpush1.xpose.msra.mxu0 0.0
    %886 = vmatprep.subr.mxu0 0.0
    %887 = vmatpush1.xpose.msra.mxu0 0.0
    %888 = vmatprep.subr.mxu0 0.0
    %889 = vmatpush1.xpose.msra.mxu0 0.0
    %890 = vmatprep.subr.mxu0 0.0
    %891 = vmatpush1.xpose.msra.mxu0 0.0
    %892 = vmatprep.subr.mxu0 0.0
    %893 = vmatpush1.xpose.msra.mxu0 0.0
    %894 = vmatprep.subr.mxu0 0.0
    %895 = vmatpush1.xpose.msra.mxu0 0.0
    %896 = vmatprep.subr.mxu0 0.0
    %897 = vmatpush1.xpose.msra.mxu0 0.0
    %898 = vmatprep.subr.mxu0 0.0
    %899 = vmatpush1.xpose.msra.mxu0 0.0
    %900 = vmatprep.subr.mxu0 0.0
    %901 = vmatpush1.xpose.msra.mxu0 0.0
    %902 = vmatprep.subr.mxu0 0.0
    %903 = vmatpush1.xpose.msra.mxu0 0.0
    %904 = vmatprep.subr.mxu0 0.0
    %905 = vmatpush1.xpose.msra.mxu0 0.0
    %906 = vmatprep.subr.mxu0 0.0
    %907 = vmatpush1.xpose.msra.mxu0 0.0
    %908 = vmatprep.subr.mxu0 0.0
    %909 = vmatpush1.xpose.msra.mxu0 0.0
    %910 = vmatprep.subr.mxu0 0.0
    %911 = vmatpush1.xpose.msra.mxu0 0.0
    %912 = vmatprep.subr.mxu0 0.0
    %913 = vmatpush1.xpose.msra.mxu0 %v880
    %914 = vmatprep.subr.mxu0 0.0
    %915 = vmatpush2.xpose.msra.mxu0 0.0
    %916 = vmatprep.subr.mxu0 0.0
    %917 = vmatpush2.xpose.msra.mxu0 0.0
    %918 = vmatprep.subr.mxu0 0.0
    %919 = vmatpush2.xpose.msra.mxu0 0.0
    %920 = vmatprep.subr.mxu0 0.0
    %921 = vmatpush2.xpose.msra.mxu0 0.0
    %922 = vmatprep.subr.mxu0 0.0
    %923 = vmatpush2.xpose.msra.mxu0 0.0
    %924 = vmatprep.subr.mxu0 0.0
    %925 = vmatpush2.xpose.msra.mxu0 0.0
    %926 = vmatprep.subr.mxu0 0.0
    %927 = vmatpush2.xpose.msra.mxu0 0.0
    %928 = vmatprep.subr.mxu0 0.0
    %929 = vmatpush2.xpose.msra.mxu0 0.0
    %930 = vmatprep.subr.mxu0 0.0
    %931 = vmatpush2.xpose.msra.mxu0 0.0
    %932 = vmatprep.subr.mxu0 0.0
    %933 = vmatpush2.xpose.msra.mxu0 0.0
    %934 = vmatprep.subr.mxu0 0.0
    %935 = vmatpush2.xpose.msra.mxu0 0.0
    %936 = vmatprep.subr.mxu0 0.0
    %937 = vmatpush2.xpose.msra.mxu0 0.0
    %938 = vmatprep.subr.mxu0 0.0
    %939 = vmatpush2.xpose.msra.mxu0 0.0
    %940 = vmatprep.subr.mxu0 0.0
    %941 = vmatpush2.xpose.msra.mxu0 0.0
    %942 = vmatprep.subr.mxu0 0.0
    %943 = vmatpush2.xpose.msra.mxu0 0.0
    %944 = vmatprep.subr.mxu0 0.0
    %945 = vmatpush2.xpose.msra.mxu0 0.0
    %946 = vmatprep.mubr.f32.mxu0 0.0
    %947 = vmatmul.mubr.f32.gmra.mxu0 %v878
    %v948 = vpop.f32.mrf.mxu0
    %v949 = vadd.f32 0.0, %v948
    %v950 = vpop.f32.mrf.mxu0
    %951 = vdwg.mxu0
    %v952 = vsel %vm581, %v562, 0
    %v954 = vsel %vm581, %v576, 0
    %956 = vmatprep.subr.mxu0 0.0
    %957 = vmatpush1.xpose.msra.mxu0 0.0
    %958 = vmatprep.subr.mxu0 0.0
    %959 = vmatpush1.xpose.msra.mxu0 0.0
    %960 = vmatprep.subr.mxu0 0.0
    %961 = vmatpush1.xpose.msra.mxu0 0.0
    %962 = vmatprep.subr.mxu0 0.0
    %963 = vmatpush1.xpose.msra.mxu0 0.0
    %964 = vmatprep.subr.mxu0 0.0
    %965 = vmatpush1.xpose.msra.mxu0 0.0
    %966 = vmatprep.subr.mxu0 0.0
    %967 = vmatpush1.xpose.msra.mxu0 0.0
    %968 = vmatprep.subr.mxu0 0.0
    %969 = vmatpush1.xpose.msra.mxu0 0.0
    %970 = vmatprep.subr.mxu0 0.0
    %971 = vmatpush1.xpose.msra.mxu0 0.0
    %972 = vmatprep.subr.mxu0 0.0
    %973 = vmatpush1.xpose.msra.mxu0 0.0
    %974 = vmatprep.subr.mxu0 0.0
    %975 = vmatpush1.xpose.msra.mxu0 0.0
    %976 = vmatprep.subr.mxu0 0.0
    %977 = vmatpush1.xpose.msra.mxu0 0.0
    %978 = vmatprep.subr.mxu0 0.0
    %979 = vmatpush1.xpose.msra.mxu0 0.0
    %980 = vmatprep.subr.mxu0 0.0
    %981 = vmatpush1.xpose.msra.mxu0 0.0
    %982 = vmatprep.subr.mxu0 0.0
    %983 = vmatpush1.xpose.msra.mxu0 0.0
    %984 = vmatprep.subr.mxu0 0.0
    %985 = vmatpush1.xpose.msra.mxu0 0.0
    %986 = vmatprep.subr.mxu0 0.0
    %987 = vmatpush1.xpose.msra.mxu0 %v954
    %988 = vmatprep.subr.mxu0 0.0
    %989 = vmatpush2.xpose.msra.mxu0 0.0
    %990 = vmatprep.subr.mxu0 0.0
    %991 = vmatpush2.xpose.msra.mxu0 0.0
    %992 = vmatprep.subr.mxu0 0.0
    %993 = vmatpush2.xpose.msra.mxu0 0.0
    %994 = vmatprep.subr.mxu0 0.0
    %995 = vmatpush2.xpose.msra.mxu0 0.0
    %996 = vmatprep.subr.mxu0 0.0
    %997 = vmatpush2.xpose.msra.mxu0 0.0
    %998 = vmatprep.subr.mxu0 0.0
    %999 = vmatpush2.xpose.msra.mxu0 0.0
    %1000 = vmatprep.subr.mxu0 0.0
    %1001 = vmatpush2.xpose.msra.mxu0 0.0
    %1002 = vmatprep.subr.mxu0 0.0
    %1003 = vmatpush2.xpose.msra.mxu0 0.0
    %1004 = vmatprep.subr.mxu0 0.0
    %1005 = vmatpush2.xpose.msra.mxu0 0.0
    %1006 = vmatprep.subr.mxu0 0.0
    %1007 = vmatpush2.xpose.msra.mxu0 0.0
    %1008 = vmatprep.subr.mxu0 0.0
    %1009 = vmatpush2.xpose.msra.mxu0 0.0
    %1010 = vmatprep.subr.mxu0 0.0
    %1011 = vmatpush2.xpose.msra.mxu0 0.0
    %1012 = vmatprep.subr.mxu0 0.0
    %1013 = vmatpush2.xpose.msra.mxu0 0.0
    %1014 = vmatprep.subr.mxu0 0.0
    %1015 = vmatpush2.xpose.msra.mxu0 0.0
    %1016 = vmatprep.subr.mxu0 0.0
    %1017 = vmatpush2.xpose.msra.mxu0 0.0
    %1018 = vmatprep.subr.mxu0 0.0
    %1019 = vmatpush2.xpose.msra.mxu0 0.0
    %1020 = vmatprep.mubr.f32.mxu0 0.0
    %1021 = vmatmul.mubr.f32.gmra.mxu0 %v952
    %v1022 = vpop.f32.mrf.mxu0
    %v1023 = vadd.f32 0.0, %v1022
    %v1024 = vpop.f32.mrf.mxu0
    %1025 = vdwg.mxu0
    %v1026 = vsel %vm581, %v564, 0
    %v1028 = vsel %vm581, %v578, 0
    %1030 = vmatprep.subr.mxu0 0.0
    %1031 = vmatpush1.xpose.msra.mxu0 0.0
    %1032 = vmatprep.subr.mxu0 0.0
    %1033 = vmatpush1.xpose.msra.mxu0 0.0
    %1034 = vmatprep.subr.mxu0 0.0
    %1035 = vmatpush1.xpose.msra.mxu0 0.0
    %1036 = vmatprep.subr.mxu0 0.0
    %1037 = vmatpush1.xpose.msra.mxu0 0.0
    %1038 = vmatprep.subr.mxu0 0.0
    %1039 = vmatpush1.xpose.msra.mxu0 0.0
    %1040 = vmatprep.subr.mxu0 0.0
    %1041 = vmatpush1.xpose.msra.mxu0 0.0
    %1042 = vmatprep.subr.mxu0 0.0
    %1043 = vmatpush1.xpose.msra.mxu0 0.0
    %1044 = vmatprep.subr.mxu0 0.0
    %1045 = vmatpush1.xpose.msra.mxu0 0.0
    %1046 = vmatprep.subr.mxu0 0.0
    %1047 = vmatpush1.xpose.msra.mxu0 0.0
    %1048 = vmatprep.subr.mxu0 0.0
    %1049 = vmatpush1.xpose.msra.mxu0 0.0
    %1050 = vmatprep.subr.mxu0 0.0
    %1051 = vmatpush1.xpose.msra.mxu0 0.0
    %1052 = vmatprep.subr.mxu0 0.0
    %1053 = vmatpush1.xpose.msra.mxu0 0.0
    %1054 = vmatprep.subr.mxu0 0.0
    %1055 = vmatpush1.xpose.msra.mxu0 0.0
    %1056 = vmatprep.subr.mxu0 0.0
    %1057 = vmatpush1.xpose.msra.mxu0 0.0
    %1058 = vmatprep.subr.mxu0 0.0
    %1059 = vmatpush1.xpose.msra.mxu0 0.0
    %1060 = vmatprep.subr.mxu0 0.0
    %1061 = vmatpush1.xpose.msra.mxu0 %v1028
    %1062 = vmatprep.subr.mxu0 0.0
    %1063 = vmatpush2.xpose.msra.mxu0 0.0
    %1064 = vmatprep.subr.mxu0 0.0
    %1065 = vmatpush2.xpose.msra.mxu0 0.0
    %1066 = vmatprep.subr.mxu0 0.0
    %1067 = vmatpush2.xpose.msra.mxu0 0.0
    %1068 = vmatprep.subr.mxu0 0.0
    %1069 = vmatpush2.xpose.msra.mxu0 0.0
    %1070 = vmatprep.subr.mxu0 0.0
    %1071 = vmatpush2.xpose.msra.mxu0 0.0
    %1072 = vmatprep.subr.mxu0 0.0
    %1073 = vmatpush2.xpose.msra.mxu0 0.0
    %1074 = vmatprep.subr.mxu0 0.0
    %1075 = vmatpush2.xpose.msra.mxu0 0.0
    %1076 = vmatprep.subr.mxu0 0.0
    %1077 = vmatpush2.xpose.msra.mxu0 0.0
    %1078 = vmatprep.subr.mxu0 0.0
    %1079 = vmatpush2.xpose.msra.mxu0 0.0
    %1080 = vmatprep.subr.mxu0 0.0
    %1081 = vmatpush2.xpose.msra.mxu0 0.0
    %1082 = vmatprep.subr.mxu0 0.0
    %1083 = vmatpush2.xpose.msra.mxu0 0.0
    %1084 = vmatprep.subr.mxu0 0.0
    %1085 = vmatpush2.xpose.msra.mxu0 0.0
    %1086 = vmatprep.subr.mxu0 0.0
    %1087 = vmatpush2.xpose.msra.mxu0 0.0
    %1088 = vmatprep.subr.mxu0 0.0
    %1089 = vmatpush2.xpose.msra.mxu0 0.0
    %1090 = vmatprep.subr.mxu0 0.0
    %1091 = vmatpush2.xpose.msra.mxu0 0.0
    %1092 = vmatprep.subr.mxu0 0.0
    %1093 = vmatpush2.xpose.msra.mxu0 0.0
    %1094 = vmatprep.mubr.f32.mxu0 0.0
    %1095 = vmatmul.mubr.f32.gmra.mxu0 %v1026
    %v1096 = vpop.f32.mrf.mxu0
    %v1097 = vadd.f32 0.0, %v1096
    %v1098 = vpop.f32.mrf.mxu0
    %1099 = vdwg.mxu0
    %v1100 = vsel %vm581, %v566, 0
    %v1102 = vsel %vm581, %v580, 0
    %1104 = vmatprep.subr.mxu0 0.0
    %1105 = vmatpush1.xpose.msra.mxu0 0.0
    %1106 = vmatprep.subr.mxu0 0.0
    %1107 = vmatpush1.xpose.msra.mxu0 0.0
    %1108 = vmatprep.subr.mxu0 0.0
    %1109 = vmatpush1.xpose.msra.mxu0 0.0
    %1110 = vmatprep.subr.mxu0 0.0
    %1111 = vmatpush1.xpose.msra.mxu0 0.0
    %1112 = vmatprep.subr.mxu0 0.0
    %1113 = vmatpush1.xpose.msra.mxu0 0.0
    %1114 = vmatprep.subr.mxu0 0.0
    %1115 = vmatpush1.xpose.msra.mxu0 0.0
    %1116 = vmatprep.subr.mxu0 0.0
    %1117 = vmatpush1.xpose.msra.mxu0 0.0
    %1118 = vmatprep.subr.mxu0 0.0
    %1119 = vmatpush1.xpose.msra.mxu0 0.0
    %1120 = vmatprep.subr.mxu0 0.0
    %1121 = vmatpush1.xpose.msra.mxu0 0.0
    %1122 = vmatprep.subr.mxu0 0.0
    %1123 = vmatpush1.xpose.msra.mxu0 0.0
    %1124 = vmatprep.subr.mxu0 0.0
    %1125 = vmatpush1.xpose.msra.mxu0 0.0
    %1126 = vmatprep.subr.mxu0 0.0
    %1127 = vmatpush1.xpose.msra.mxu0 0.0
    %1128 = vmatprep.subr.mxu0 0.0
    %1129 = vmatpush1.xpose.msra.mxu0 0.0
    %1130 = vmatprep.subr.mxu0 0.0
    %1131 = vmatpush1.xpose.msra.mxu0 0.0
    %1132 = vmatprep.subr.mxu0 0.0
    %1133 = vmatpush1.xpose.msra.mxu0 0.0
    %1134 = vmatprep.subr.mxu0 0.0
    %1135 = vmatpush1.xpose.msra.mxu0 %v1102
    %1136 = vmatprep.subr.mxu0 0.0
    %1137 = vmatpush2.xpose.msra.mxu0 0.0
    %1138 = vmatprep.subr.mxu0 0.0
    %1139 = vmatpush2.xpose.msra.mxu0 0.0
    %1140 = vmatprep.subr.mxu0 0.0
    %1141 = vmatpush2.xpose.msra.mxu0 0.0
    %1142 = vmatprep.subr.mxu0 0.0
    %1143 = vmatpush2.xpose.msra.mxu0 0.0
    %1144 = vmatprep.subr.mxu0 0.0
    %1145 = vmatpush2.xpose.msra.mxu0 0.0
    %1146 = vmatprep.subr.mxu0 0.0
    %1147 = vmatpush2.xpose.msra.mxu0 0.0
    %1148 = vmatprep.subr.mxu0 0.0
    %1149 = vmatpush2.xpose.msra.mxu0 0.0
    %1150 = vmatprep.subr.mxu0 0.0
    %1151 = vmatpush2.xpose.msra.mxu0 0.0
    %1152 = vmatprep.subr.mxu0 0.0
    %1153 = vmatpush2.xpose.msra.mxu0 0.0
    %1154 = vmatprep.subr.mxu0 0.0
    %1155 = vmatpush2.xpose.msra.mxu0 0.0
    %1156 = vmatprep.subr.mxu0 0.0
    %1157 = vmatpush2.xpose.msra.mxu0 0.0
    %1158 = vmatprep.subr.mxu0 0.0
    %1159 = vmatpush2.xpose.msra.mxu0 0.0
    %1160 = vmatprep.subr.mxu0 0.0
    %1161 = vmatpush2.xpose.msra.mxu0 0.0
    %1162 = vmatprep.subr.mxu0 0.0
    %1163 = vmatpush2.xpose.msra.mxu0 0.0
    %1164 = vmatprep.subr.mxu0 0.0
    %1165 = vmatpush2.xpose.msra.mxu0 0.0
    %1166 = vmatprep.subr.mxu0 0.0
    %1167 = vmatpush2.xpose.msra.mxu0 0.0
    %1168 = vmatprep.mubr.f32.mxu0 0.0
    %1169 = vmatmul.mubr.f32.gmra.mxu0 %v1100
    %v1170 = vpop.f32.mrf.mxu0
    %v1171 = vadd.f32 0.0, %v1170
    %v1172 = vpop.f32.mrf.mxu0
    %1173 = vdwg.mxu0
    %v1174 = vmul.f32 %v653, 0.35355338
    %v1175 = vmul.f32 %v727, 0.35355338
    %v1176 = vmul.f32 %v801, 0.35355338
    %v1177 = vmul.f32 %v875, 0.35355338
    %v1178 = vmul.f32 %v949, 0.35355338
    %v1179 = vmul.f32 %v1023, 0.35355338
    %v1180 = vmul.f32 %v1097, 0.35355338
    %v1181 = vmul.f32 %v1171, 0.35355338
    %v1182 = vsel %vm581, %v1174, -inf
    %1183 = vmax.xlane.f32.xlu0 %v1182
    %v1184 = vpop.xlane.xlu0 %1183
    %v1185 = vsel %vm581, %v1175, -inf
    %1186 = vmax.xlane.f32.xlu0 %v1185
    %v1187 = vpop.xlane.xlu0 %1186
    %v1188 = vsel %vm581, %v1176, -inf
    %1189 = vmax.xlane.f32.xlu0 %v1188
    %v1190 = vpop.xlane.xlu0 %1189
    %v1191 = vsel %vm581, %v1177, -inf
    %1192 = vmax.xlane.f32.xlu0 %v1191
    %v1193 = vpop.xlane.xlu0 %1192
    %v1194 = vsel %vm581, %v1178, -inf
    %1195 = vmax.xlane.f32.xlu0 %v1194
    %v1196 = vpop.xlane.xlu0 %1195
    %v1197 = vsel %vm581, %v1179, -inf
    %1198 = vmax.xlane.f32.xlu0 %v1197
    %v1199 = vpop.xlane.xlu0 %1198
    %v1200 = vsel %vm581, %v1180, -inf
    %1201 = vmax.xlane.f32.xlu0 %v1200
    %v1202 = vpop.xlane.xlu0 %1201
    %v1203 = vsel %vm581, %v1181, -inf
    %1204 = vmax.xlane.f32.xlu0 %v1203
    %v1205 = vpop.xlane.xlu0 %1204
    %v1206 = vsub.f32 %v1174, %v1184
    %v1207 = vsub.f32 %v1175, %v1187
    %v1208 = vsub.f32 %v1176, %v1190
    %v1209 = vsub.f32 %v1177, %v1193
    %v1210 = vsub.f32 %v1178, %v1196
    %v1211 = vsub.f32 %v1179, %v1199
    %v1212 = vsub.f32 %v1180, %v1202
    %v1213 = vsub.f32 %v1181, %v1205
    %v1214 = vmul.f32 %v1206, 1.442695
    %v1215 = vpow.pop %v1214
    %v1216 = vmul.f32 %v1207, 1.442695
    %v1217 = vpow.pop %v1216
    %v1218 = vmul.f32 %v1208, 1.442695
    %v1219 = vpow.pop %v1218
    %v1220 = vmul.f32 %v1209, 1.442695
    %v1221 = vpow.pop %v1220
    %v1222 = vmul.f32 %v1210, 1.442695
    %v1223 = vpow.pop %v1222
    %v1224 = vmul.f32 %v1211, 1.442695
    %v1225 = vpow.pop %v1224
    %v1226 = vmul.f32 %v1212, 1.442695
    %v1227 = vpow.pop %v1226
    %v1228 = vmul.f32 %v1213, 1.442695
    %v1229 = vpow.pop %v1228
    %v1230 = vsel %vm581, %v1215, 0.0
    %1231 = vadd.xlane.f32.xlu0 %v1230
    %v1232 = vpop.xlane.xlu0 %1231
    %v1233 = vsel %vm581, %v1217, 0.0
    %1234 = vadd.xlane.f32.xlu0 %v1233
    %v1235 = vpop.xlane.xlu0 %1234
    %v1236 = vsel %vm581, %v1219, 0.0
    %1237 = vadd.xlane.f32.xlu0 %v1236
    %v1238 = vpop.xlane.xlu0 %1237
    %v1239 = vsel %vm581, %v1221, 0.0
    %1240 = vadd.xlane.f32.xlu0 %v1239
    %v1241 = vpop.xlane.xlu0 %1240
    %v1242 = vsel %vm581, %v1223, 0.0
    %1243 = vadd.xlane.f32.xlu0 %v1242
    %v1244 = vpop.xlane.xlu0 %1243
    %v1245 = vsel %vm581, %v1225, 0.0
    %1246 = vadd.xlane.f32.xlu0 %v1245
    %v1247 = vpop.xlane.xlu0 %1246
    %v1248 = vsel %vm581, %v1227, 0.0
    %1249 = vadd.xlane.f32.xlu0 %v1248
    %v1250 = vpop.xlane.xlu0 %1249
    %v1251 = vsel %vm581, %v1229, 0.0
    %1252 = vadd.xlane.f32.xlu0 %v1251
    %v1253 = vpop.xlane.xlu0 %1252
    %1254 = vrot.lane.b32.xlu0 %v414, 96
    %v1255 = vpop.permute.xlu0 %1254
    %v1258 = vsel %vm581, %v1215, 0
    %1260 = vmatprep.subr.mxu0 0.0
    %1261 = vmatpush1.msra.mxu0 0.0
    %1262 = vmatprep.subr.mxu0 0.0
    %1263 = vmatpush1.msra.mxu0 0.0
    %1264 = vmatprep.subr.mxu0 0.0
    %1265 = vmatpush1.msra.mxu0 0.0
    %1266 = vmatprep.subr.mxu0 0.0
    %1267 = vmatpush1.msra.mxu0 0.0
    %1268 = vmatprep.subr.mxu0 0.0
    %1269 = vmatpush1.msra.mxu0 0.0
    %1270 = vmatprep.subr.mxu0 0.0
    %1271 = vmatpush1.msra.mxu0 0.0
    %1272 = vmatprep.subr.mxu0 0.0
    %1273 = vmatpush1.msra.mxu0 0.0
    %1274 = vmatprep.subr.mxu0 0.0
    %1275 = vmatpush1.msra.mxu0 0.0
    %1276 = vmatprep.subr.mxu0 0.0
    %1277 = vmatpush1.msra.mxu0 0.0
    %1278 = vmatprep.subr.mxu0 0.0
    %1279 = vmatpush1.msra.mxu0 0.0
    %1280 = vmatprep.subr.mxu0 0.0
    %1281 = vmatpush1.msra.mxu0 0.0
    %1282 = vmatprep.subr.mxu0 0.0
    %1283 = vmatpush1.msra.mxu0 0.0
    %1284 = vmatprep.subr.mxu0 0.0
    %1285 = vmatpush1.msra.mxu0 0.0
    %1286 = vmatprep.subr.mxu0 0.0
    %1287 = vmatpush1.msra.mxu0 0.0
    %1288 = vmatprep.subr.mxu0 0.0
    %1289 = vmatpush1.msra.mxu0 0.0
    %1290 = vmatprep.subr.mxu0 0.0
    %1291 = vmatpush1.msra.mxu0 %v1255
    %1292 = vmatprep.subr.mxu0 0.0
    %1293 = vmatpush2.msra.mxu0 0.0
    %1294 = vmatprep.subr.mxu0 0.0
    %1295 = vmatpush2.msra.mxu0 0.0
    %1296 = vmatprep.subr.mxu0 0.0
    %1297 = vmatpush2.msra.mxu0 0.0
    %1298 = vmatprep.subr.mxu0 0.0
    %1299 = vmatpush2.msra.mxu0 0.0
    %1300 = vmatprep.subr.mxu0 0.0
    %1301 = vmatpush2.msra.mxu0 0.0
    %1302 = vmatprep.subr.mxu0 0.0
    %1303 = vmatpush2.msra.mxu0 0.0
    %1304 = vmatprep.subr.mxu0 0.0
    %1305 = vmatpush2.msra.mxu0 0.0
    %1306 = vmatprep.subr.mxu0 0.0
    %1307 = vmatpush2.msra.mxu0 0.0
    %1308 = vmatprep.subr.mxu0 0.0
    %1309 = vmatpush2.msra.mxu0 0.0
    %1310 = vmatprep.subr.mxu0 0.0
    %1311 = vmatpush2.msra.mxu0 0.0
    %1312 = vmatprep.subr.mxu0 0.0
    %1313 = vmatpush2.msra.mxu0 0.0
    %1314 = vmatprep.subr.mxu0 0.0
    %1315 = vmatpush2.msra.mxu0 0.0
    %1316 = vmatprep.subr.mxu0 0.0
    %1317 = vmatpush2.msra.mxu0 0.0
    %1318 = vmatprep.subr.mxu0 0.0
    %1319 = vmatpush2.msra.mxu0 0.0
    %1320 = vmatprep.subr.mxu0 0.0
    %1321 = vmatpush2.msra.mxu0 0.0
    %1322 = vmatprep.subr.mxu0 0.0
    %1323 = vmatpush2.msra.mxu0 0.0
    %1324 = vmatprep.mubr.f32.mxu0 0.0
    %1325 = vmatmul.mubr.f32.gmra.mxu0 %v1258
    %v1326 = vpop.f32.mrf.mxu0
    %v1327 = vadd.f32 0.0, %v1326
    %v1328 = vpop.f32.mrf.mxu0
    %1329 = vdwg.mxu0
    %1330 = vrot.lane.b32.xlu0 %v419, 96
    %v1331 = vpop.permute.xlu0 %1330
    %v1334 = vsel %vm581, %v1217, 0
    %1336 = vmatprep.subr.mxu0 0.0
    %1337 = vmatpush1.msra.mxu0 0.0
    %1338 = vmatprep.subr.mxu0 0.0
    %1339 = vmatpush1.msra.mxu0 0.0
    %1340 = vmatprep.subr.mxu0 0.0
    %1341 = vmatpush1.msra.mxu0 0.0
    %1342 = vmatprep.subr.mxu0 0.0
    %1343 = vmatpush1.msra.mxu0 0.0
    %1344 = vmatprep.subr.mxu0 0.0
    %1345 = vmatpush1.msra.mxu0 0.0
    %1346 = vmatprep.subr.mxu0 0.0
    %1347 = vmatpush1.msra.mxu0 0.0
    %1348 = vmatprep.subr.mxu0 0.0
    %1349 = vmatpush1.msra.mxu0 0.0
    %1350 = vmatprep.subr.mxu0 0.0
    %1351 = vmatpush1.msra.mxu0 0.0
    %1352 = vmatprep.subr.mxu0 0.0
    %1353 = vmatpush1.msra.mxu0 0.0
    %1354 = vmatprep.subr.mxu0 0.0
    %1355 = vmatpush1.msra.mxu0 0.0
    %1356 = vmatprep.subr.mxu0 0.0
    %1357 = vmatpush1.msra.mxu0 0.0
    %1358 = vmatprep.subr.mxu0 0.0
    %1359 = vmatpush1.msra.mxu0 0.0
    %1360 = vmatprep.subr.mxu0 0.0
    %1361 = vmatpush1.msra.mxu0 0.0
    %1362 = vmatprep.subr.mxu0 0.0
    %1363 = vmatpush1.msra.mxu0 0.0
    %1364 = vmatprep.subr.mxu0 0.0
    %1365 = vmatpush1.msra.mxu0 0.0
    %1366 = vmatprep.subr.mxu0 0.0
    %1367 = vmatpush1.msra.mxu0 %v1331
    %1368 = vmatprep.subr.mxu0 0.0
    %1369 = vmatpush2.msra.mxu0 0.0
    %1370 = vmatprep.subr.mxu0 0.0
    %1371 = vmatpush2.msra.mxu0 0.0
    %1372 = vmatprep.subr.mxu0 0.0
    %1373 = vmatpush2.msra.mxu0 0.0
    %1374 = vmatprep.subr.mxu0 0.0
    %1375 = vmatpush2.msra.mxu0 0.0
    %1376 = vmatprep.subr.mxu0 0.0
    %1377 = vmatpush2.msra.mxu0 0.0
    %1378 = vmatprep.subr.mxu0 0.0
    %1379 = vmatpush2.msra.mxu0 0.0
    %1380 = vmatprep.subr.mxu0 0.0
    %1381 = vmatpush2.msra.mxu0 0.0
    %1382 = vmatprep.subr.mxu0 0.0
    %1383 = vmatpush2.msra.mxu0 0.0
    %1384 = vmatprep.subr.mxu0 0.0
    %1385 = vmatpush2.msra.mxu0 0.0
    %1386 = vmatprep.subr.mxu0 0.0
    %1387 = vmatpush2.msra.mxu0 0.0
    %1388 = vmatprep.subr.mxu0 0.0
    %1389 = vmatpush2.msra.mxu0 0.0
    %1390 = vmatprep.subr.mxu0 0.0
    %1391 = vmatpush2.msra.mxu0 0.0
    %1392 = vmatprep.subr.mxu0 0.0
    %1393 = vmatpush2.msra.mxu0 0.0
    %1394 = vmatprep.subr.mxu0 0.0
    %1395 = vmatpush2.msra.mxu0 0.0
    %1396 = vmatprep.subr.mxu0 0.0
    %1397 = vmatpush2.msra.mxu0 0.0
    %1398 = vmatprep.subr.mxu0 0.0
    %1399 = vmatpush2.msra.mxu0 0.0
    %1400 = vmatprep.mubr.f32.mxu0 0.0
    %1401 = vmatmul.mubr.f32.gmra.mxu0 %v1334
    %v1402 = vpop.f32.mrf.mxu0
    %v1403 = vadd.f32 0.0, %v1402
    %v1404 = vpop.f32.mrf.mxu0
    %1405 = vdwg.mxu0
    %1406 = vrot.lane.b32.xlu0 %v569, 96
    %v1407 = vpop.permute.xlu0 %1406
    %v1410 = vsel %vm581, %v1219, 0
    %1412 = vmatprep.subr.mxu0 0.0
    %1413 = vmatpush1.msra.mxu0 0.0
    %1414 = vmatprep.subr.mxu0 0.0
    %1415 = vmatpush1.msra.mxu0 0.0
    %1416 = vmatprep.subr.mxu0 0.0
    %1417 = vmatpush1.msra.mxu0 0.0
    %1418 = vmatprep.subr.mxu0 0.0
    %1419 = vmatpush1.msra.mxu0 0.0
    %1420 = vmatprep.subr.mxu0 0.0
    %1421 = vmatpush1.msra.mxu0 0.0
    %1422 = vmatprep.subr.mxu0 0.0
    %1423 = vmatpush1.msra.mxu0 0.0
    %1424 = vmatprep.subr.mxu0 0.0
    %1425 = vmatpush1.msra.mxu0 0.0
    %1426 = vmatprep.subr.mxu0 0.0
    %1427 = vmatpush1.msra.mxu0 0.0
    %1428 = vmatprep.subr.mxu0 0.0
    %1429 = vmatpush1.msra.mxu0 0.0
    %1430 = vmatprep.subr.mxu0 0.0
    %1431 = vmatpush1.msra.mxu0 0.0
    %1432 = vmatprep.subr.mxu0 0.0
    %1433 = vmatpush1.msra.mxu0 0.0
    %1434 = vmatprep.subr.mxu0 0.0
    %1435 = vmatpush1.msra.mxu0 0.0
    %1436 = vmatprep.subr.mxu0 0.0
    %1437 = vmatpush1.msra.mxu0 0.0
    %1438 = vmatprep.subr.mxu0 0.0
    %1439 = vmatpush1.msra.mxu0 0.0
    %1440 = vmatprep.subr.mxu0 0.0
    %1441 = vmatpush1.msra.mxu0 0.0
    %1442 = vmatprep.subr.mxu0 0.0
    %1443 = vmatpush1.msra.mxu0 %v1407
    %1444 = vmatprep.subr.mxu0 0.0
    %1445 = vmatpush2.msra.mxu0 0.0
    %1446 = vmatprep.subr.mxu0 0.0
    %1447 = vmatpush2.msra.mxu0 0.0
    %1448 = vmatprep.subr.mxu0 0.0
    %1449 = vmatpush2.msra.mxu0 0.0
    %1450 = vmatprep.subr.mxu0 0.0
    %1451 = vmatpush2.msra.mxu0 0.0
    %1452 = vmatprep.subr.mxu0 0.0
    %1453 = vmatpush2.msra.mxu0 0.0
    %1454 = vmatprep.subr.mxu0 0.0
    %1455 = vmatpush2.msra.mxu0 0.0
    %1456 = vmatprep.subr.mxu0 0.0
    %1457 = vmatpush2.msra.mxu0 0.0
    %1458 = vmatprep.subr.mxu0 0.0
    %1459 = vmatpush2.msra.mxu0 0.0
    %1460 = vmatprep.subr.mxu0 0.0
    %1461 = vmatpush2.msra.mxu0 0.0
    %1462 = vmatprep.subr.mxu0 0.0
    %1463 = vmatpush2.msra.mxu0 0.0
    %1464 = vmatprep.subr.mxu0 0.0
    %1465 = vmatpush2.msra.mxu0 0.0
    %1466 = vmatprep.subr.mxu0 0.0
    %1467 = vmatpush2.msra.mxu0 0.0
    %1468 = vmatprep.subr.mxu0 0.0
    %1469 = vmatpush2.msra.mxu0 0.0
    %1470 = vmatprep.subr.mxu0 0.0
    %1471 = vmatpush2.msra.mxu0 0.0
    %1472 = vmatprep.subr.mxu0 0.0
    %1473 = vmatpush2.msra.mxu0 0.0
    %1474 = vmatprep.subr.mxu0 0.0
    %1475 = vmatpush2.msra.mxu0 0.0
    %1476 = vmatprep.mubr.f32.mxu0 0.0
    %1477 = vmatmul.mubr.f32.gmra.mxu0 %v1410
    %v1478 = vpop.f32.mrf.mxu0
    %v1479 = vadd.f32 0.0, %v1478
    %v1480 = vpop.f32.mrf.mxu0
    %1481 = vdwg.mxu0
    %1482 = vrot.lane.b32.xlu0 %v572, 96
    %v1483 = vpop.permute.xlu0 %1482
    %v1486 = vsel %vm581, %v1221, 0
    %1488 = vmatprep.subr.mxu0 0.0
    %1489 = vmatpush1.msra.mxu0 0.0
    %1490 = vmatprep.subr.mxu0 0.0
    %1491 = vmatpush1.msra.mxu0 0.0
    %1492 = vmatprep.subr.mxu0 0.0
    %1493 = vmatpush1.msra.mxu0 0.0
    %1494 = vmatprep.subr.mxu0 0.0
    %1495 = vmatpush1.msra.mxu0 0.0
    %1496 = vmatprep.subr.mxu0 0.0
    %1497 = vmatpush1.msra.mxu0 0.0
    %1498 = vmatprep.subr.mxu0 0.0
    %1499 = vmatpush1.msra.mxu0 0.0
    %1500 = vmatprep.subr.mxu0 0.0
    %1501 = vmatpush1.msra.mxu0 0.0
    %1502 = vmatprep.subr.mxu0 0.0
    %1503 = vmatpush1.msra.mxu0 0.0
    %1504 = vmatprep.subr.mxu0 0.0
    %1505 = vmatpush1.msra.mxu0 0.0
    %1506 = vmatprep.subr.mxu0 0.0
    %1507 = vmatpush1.msra.mxu0 0.0
    %1508 = vmatprep.subr.mxu0 0.0
    %1509 = vmatpush1.msra.mxu0 0.0
    %1510 = vmatprep.subr.mxu0 0.0
    %1511 = vmatpush1.msra.mxu0 0.0
    %1512 = vmatprep.subr.mxu0 0.0
    %1513 = vmatpush1.msra.mxu0 0.0
    %1514 = vmatprep.subr.mxu0 0.0
    %1515 = vmatpush1.msra.mxu0 0.0
    %1516 = vmatprep.subr.mxu0 0.0
    %1517 = vmatpush1.msra.mxu0 0.0
    %1518 = vmatprep.subr.mxu0 0.0
    %1519 = vmatpush1.msra.mxu0 %v1483
    %1520 = vmatprep.subr.mxu0 0.0
    %1521 = vmatpush2.msra.mxu0 0.0
    %1522 = vmatprep.subr.mxu0 0.0
    %1523 = vmatpush2.msra.mxu0 0.0
    %1524 = vmatprep.subr.mxu0 0.0
    %1525 = vmatpush2.msra.mxu0 0.0
    %1526 = vmatprep.subr.mxu0 0.0
    %1527 = vmatpush2.msra.mxu0 0.0
    %1528 = vmatprep.subr.mxu0 0.0
    %1529 = vmatpush2.msra.mxu0 0.0
    %1530 = vmatprep.subr.mxu0 0.0
    %1531 = vmatpush2.msra.mxu0 0.0
    %1532 = vmatprep.subr.mxu0 0.0
    %1533 = vmatpush2.msra.mxu0 0.0
    %1534 = vmatprep.subr.mxu0 0.0
    %1535 = vmatpush2.msra.mxu0 0.0
    %1536 = vmatprep.subr.mxu0 0.0
    %1537 = vmatpush2.msra.mxu0 0.0
    %1538 = vmatprep.subr.mxu0 0.0
    %1539 = vmatpush2.msra.mxu0 0.0
    %1540 = vmatprep.subr.mxu0 0.0
    %1541 = vmatpush2.msra.mxu0 0.0
    %1542 = vmatprep.subr.mxu0 0.0
    %1543 = vmatpush2.msra.mxu0 0.0
    %1544 = vmatprep.subr.mxu0 0.0
    %1545 = vmatpush2.msra.mxu0 0.0
    %1546 = vmatprep.subr.mxu0 0.0
    %1547 = vmatpush2.msra.mxu0 0.0
    %1548 = vmatprep.subr.mxu0 0.0
    %1549 = vmatpush2.msra.mxu0 0.0
    %1550 = vmatprep.subr.mxu0 0.0
    %1551 = vmatpush2.msra.mxu0 0.0
    %1552 = vmatprep.mubr.f32.mxu0 0.0
    %1553 = vmatmul.mubr.f32.gmra.mxu0 %v1486
    %v1554 = vpop.f32.mrf.mxu0
    %v1555 = vadd.f32 0.0, %v1554
    %v1556 = vpop.f32.mrf.mxu0
    %1557 = vdwg.mxu0
    %1558 = vrot.lane.b32.xlu0 %v574, 96
    %v1559 = vpop.permute.xlu0 %1558
    %v1562 = vsel %vm581, %v1223, 0
    %1564 = vmatprep.subr.mxu0 0.0
    %1565 = vmatpush1.msra.mxu0 0.0
    %1566 = vmatprep.subr.mxu0 0.0
    %1567 = vmatpush1.msra.mxu0 0.0
    %1568 = vmatprep.subr.mxu0 0.0
    %1569 = vmatpush1.msra.mxu0 0.0
    %1570 = vmatprep.subr.mxu0 0.0
    %1571 = vmatpush1.msra.mxu0 0.0
    %1572 = vmatprep.subr.mxu0 0.0
    %1573 = vmatpush1.msra.mxu0 0.0
    %1574 = vmatprep.subr.mxu0 0.0
    %1575 = vmatpush1.msra.mxu0 0.0
    %1576 = vmatprep.subr.mxu0 0.0
    %1577 = vmatpush1.msra.mxu0 0.0
    %1578 = vmatprep.subr.mxu0 0.0
    %1579 = vmatpush1.msra.mxu0 0.0
    %1580 = vmatprep.subr.mxu0 0.0
    %1581 = vmatpush1.msra.mxu0 0.0
    %1582 = vmatprep.subr.mxu0 0.0
    %1583 = vmatpush1.msra.mxu0 0.0
    %1584 = vmatprep.subr.mxu0 0.0
    %1585 = vmatpush1.msra.mxu0 0.0
    %1586 = vmatprep.subr.mxu0 0.0
    %1587 = vmatpush1.msra.mxu0 0.0
    %1588 = vmatprep.subr.mxu0 0.0
    %1589 = vmatpush1.msra.mxu0 0.0
    %1590 = vmatprep.subr.mxu0 0.0
    %1591 = vmatpush1.msra.mxu0 0.0
    %1592 = vmatprep.subr.mxu0 0.0
    %1593 = vmatpush1.msra.mxu0 0.0
    %1594 = vmatprep.subr.mxu0 0.0
    %1595 = vmatpush1.msra.mxu0 %v1559
    %1596 = vmatprep.subr.mxu0 0.0
    %1597 = vmatpush2.msra.mxu0 0.0
    %1598 = vmatprep.subr.mxu0 0.0
    %1599 = vmatpush2.msra.mxu0 0.0
    %1600 = vmatprep.subr.mxu0 0.0
    %1601 = vmatpush2.msra.mxu0 0.0
    %1602 = vmatprep.subr.mxu0 0.0
    %1603 = vmatpush2.msra.mxu0 0.0
    %1604 = vmatprep.subr.mxu0 0.0
    %1605 = vmatpush2.msra.mxu0 0.0
    %1606 = vmatprep.subr.mxu0 0.0
    %1607 = vmatpush2.msra.mxu0 0.0
    %1608 = vmatprep.subr.mxu0 0.0
    %1609 = vmatpush2.msra.mxu0 0.0
    %1610 = vmatprep.subr.mxu0 0.0
    %1611 = vmatpush2.msra.mxu0 0.0
    %1612 = vmatprep.subr.mxu0 0.0
    %1613 = vmatpush2.msra.mxu0 0.0
    %1614 = vmatprep.subr.mxu0 0.0
    %1615 = vmatpush2.msra.mxu0 0.0
    %1616 = vmatprep.subr.mxu0 0.0
    %1617 = vmatpush2.msra.mxu0 0.0
    %1618 = vmatprep.subr.mxu0 0.0
    %1619 = vmatpush2.msra.mxu0 0.0
    %1620 = vmatprep.subr.mxu0 0.0
    %1621 = vmatpush2.msra.mxu0 0.0
    %1622 = vmatprep.subr.mxu0 0.0
    %1623 = vmatpush2.msra.mxu0 0.0
    %1624 = vmatprep.subr.mxu0 0.0
    %1625 = vmatpush2.msra.mxu0 0.0
    %1626 = vmatprep.subr.mxu0 0.0
    %1627 = vmatpush2.msra.mxu0 0.0
    %1628 = vmatprep.mubr.f32.mxu0 0.0
    %1629 = vmatmul.mubr.f32.gmra.mxu0 %v1562
    %v1630 = vpop.f32.mrf.mxu0
    %v1631 = vadd.f32 0.0, %v1630
    %v1632 = vpop.f32.mrf.mxu0
    %1633 = vdwg.mxu0
    %1634 = vrot.lane.b32.xlu0 %v576, 96
    %v1635 = vpop.permute.xlu0 %1634
    %v1638 = vsel %vm581, %v1225, 0
    %1640 = vmatprep.subr.mxu0 0.0
    %1641 = vmatpush1.msra.mxu0 0.0
    %1642 = vmatprep.subr.mxu0 0.0
    %1643 = vmatpush1.msra.mxu0 0.0
    %1644 = vmatprep.subr.mxu0 0.0
    %1645 = vmatpush1.msra.mxu0 0.0
    %1646 = vmatprep.subr.mxu0 0.0
    %1647 = vmatpush1.msra.mxu0 0.0
    %1648 = vmatprep.subr.mxu0 0.0
    %1649 = vmatpush1.msra.mxu0 0.0
    %1650 = vmatprep.subr.mxu0 0.0
    %1651 = vmatpush1.msra.mxu0 0.0
    %1652 = vmatprep.subr.mxu0 0.0
    %1653 = vmatpush1.msra.mxu0 0.0
    %1654 = vmatprep.subr.mxu0 0.0
    %1655 = vmatpush1.msra.mxu0 0.0
    %1656 = vmatprep.subr.mxu0 0.0
    %1657 = vmatpush1.msra.mxu0 0.0
    %1658 = vmatprep.subr.mxu0 0.0
    %1659 = vmatpush1.msra.mxu0 0.0
    %1660 = vmatprep.subr.mxu0 0.0
    %1661 = vmatpush1.msra.mxu0 0.0
    %1662 = vmatprep.subr.mxu0 0.0
    %1663 = vmatpush1.msra.mxu0 0.0
    %1664 = vmatprep.subr.mxu0 0.0
    %1665 = vmatpush1.msra.mxu0 0.0
    %1666 = vmatprep.subr.mxu0 0.0
    %1667 = vmatpush1.msra.mxu0 0.0
    %1668 = vmatprep.subr.mxu0 0.0
    %1669 = vmatpush1.msra.mxu0 0.0
    %1670 = vmatprep.subr.mxu0 0.0
    %1671 = vmatpush1.msra.mxu0 %v1635
    %1672 = vmatprep.subr.mxu0 0.0
    %1673 = vmatpush2.msra.mxu0 0.0
    %1674 = vmatprep.subr.mxu0 0.0
    %1675 = vmatpush2.msra.mxu0 0.0
    %1676 = vmatprep.subr.mxu0 0.0
    %1677 = vmatpush2.msra.mxu0 0.0
    %1678 = vmatprep.subr.mxu0 0.0
    %1679 = vmatpush2.msra.mxu0 0.0
    %1680 = vmatprep.subr.mxu0 0.0
    %1681 = vmatpush2.msra.mxu0 0.0
    %1682 = vmatprep.subr.mxu0 0.0
    %1683 = vmatpush2.msra.mxu0 0.0
    %1684 = vmatprep.subr.mxu0 0.0
    %1685 = vmatpush2.msra.mxu0 0.0
    %1686 = vmatprep.subr.mxu0 0.0
    %1687 = vmatpush2.msra.mxu0 0.0
    %1688 = vmatprep.subr.mxu0 0.0
    %1689 = vmatpush2.msra.mxu0 0.0
    %1690 = vmatprep.subr.mxu0 0.0
    %1691 = vmatpush2.msra.mxu0 0.0
    %1692 = vmatprep.subr.mxu0 0.0
    %1693 = vmatpush2.msra.mxu0 0.0
    %1694 = vmatprep.subr.mxu0 0.0
    %1695 = vmatpush2.msra.mxu0 0.0
    %1696 = vmatprep.subr.mxu0 0.0
    %1697 = vmatpush2.msra.mxu0 0.0
    %1698 = vmatprep.subr.mxu0 0.0
    %1699 = vmatpush2.msra.mxu0 0.0
    %1700 = vmatprep.subr.mxu0 0.0
    %1701 = vmatpush2.msra.mxu0 0.0
    %1702 = vmatprep.subr.mxu0 0.0
    %1703 = vmatpush2.msra.mxu0 0.0
    %1704 = vmatprep.mubr.f32.mxu0 0.0
    %1705 = vmatmul.mubr.f32.gmra.mxu0 %v1638
    %v1706 = vpop.f32.mrf.mxu0
    %v1707 = vadd.f32 0.0, %v1706
    %v1708 = vpop.f32.mrf.mxu0
    %1709 = vdwg.mxu0
    %1710 = vrot.lane.b32.xlu0 %v578, 96
    %v1711 = vpop.permute.xlu0 %1710
    %v1714 = vsel %vm581, %v1227, 0
    %1716 = vmatprep.subr.mxu0 0.0
    %1717 = vmatpush1.msra.mxu0 0.0
    %1718 = vmatprep.subr.mxu0 0.0
    %1719 = vmatpush1.msra.mxu0 0.0
    %1720 = vmatprep.subr.mxu0 0.0
    %1721 = vmatpush1.msra.mxu0 0.0
    %1722 = vmatprep.subr.mxu0 0.0
    %1723 = vmatpush1.msra.mxu0 0.0
    %1724 = vmatprep.subr.mxu0 0.0
    %1725 = vmatpush1.msra.mxu0 0.0
    %1726 = vmatprep.subr.mxu0 0.0
    %1727 = vmatpush1.msra.mxu0 0.0
    %1728 = vmatprep.subr.mxu0 0.0
    %1729 = vmatpush1.msra.mxu0 0.0
    %1730 = vmatprep.subr.mxu0 0.0
    %1731 = vmatpush1.msra.mxu0 0.0
    %1732 = vmatprep.subr.mxu0 0.0
    %1733 = vmatpush1.msra.mxu0 0.0
    %1734 = vmatprep.subr.mxu0 0.0
    %1735 = vmatpush1.msra.mxu0 0.0
    %1736 = vmatprep.subr.mxu0 0.0
    %1737 = vmatpush1.msra.mxu0 0.0
    %1738 = vmatprep.subr.mxu0 0.0
    %1739 = vmatpush1.msra.mxu0 0.0
    %1740 = vmatprep.subr.mxu0 0.0
    %1741 = vmatpush1.msra.mxu0 0.0
    %1742 = vmatprep.subr.mxu0 0.0
    %1743 = vmatpush1.msra.mxu0 0.0
    %1744 = vmatprep.subr.mxu0 0.0
    %1745 = vmatpush1.msra.mxu0 0.0
    %1746 = vmatprep.subr.mxu0 0.0
    %1747 = vmatpush1.msra.mxu0 %v1711
    %1748 = vmatprep.subr.mxu0 0.0
    %1749 = vmatpush2.msra.mxu0 0.0
    %1750 = vmatprep.subr.mxu0 0.0
    %1751 = vmatpush2.msra.mxu0 0.0
    %1752 = vmatprep.subr.mxu0 0.0
    %1753 = vmatpush2.msra.mxu0 0.0
    %1754 = vmatprep.subr.mxu0 0.0
    %1755 = vmatpush2.msra.mxu0 0.0
    %1756 = vmatprep.subr.mxu0 0.0
    %1757 = vmatpush2.msra.mxu0 0.0
    %1758 = vmatprep.subr.mxu0 0.0
    %1759 = vmatpush2.msra.mxu0 0.0
    %1760 = vmatprep.subr.mxu0 0.0
    %1761 = vmatpush2.msra.mxu0 0.0
    %1762 = vmatprep.subr.mxu0 0.0
    %1763 = vmatpush2.msra.mxu0 0.0
    %1764 = vmatprep.subr.mxu0 0.0
    %1765 = vmatpush2.msra.mxu0 0.0
    %1766 = vmatprep.subr.mxu0 0.0
    %1767 = vmatpush2.msra.mxu0 0.0
    %1768 = vmatprep.subr.mxu0 0.0
    %1769 = vmatpush2.msra.mxu0 0.0
    %1770 = vmatprep.subr.mxu0 0.0
    %1771 = vmatpush2.msra.mxu0 0.0
    %1772 = vmatprep.subr.mxu0 0.0
    %1773 = vmatpush2.msra.mxu0 0.0
    %1774 = vmatprep.subr.mxu0 0.0
    %1775 = vmatpush2.msra.mxu0 0.0
    %1776 = vmatprep.subr.mxu0 0.0
    %1777 = vmatpush2.msra.mxu0 0.0
    %1778 = vmatprep.subr.mxu0 0.0
    %1779 = vmatpush2.msra.mxu0 0.0
    %1780 = vmatprep.mubr.f32.mxu0 0.0
    %1781 = vmatmul.mubr.f32.gmra.mxu0 %v1714
    %v1782 = vpop.f32.mrf.mxu0
    %v1783 = vadd.f32 0.0, %v1782
    %v1784 = vpop.f32.mrf.mxu0
    %1785 = vdwg.mxu0
    %1786 = vrot.lane.b32.xlu0 %v580, 96
    %v1787 = vpop.permute.xlu0 %1786
    %v1790 = vsel %vm581, %v1229, 0
    %1792 = vmatprep.subr.mxu0 0.0
    %1793 = vmatpush1.msra.mxu0 0.0
    %1794 = vmatprep.subr.mxu0 0.0
    %1795 = vmatpush1.msra.mxu0 0.0
    %1796 = vmatprep.subr.mxu0 0.0
    %1797 = vmatpush1.msra.mxu0 0.0
    %1798 = vmatprep.subr.mxu0 0.0
    %1799 = vmatpush1.msra.mxu0 0.0
    %1800 = vmatprep.subr.mxu0 0.0
    %1801 = vmatpush1.msra.mxu0 0.0
    %1802 = vmatprep.subr.mxu0 0.0
    %1803 = vmatpush1.msra.mxu0 0.0
    %1804 = vmatprep.subr.mxu0 0.0
    %1805 = vmatpush1.msra.mxu0 0.0
    %1806 = vmatprep.subr.mxu0 0.0
    %1807 = vmatpush1.msra.mxu0 0.0
    %1808 = vmatprep.subr.mxu0 0.0
    %1809 = vmatpush1.msra.mxu0 0.0
    %1810 = vmatprep.subr.mxu0 0.0
    %1811 = vmatpush1.msra.mxu0 0.0
    %1812 = vmatprep.subr.mxu0 0.0
    %1813 = vmatpush1.msra.mxu0 0.0
    %1814 = vmatprep.subr.mxu0 0.0
    %1815 = vmatpush1.msra.mxu0 0.0
    %1816 = vmatprep.subr.mxu0 0.0
    %1817 = vmatpush1.msra.mxu0 0.0
    %1818 = vmatprep.subr.mxu0 0.0
    %1819 = vmatpush1.msra.mxu0 0.0
    %1820 = vmatprep.subr.mxu0 0.0
    %1821 = vmatpush1.msra.mxu0 0.0
    %1822 = vmatprep.subr.mxu0 0.0
    %1823 = vmatpush1.msra.mxu0 %v1787
    %1824 = vmatprep.subr.mxu0 0.0
    %1825 = vmatpush2.msra.mxu0 0.0
    %1826 = vmatprep.subr.mxu0 0.0
    %1827 = vmatpush2.msra.mxu0 0.0
    %1828 = vmatprep.subr.mxu0 0.0
    %1829 = vmatpush2.msra.mxu0 0.0
    %1830 = vmatprep.subr.mxu0 0.0
    %1831 = vmatpush2.msra.mxu0 0.0
    %1832 = vmatprep.subr.mxu0 0.0
    %1833 = vmatpush2.msra.mxu0 0.0
    %1834 = vmatprep.subr.mxu0 0.0
    %1835 = vmatpush2.msra.mxu0 0.0
    %1836 = vmatprep.subr.mxu0 0.0
    %1837 = vmatpush2.msra.mxu0 0.0
    %1838 = vmatprep.subr.mxu0 0.0
    %1839 = vmatpush2.msra.mxu0 0.0
    %1840 = vmatprep.subr.mxu0 0.0
    %1841 = vmatpush2.msra.mxu0 0.0
    %1842 = vmatprep.subr.mxu0 0.0
    %1843 = vmatpush2.msra.mxu0 0.0
    %1844 = vmatprep.subr.mxu0 0.0
    %1845 = vmatpush2.msra.mxu0 0.0
    %1846 = vmatprep.subr.mxu0 0.0
    %1847 = vmatpush2.msra.mxu0 0.0
    %1848 = vmatprep.subr.mxu0 0.0
    %1849 = vmatpush2.msra.mxu0 0.0
    %1850 = vmatprep.subr.mxu0 0.0
    %1851 = vmatpush2.msra.mxu0 0.0
    %1852 = vmatprep.subr.mxu0 0.0
    %1853 = vmatpush2.msra.mxu0 0.0
    %1854 = vmatprep.subr.mxu0 0.0
    %1855 = vmatpush2.msra.mxu0 0.0
    %1856 = vmatprep.mubr.f32.mxu0 0.0
    %1857 = vmatmul.mubr.f32.gmra.mxu0 %v1790
    %v1858 = vpop.f32.mrf.mxu0
    %v1859 = vadd.f32 0.0, %v1858
    %v1860 = vpop.f32.mrf.mxu0
    %1861 = vdwg.mxu0
    %v1862 = vrcp.pop %v1232
    %v1863 = vrcp.pop %v1235
    %v1864 = vrcp.pop %v1238
    %v1865 = vrcp.pop %v1241
    %v1866 = vrcp.pop %v1244
    %v1867 = vrcp.pop %v1247
    %v1868 = vrcp.pop %v1250
    %v1869 = vrcp.pop %v1253
    %v1870 = vmul.f32 %v1327, %v1862
    %v1871 = vmul.f32 %v1403, %v1863
    %v1872 = vmul.f32 %v1479, %v1864
    %v1873 = vmul.f32 %v1555, %v1865
    %v1874 = vmul.f32 %v1631, %v1866
    %v1875 = vmul.f32 %v1707, %v1867
    %v1876 = vmul.f32 %v1783, %v1868
    %v1877 = vmul.f32 %v1859, %v1869
    %1879 = vrot.lane.b32.xlu0 %v1872, 8
    %v1880 = vpop.permute.xlu0 %1879
    %1883 = vrot.lane.b32.xlu0 %v1874, 16
    %v1884 = vpop.permute.xlu0 %1883
    %1887 = vrot.lane.b32.xlu0 %v1876, 24
    %v1888 = vpop.permute.xlu0 %1887
    %v1890 = vsel %vm581, %v1870, %v1880
    %vm1891 = vcmask 130048
    %v1892 = vsel %vm1891, %v1890, %v1884
    %vm1893 = vcmask 195584
    %v1894 = vsel %vm1893, %v1892, %v1888
    %1896 = vrot.lane.b32.xlu0 %v1873, 8
    %v1897 = vpop.permute.xlu0 %1896
    %1900 = vrot.lane.b32.xlu0 %v1875, 16
    %v1901 = vpop.permute.xlu0 %1900
    %1904 = vrot.lane.b32.xlu0 %v1877, 24
    %v1905 = vpop.permute.xlu0 %1904
    %v1907 = vsel %vm581, %v1871, %v1897
    %v1908 = vsel %vm1891, %v1907, %v1901
    %v1909 = vsel %vm1893, %v1908, %v1905
    %v1910 = vld [vmem:[#allocation5 + $0xa0] sm:$0xff]
    %v1911 = vld [vmem:[#allocation5 + $0xa8] sm:$0xff]
    %v1912 = vld [vmem:[#allocation5 + $0xb0] sm:$0xff]
    %v1913 = vld [vmem:[#allocation5 + $0xb8] sm:$0xff]
    %v1914 = vlaneseq
    %v1915 = vshrl.u32 %v1914, 7
    %v1916 = vsub.s32 2, %v1915
    %v1917 = vrot.slane %v57, %v1916
    %v1919 = vsel %vm156, %v1894, 0
    %v1922 = vsel %vm156, %v1909, 0
    %1924 = vmatprep.subr.mxu0 0.0
    %1925 = vmatpush1.msra.mxu0 0.0
    %1926 = vmatprep.subr.mxu0 0.0
    %1927 = vmatpush1.msra.mxu0 0.0
    %1928 = vmatprep.subr.mxu0 0.0
    %1929 = vmatpush1.msra.mxu0 0.0
    %1930 = vmatprep.subr.mxu0 0.0
    %1931 = vmatpush1.msra.mxu0 0.0
    %1932 = vmatprep.subr.mxu0 0.0
    %1933 = vmatpush1.msra.mxu0 0.0
    %1934 = vmatprep.subr.mxu0 0.0
    %1935 = vmatpush1.msra.mxu0 0.0
    %1936 = vmatprep.subr.mxu0 0.0
    %1937 = vmatpush1.msra.mxu0 0.0
    %1938 = vmatprep.subr.mxu0 0.0
    %1939 = vmatpush1.msra.mxu0 0.0
    %1940 = vmatprep.subr.mxu0 0.0
    %1941 = vmatpush1.msra.mxu0 0.0
    %1942 = vmatprep.subr.mxu0 0.0
    %1943 = vmatpush1.msra.mxu0 0.0
    %1944 = vmatprep.subr.mxu0 0.0
    %1945 = vmatpush1.msra.mxu0 0.0
    %1946 = vmatprep.subr.mxu0 0.0
    %1947 = vmatpush1.msra.mxu0 0.0
    %1948 = vmatprep.subr.mxu0 0.0
    %1949 = vmatpush1.msra.mxu0 %v1913
    %1950 = vmatprep.subr.mxu0 0.0
    %1951 = vmatpush1.msra.mxu0 %v1912
    %1952 = vmatprep.subr.mxu0 0.0
    %1953 = vmatpush1.msra.mxu0 %v1911
    %1954 = vmatprep.subr.mxu0 0.0
    %1955 = vmatpush1.msra.mxu0 %v1910
    %1956 = vmatprep.subr.mxu0 0.0
    %1957 = vmatpush2.msra.mxu0 0.0
    %1958 = vmatprep.subr.mxu0 0.0
    %1959 = vmatpush2.msra.mxu0 0.0
    %1960 = vmatprep.subr.mxu0 0.0
    %1961 = vmatpush2.msra.mxu0 0.0
    %1962 = vmatprep.subr.mxu0 0.0
    %1963 = vmatpush2.msra.mxu0 0.0
    %1964 = vmatprep.subr.mxu0 0.0
    %1965 = vmatpush2.msra.mxu0 0.0
    %1966 = vmatprep.subr.mxu0 0.0
    %1967 = vmatpush2.msra.mxu0 0.0
    %1968 = vmatprep.subr.mxu0 0.0
    %1969 = vmatpush2.msra.mxu0 0.0
    %1970 = vmatprep.subr.mxu0 0.0
    %1971 = vmatpush2.msra.mxu0 0.0
    %1972 = vmatprep.subr.mxu0 0.0
    %1973 = vmatpush2.msra.mxu0 0.0
    %1974 = vmatprep.subr.mxu0 0.0
    %1975 = vmatpush2.msra.mxu0 0.0
    %1976 = vmatprep.subr.mxu0 0.0
    %1977 = vmatpush2.msra.mxu0 0.0
    %1978 = vmatprep.subr.mxu0 0.0
    %1979 = vmatpush2.msra.mxu0 0.0
    %1980 = vmatprep.subr.mxu0 0.0
    %1981 = vmatpush2.msra.mxu0 0.0
    %1982 = vmatprep.subr.mxu0 0.0
    %1983 = vmatpush2.msra.mxu0 0.0
    %1984 = vmatprep.subr.mxu0 0.0
    %1985 = vmatpush2.msra.mxu0 0.0
    %1986 = vmatprep.subr.mxu0 0.0
    %1987 = vmatpush2.msra.mxu0 0.0
    %1988 = vmatprep.mubr.f32.mxu0 0.0
    %1989 = vmatmul.mubr.f32.gmra.mxu0 %v1919
    %v1990 = vpop.f32.mrf.mxu0
    %v1991 = vadd.f32 %v1917, %v1990
    %v1992 = vpop.f32.mrf.mxu0
    %1993 = vmatprep.mubr.f32.mxu0 0.0
    %1994 = vmatmul.mubr.f32.gmra.mxu0 %v1922
    %v1995 = vpop.f32.mrf.mxu0
    %v1996 = vadd.f32 %v1917, %v1995
    %v1997 = vpop.f32.mrf.mxu0
    %1998 = vdwg.mxu0
    %v1999 = vadd.f32 %v331, %v1991
    %v2000 = vadd.f32 %v332, %v1996
    %v2001 = vsel %vm156, %v1999, 0.0
    %2002 = vadd.xlane.f32.xlu0 %v2001
    %v2003 = vpop.xlane.xlu0 %2002
    %v2004 = vsel %vm156, %v2000, 0.0
    %2005 = vadd.xlane.f32.xlu0 %v2004
    %v2006 = vpop.xlane.xlu0 %2005
    %v2007 = vmul.f32 %v2003, %v163
    %v2008 = vmul.f32 %v2006, %v163
    %v2009 = vmul.f32 %v1999, %v1999
    %v2010 = vmul.f32 %v2000, %v2000
    %v2011 = vsel %vm156, %v2009, 0.0
    %2012 = vadd.xlane.f32.xlu0 %v2011
    %v2013 = vpop.xlane.xlu0 %2012
    %v2014 = vsel %vm156, %v2010, 0.0
    %2015 = vadd.xlane.f32.xlu0 %v2014
    %v2016 = vpop.xlane.xlu0 %2015
    %v2017 = vmul.f32 %v2013, %v163
    %v2018 = vmul.f32 %v2016, %v163
    %v2019 = vmul.f32 %v2007, %v2007
    %v2020 = vmul.f32 %v2008, %v2008
    %v2021 = vsub.f32 %v2017, %v2019
    %v2022 = vsub.f32 %v2018, %v2020
    %v2023 = vsub.f32 %v1999, %v2007
    %v2024 = vsub.f32 %v2000, %v2008
    %v2025 = vadd.f32 %v2021, 1e-05
    %v2026 = vadd.f32 %v2022, 1e-05
    %v2027 = vrsqrt.pop %v2025
    %v2028 = vrsqrt.pop %v2026
    %v2029 = vmul.f32 %v2023, %v2027
    %v2030 = vmul.f32 %v2024, %v2028
    %v2031 = vlaneseq
    %v2032 = vshrl.u32 %v2031, 7
    %v2033 = vsub.s32 3, %v2032
    %v2034 = vrot.slane %v57, %v2033
    %v2035 = vmul.f32 %v2029, %v2034
    %v2036 = vmul.f32 %v2030, %v2034
    %v2037 = vlaneseq
    %v2038 = vshrl.u32 %v2037, 7
    %v2039 = vsub.s32 4, %v2038
    %v2040 = vrot.slane %v57, %v2039
    %v2041 = vadd.f32 %v2035, %v2040
    %v2042 = vadd.f32 %v2036, %v2040
    %v2043 = vld [vmem:[#allocation5 + $0xc0] sm:$0xff]
    %v2044 = vld [vmem:[#allocation5 + $0xc8] sm:$0xff]
    %v2045 = vld [vmem:[#allocation5 + $0xd0] sm:$0xff]
    %v2046 = vld [vmem:[#allocation5 + $0xd8] sm:$0xff]
    %v2047 = vlaneseq
    %v2048 = vshrl.u32 %v2047, 7
    %v2049 = vsub.s32 5, %v2048
    %v2050 = vrot.slane %v57, %v2049
    %v2052 = vsel %vm156, %v2041, 0
    %v2055 = vsel %vm156, %v2042, 0
    %2057 = vmatprep.subr.mxu0 0.0
    %2058 = vmatpush1.msra.mxu0 0.0
    %2059 = vmatprep.subr.mxu0 0.0
    %2060 = vmatpush1.msra.mxu0 0.0
    %2061 = vmatprep.subr.mxu0 0.0
    %2062 = vmatpush1.msra.mxu0 0.0
    %2063 = vmatprep.subr.mxu0 0.0
    %2064 = vmatpush1.msra.mxu0 0.0
    %2065 = vmatprep.subr.mxu0 0.0
    %2066 = vmatpush1.msra.mxu0 0.0
    %2067 = vmatprep.subr.mxu0 0.0
    %2068 = vmatpush1.msra.mxu0 0.0
    %2069 = vmatprep.subr.mxu0 0.0
    %2070 = vmatpush1.msra.mxu0 0.0
    %2071 = vmatprep.subr.mxu0 0.0
    %2072 = vmatpush1.msra.mxu0 0.0
    %2073 = vmatprep.subr.mxu0 0.0
    %2074 = vmatpush1.msra.mxu0 0.0
    %2075 = vmatprep.subr.mxu0 0.0
    %2076 = vmatpush1.msra.mxu0 0.0
    %2077 = vmatprep.subr.mxu0 0.0
    %2078 = vmatpush1.msra.mxu0 0.0
    %2079 = vmatprep.subr.mxu0 0.0
    %2080 = vmatpush1.msra.mxu0 0.0
    %2081 = vmatprep.subr.mxu0 0.0
    %2082 = vmatpush1.msra.mxu0 %v2046
    %2083 = vmatprep.subr.mxu0 0.0
    %2084 = vmatpush1.msra.mxu0 %v2045
    %2085 = vmatprep.subr.mxu0 0.0
    %2086 = vmatpush1.msra.mxu0 %v2044
    %2087 = vmatprep.subr.mxu0 0.0
    %2088 = vmatpush1.msra.mxu0 %v2043
    %2089 = vmatprep.subr.mxu0 0.0
    %2090 = vmatpush2.msra.mxu0 0.0
    %2091 = vmatprep.subr.mxu0 0.0
    %2092 = vmatpush2.msra.mxu0 0.0
    %2093 = vmatprep.subr.mxu0 0.0
    %2094 = vmatpush2.msra.mxu0 0.0
    %2095 = vmatprep.subr.mxu0 0.0
    %2096 = vmatpush2.msra.mxu0 0.0
    %2097 = vmatprep.subr.mxu0 0.0
    %2098 = vmatpush2.msra.mxu0 0.0
    %2099 = vmatprep.subr.mxu0 0.0
    %2100 = vmatpush2.msra.mxu0 0.0
    %2101 = vmatprep.subr.mxu0 0.0
    %2102 = vmatpush2.msra.mxu0 0.0
    %2103 = vmatprep.subr.mxu0 0.0
    %2104 = vmatpush2.msra.mxu0 0.0
    %2105 = vmatprep.subr.mxu0 0.0
    %2106 = vmatpush2.msra.mxu0 0.0
    %2107 = vmatprep.subr.mxu0 0.0
    %2108 = vmatpush2.msra.mxu0 0.0
    %2109 = vmatprep.subr.mxu0 0.0
    %2110 = vmatpush2.msra.mxu0 0.0
    %2111 = vmatprep.subr.mxu0 0.0
    %2112 = vmatpush2.msra.mxu0 0.0
    %2113 = vmatprep.subr.mxu0 0.0
    %2114 = vmatpush2.msra.mxu0 0.0
    %2115 = vmatprep.subr.mxu0 0.0
    %2116 = vmatpush2.msra.mxu0 0.0
    %2117 = vmatprep.subr.mxu0 0.0
    %2118 = vmatpush2.msra.mxu0 0.0
    %2119 = vmatprep.subr.mxu0 0.0
    %2120 = vmatpush2.msra.mxu0 0.0
    %2121 = vmatprep.mubr.f32.mxu0 0.0
    %2122 = vmatmul.mubr.f32.gmra.mxu0 %v2052
    %v2123 = vpop.f32.mrf.mxu0
    %v2124 = vadd.f32 %v2050, %v2123
    %v2125 = vpop.f32.mrf.mxu0
    %2126 = vmatprep.mubr.f32.mxu0 0.0
    %2127 = vmatmul.mubr.f32.gmra.mxu0 %v2055
    %v2128 = vpop.f32.mrf.mxu0
    %v2129 = vadd.f32 %v2050, %v2128
    %v2130 = vpop.f32.mrf.mxu0
    %2131 = vdwg.mxu0
    %v2132 = vmul.f32 %v2124, 0.5
    %v2133 = vmul.f32 %v2129, 0.5
    %v2134 = vmul.f32 %v2124, %v2124
    %v2135 = vmul.f32 %v2129, %v2129
    %v2136 = vmul.f32 %v2134, %v2124
    %v2137 = vmul.f32 %v2135, %v2129
    %v2138 = vmul.f32 %v2136, 0.044715
    %v2139 = vmul.f32 %v2137, 0.044715
    %v2140 = vadd.f32 %v2124, %v2138
    %v2141 = vadd.f32 %v2129, %v2139
    %v2142 = vmul.f32 %v2140, 0.7978846
    %v2143 = vmul.f32 %v2141, 0.7978846
    %v2144 = vtanh.pop %v2142
    %v2145 = vtanh.pop %v2143
    %v2146 = vadd.f32 %v2144, 1.0
    %v2147 = vadd.f32 %v2145, 1.0
    %v2148 = vmul.f32 %v2132, %v2146
    %v2149 = vmul.f32 %v2133, %v2147
    %v2150 = vld [vmem:[#allocation5 + $0xe0] sm:$0xff]
    %v2151 = vld [vmem:[#allocation5 + $0xe8] sm:$0xff]
    %v2152 = vld [vmem:[#allocation5 + $0xf0] sm:$0xff]
    %v2153 = vld [vmem:[#allocation5 + $0xf8] sm:$0xff]
    %v2154 = vld [vmem:[#allocation5 + $0x100] sm:$0xff]
    %v2155 = vld [vmem:[#allocation5 + $0x108] sm:$0xff]
    %v2156 = vld [vmem:[#allocation5 + $0x110] sm:$0xff]
    %v2157 = vld [vmem:[#allocation5 + $0x118] sm:$0xff]
    %v2158 = vld [vmem:[#allocation5 + $0x120] sm:$0xff]
    %v2159 = vld [vmem:[#allocation5 + $0x128] sm:$0xff]
    %v2160 = vld [vmem:[#allocation5 + $0x130] sm:$0xff]
    %v2161 = vld [vmem:[#allocation5 + $0x138] sm:$0xff]
    %v2162 = vld [vmem:[#allocation5 + $0x140] sm:$0xff]
    %v2163 = vld [vmem:[#allocation5 + $0x148] sm:$0xff]
    %v2164 = vld [vmem:[#allocation5 + $0x150] sm:$0xff]
    %v2165 = vld [vmem:[#allocation5 + $0x158] sm:$0xff]
    %v2166 = vlaneseq
    %v2167 = vshrl.u32 %v2166, 7
    %v2168 = vsub.s32 6, %v2167
    %v2169 = vrot.slane %v57, %v2168
    %2170 = vmatprep.subr.mxu0 0.0
    %2171 = vmatpush1.msra.mxu0 %v2165
    %2172 = vmatprep.subr.mxu0 0.0
    %2173 = vmatpush1.msra.mxu0 %v2164
    %2174 = vmatprep.subr.mxu0 0.0
    %2175 = vmatpush1.msra.mxu0 %v2163
    %2176 = vmatprep.subr.mxu0 0.0
    %2177 = vmatpush1.msra.mxu0 %v2162
    %2178 = vmatprep.subr.mxu0 0.0
    %2179 = vmatpush1.msra.mxu0 %v2161
    %2180 = vmatprep.subr.mxu0 0.0
    %2181 = vmatpush1.msra.mxu0 %v2160
    %2182 = vmatprep.subr.mxu0 0.0
    %2183 = vmatpush1.msra.mxu0 %v2159
    %2184 = vmatprep.subr.mxu0 0.0
    %2185 = vmatpush1.msra.mxu0 %v2158
    %2186 = vmatprep.subr.mxu0 0.0
    %2187 = vmatpush1.msra.mxu0 %v2157
    %2188 = vmatprep.subr.mxu0 0.0
    %2189 = vmatpush1.msra.mxu0 %v2156
    %2190 = vmatprep.subr.mxu0 0.0
    %2191 = vmatpush1.msra.mxu0 %v2155
    %2192 = vmatprep.subr.mxu0 0.0
    %2193 = vmatpush1.msra.mxu0 %v2154
    %2194 = vmatprep.subr.mxu0 0.0
    %2195 = vmatpush1.msra.mxu0 %v2153
    %2196 = vmatprep.subr.mxu0 0.0
    %2197 = vmatpush1.msra.mxu0 %v2152
    %2198 = vmatprep.subr.mxu0 0.0
    %2199 = vmatpush1.msra.mxu0 %v2151
    %2200 = vmatprep.subr.mxu0 0.0
    %2201 = vmatpush1.msra.mxu0 %v2150
    %2202 = vmatprep.subr.mxu0 0.0
    %2203 = vmatpush2.msra.mxu0 0.0
    %2204 = vmatprep.subr.mxu0 0.0
    %2205 = vmatpush2.msra.mxu0 0.0
    %2206 = vmatprep.subr.mxu0 0.0
    %2207 = vmatpush2.msra.mxu0 0.0
    %2208 = vmatprep.subr.mxu0 0.0
    %2209 = vmatpush2.msra.mxu0 0.0
    %2210 = vmatprep.subr.mxu0 0.0
    %2211 = vmatpush2.msra.mxu0 0.0
    %2212 = vmatprep.subr.mxu0 0.0
    %2213 = vmatpush2.msra.mxu0 0.0
    %2214 = vmatprep.subr.mxu0 0.0
    %2215 = vmatpush2.msra.mxu0 0.0
    %2216 = vmatprep.subr.mxu0 0.0
    %2217 = vmatpush2.msra.mxu0 0.0
    %2218 = vmatprep.subr.mxu0 0.0
    %2219 = vmatpush2.msra.mxu0 0.0
    %2220 = vmatprep.subr.mxu0 0.0
    %2221 = vmatpush2.msra.mxu0 0.0
    %2222 = vmatprep.subr.mxu0 0.0
    %2223 = vmatpush2.msra.mxu0 0.0
    %2224 = vmatprep.subr.mxu0 0.0
    %2225 = vmatpush2.msra.mxu0 0.0
    %2226 = vmatprep.subr.mxu0 0.0
    %2227 = vmatpush2.msra.mxu0 0.0
    %2228 = vmatprep.subr.mxu0 0.0
    %2229 = vmatpush2.msra.mxu0 0.0
    %2230 = vmatprep.subr.mxu0 0.0
    %2231 = vmatpush2.msra.mxu0 0.0
    %2232 = vmatprep.subr.mxu0 0.0
    %2233 = vmatpush2.msra.mxu0 0.0
    %2234 = vmatprep.mubr.f32.mxu0 0.0
    %2235 = vmatmul.mubr.f32.gmra.mxu0 %v2148
    %v2236 = vpop.f32.mrf.mxu0
    %v2237 = vadd.f32 %v2169, %v2236
    %v2238 = vpop.f32.mrf.mxu0
    %2239 = vmatprep.mubr.f32.mxu0 0.0
    %2240 = vmatmul.mubr.f32.gmra.mxu0 %v2149
    %v2241 = vpop.f32.mrf.mxu0
    %v2242 = vadd.f32 %v2169, %v2241
    %v2243 = vpop.f32.mrf.mxu0
    %2244 = vdwg.mxu0
    %v2245 = vadd.f32 %v1999, %v2237
    %v2246 = vadd.f32 %v2000, %v2242
    %v2247 = vsel %vm156, %v2245, 0.0
    %2248 = vadd.xlane.f32.xlu0 %v2247
    %v2249 = vpop.xlane.xlu0 %2248
    %v2250 = vsel %vm156, %v2246, 0.0
    %2251 = vadd.xlane.f32.xlu0 %v2250
    %v2252 = vpop.xlane.xlu0 %2251
    %v2253 = vmul.f32 %v2249, %v163
    %v2254 = vmul.f32 %v2252, %v163
    %v2255 = vmul.f32 %v2245, %v2245
    %v2256 = vmul.f32 %v2246, %v2246
    %v2257 = vsel %vm156, %v2255, 0.0
    %2258 = vadd.xlane.f32.xlu0 %v2257
    %v2259 = vpop.xlane.xlu0 %2258
    %v2260 = vsel %vm156, %v2256, 0.0
    %2261 = vadd.xlane.f32.xlu0 %v2260
    %v2262 = vpop.xlane.xlu0 %2261
    %v2263 = vmul.f32 %v2259, %v163
    %v2264 = vmul.f32 %v2262, %v163
    %v2265 = vmul.f32 %v2253, %v2253
    %v2266 = vmul.f32 %v2254, %v2254
    %v2267 = vsub.f32 %v2263, %v2265
    %v2268 = vsub.f32 %v2264, %v2266
    %v2269 = vsub.f32 %v2245, %v2253
    %v2270 = vsub.f32 %v2246, %v2254
    %v2271 = vadd.f32 %v2267, 1e-05
    %v2272 = vadd.f32 %v2268, 1e-05
    %v2273 = vrsqrt.pop %v2271
    %v2274 = vrsqrt.pop %v2272
    %v2275 = vmul.f32 %v2269, %v2273
    %v2276 = vmul.f32 %v2270, %v2274
    %v2277 = vlaneseq
    %v2278 = vshrl.u32 %v2277, 7
    %v2279 = vsub.s32 7, %v2278
    %v2280 = vrot.slane %v57, %v2279
    %v2281 = vmul.f32 %v2275, %v2280
    %v2282 = vmul.f32 %v2276, %v2280
    %v2283 = vlaneseq
    %v2284 = vshrl.u32 %v2283, 7
    %v2285 = vsub.s32 0, %v2284
    %v2286 = vrot.slane %v58, %v2285
    %v2287 = vadd.f32 %v2281, %v2286
    %v2288 = vadd.f32 %v2282, %v2286
    %v2289 = vld [vmem:[#allocation5 + $0x160] sm:$0xff]
    %v2290 = vld [vmem:[#allocation5 + $0x168] sm:$0xff]
    %v2291 = vld [vmem:[#allocation5 + $0x170] sm:$0xff]
    %v2292 = vld [vmem:[#allocation5 + $0x178] sm:$0xff]
    %v2293 = vlaneseq
    %v2294 = vshrl.u32 %v2293, 7
    %v2295 = vsub.s32 1, %v2294
    %v2296 = vrot.slane %v58, %v2295
    %v2298 = vsel %vm156, %v2287, 0
    %v2301 = vsel %vm156, %v2288, 0
    %2303 = vmatprep.subr.mxu0 0.0
    %2304 = vmatpush1.msra.mxu0 0.0
    %2305 = vmatprep.subr.mxu0 0.0
    %2306 = vmatpush1.msra.mxu0 0.0
    %2307 = vmatprep.subr.mxu0 0.0
    %2308 = vmatpush1.msra.mxu0 0.0
    %2309 = vmatprep.subr.mxu0 0.0
    %2310 = vmatpush1.msra.mxu0 0.0
    %2311 = vmatprep.subr.mxu0 0.0
    %2312 = vmatpush1.msra.mxu0 0.0
    %2313 = vmatprep.subr.mxu0 0.0
    %2314 = vmatpush1.msra.mxu0 0.0
    %2315 = vmatprep.subr.mxu0 0.0
    %2316 = vmatpush1.msra.mxu0 0.0
    %2317 = vmatprep.subr.mxu0 0.0
    %2318 = vmatpush1.msra.mxu0 0.0
    %2319 = vmatprep.subr.mxu0 0.0
    %2320 = vmatpush1.msra.mxu0 0.0
    %2321 = vmatprep.subr.mxu0 0.0
    %2322 = vmatpush1.msra.mxu0 0.0
    %2323 = vmatprep.subr.mxu0 0.0
    %2324 = vmatpush1.msra.mxu0 0.0
    %2325 = vmatprep.subr.mxu0 0.0
    %2326 = vmatpush1.msra.mxu0 0.0
    %2327 = vmatprep.subr.mxu0 0.0
    %2328 = vmatpush1.msra.mxu0 %v2292
    %2329 = vmatprep.subr.mxu0 0.0
    %2330 = vmatpush1.msra.mxu0 %v2291
    %2331 = vmatprep.subr.mxu0 0.0
    %2332 = vmatpush1.msra.mxu0 %v2290
    %2333 = vmatprep.subr.mxu0 0.0
    %2334 = vmatpush1.msra.mxu0 %v2289
    %2335 = vmatprep.subr.mxu0 0.0
    %2336 = vmatpush2.msra.mxu0 0.0
    %2337 = vmatprep.subr.mxu0 0.0
    %2338 = vmatpush2.msra.mxu0 0.0
    %2339 = vmatprep.subr.mxu0 0.0
    %2340 = vmatpush2.msra.mxu0 0.0
    %2341 = vmatprep.subr.mxu0 0.0
    %2342 = vmatpush2.msra.mxu0 0.0
    %2343 = vmatprep.subr.mxu0 0.0
    %2344 = vmatpush2.msra.mxu0 0.0
    %2345 = vmatprep.subr.mxu0 0.0
    %2346 = vmatpush2.msra.mxu0 0.0
    %2347 = vmatprep.subr.mxu0 0.0
    %2348 = vmatpush2.msra.mxu0 0.0
    %2349 = vmatprep.subr.mxu0 0.0
    %2350 = vmatpush2.msra.mxu0 0.0
    %2351 = vmatprep.subr.mxu0 0.0
    %2352 = vmatpush2.msra.mxu0 0.0
    %2353 = vmatprep.subr.mxu0 0.0
    %2354 = vmatpush2.msra.mxu0 0.0
    %2355 = vmatprep.subr.mxu0 0.0
    %2356 = vmatpush2.msra.mxu0 0.0
    %2357 = vmatprep.subr.mxu0 0.0
    %2358 = vmatpush2.msra.mxu0 0.0
    %2359 = vmatprep.subr.mxu0 0.0
    %2360 = vmatpush2.msra.mxu0 0.0
    %2361 = vmatprep.subr.mxu0 0.0
    %2362 = vmatpush2.msra.mxu0 0.0
    %2363 = vmatprep.subr.mxu0 0.0
    %2364 = vmatpush2.msra.mxu0 0.0
    %2365 = vmatprep.subr.mxu0 0.0
    %2366 = vmatpush2.msra.mxu0 0.0
    %2367 = vmatprep.mubr.f32.mxu0 0.0
    %2368 = vmatmul.mubr.f32.gmra.mxu0 %v2298
    %v2369 = vpop.f32.mrf.mxu0
    %v2370 = vadd.f32 %v2296, %v2369
    %v2371 = vpop.f32.mrf.mxu0
    %2372 = vmatprep.mubr.f32.mxu0 0.0
    %2373 = vmatmul.mubr.f32.gmra.mxu0 %v2301
    %v2374 = vpop.f32.mrf.mxu0
    %v2375 = vadd.f32 %v2296, %v2374
    %v2376 = vpop.f32.mrf.mxu0
    %2377 = vdwg.mxu0
    %2379 = vrot.lane.b32.xlu0 %v2370, 120
    %v2380 = vpop.permute.xlu0 %2379
    %2382 = vrot.lane.b32.xlu0 %v2375, 120
    %v2383 = vpop.permute.xlu0 %2382
    %2384 = vrot.lane.b32.xlu0 %v2370, 112
    %v2385 = vpop.permute.xlu0 %2384
    %2386 = vrot.lane.b32.xlu0 %v2375, 112
    %v2387 = vpop.permute.xlu0 %2386
    %2388 = vrot.lane.b32.xlu0 %v2370, 104
    %v2389 = vpop.permute.xlu0 %2388
    %2390 = vrot.lane.b32.xlu0 %v2375, 104
    %v2391 = vpop.permute.xlu0 %2390
    %2392 = vrot.lane.b32.xlu0 %v414, 64
    %v2393 = vpop.permute.xlu0 %2392
    %v2394 = vsel %vm581, %v2370, 0
    %v2396 = vsel %vm581, %v2393, 0
    %2398 = vmatprep.subr.mxu0 0.0
    %2399 = vmatpush1.xpose.msra.mxu0 0.0
    %2400 = vmatprep.subr.mxu0 0.0
    %2401 = vmatpush1.xpose.msra.mxu0 0.0
    %2402 = vmatprep.subr.mxu0 0.0
    %2403 = vmatpush1.xpose.msra.mxu0 0.0
    %2404 = vmatprep.subr.mxu0 0.0
    %2405 = vmatpush1.xpose.msra.mxu0 0.0
    %2406 = vmatprep.subr.mxu0 0.0
    %2407 = vmatpush1.xpose.msra.mxu0 0.0
    %2408 = vmatprep.subr.mxu0 0.0
    %2409 = vmatpush1.xpose.msra.mxu0 0.0
    %2410 = vmatprep.subr.mxu0 0.0
    %2411 = vmatpush1.xpose.msra.mxu0 0.0
    %2412 = vmatprep.subr.mxu0 0.0
    %2413 = vmatpush1.xpose.msra.mxu0 0.0
    %2414 = vmatprep.subr.mxu0 0.0
    %2415 = vmatpush1.xpose.msra.mxu0 0.0
    %2416 = vmatprep.subr.mxu0 0.0
    %2417 = vmatpush1.xpose.msra.mxu0 0.0
    %2418 = vmatprep.subr.mxu0 0.0
    %2419 = vmatpush1.xpose.msra.mxu0 0.0
    %2420 = vmatprep.subr.mxu0 0.0
    %2421 = vmatpush1.xpose.msra.mxu0 0.0
    %2422 = vmatprep.subr.mxu0 0.0
    %2423 = vmatpush1.xpose.msra.mxu0 0.0
    %2424 = vmatprep.subr.mxu0 0.0
    %2425 = vmatpush1.xpose.msra.mxu0 0.0
    %2426 = vmatprep.subr.mxu0 0.0
    %2427 = vmatpush1.xpose.msra.mxu0 0.0
    %2428 = vmatprep.subr.mxu0 0.0
    %2429 = vmatpush1.xpose.msra.mxu0 %v2396
    %2430 = vmatprep.subr.mxu0 0.0
    %2431 = vmatpush2.xpose.msra.mxu0 0.0
    %2432 = vmatprep.subr.mxu0 0.0
    %2433 = vmatpush2.xpose.msra.mxu0 0.0
    %2434 = vmatprep.subr.mxu0 0.0
    %2435 = vmatpush2.xpose.msra.mxu0 0.0
    %2436 = vmatprep.subr.mxu0 0.0
    %2437 = vmatpush2.xpose.msra.mxu0 0.0
    %2438 = vmatprep.subr.mxu0 0.0
    %2439 = vmatpush2.xpose.msra.mxu0 0.0
    %2440 = vmatprep.subr.mxu0 0.0
    %2441 = vmatpush2.xpose.msra.mxu0 0.0
    %2442 = vmatprep.subr.mxu0 0.0
    %2443 = vmatpush2.xpose.msra.mxu0 0.0
    %2444 = vmatprep.subr.mxu0 0.0
    %2445 = vmatpush2.xpose.msra.mxu0 0.0
    %2446 = vmatprep.subr.mxu0 0.0
    %2447 = vmatpush2.xpose.msra.mxu0 0.0
    %2448 = vmatprep.subr.mxu0 0.0
    %2449 = vmatpush2.xpose.msra.mxu0 0.0
    %2450 = vmatprep.subr.mxu0 0.0
    %2451 = vmatpush2.xpose.msra.mxu0 0.0
    %2452 = vmatprep.subr.mxu0 0.0
    %2453 = vmatpush2.xpose.msra.mxu0 0.0
    %2454 = vmatprep.subr.mxu0 0.0
    %2455 = vmatpush2.xpose.msra.mxu0 0.0
    %2456 = vmatprep.subr.mxu0 0.0
    %2457 = vmatpush2.xpose.msra.mxu0 0.0
    %2458 = vmatprep.subr.mxu0 0.0
    %2459 = vmatpush2.xpose.msra.mxu0 0.0
    %2460 = vmatprep.subr.mxu0 0.0
    %2461 = vmatpush2.xpose.msra.mxu0 0.0
    %2462 = vmatprep.mubr.f32.mxu0 0.0
    %2463 = vmatmul.mubr.f32.gmra.mxu0 %v2394
    %v2464 = vpop.f32.mrf.mxu0
    %v2465 = vadd.f32 0.0, %v2464
    %v2466 = vpop.f32.mrf.mxu0
    %2467 = vdwg.mxu0
    %2468 = vrot.lane.b32.xlu0 %v419, 64
    %v2469 = vpop.permute.xlu0 %2468
    %v2470 = vsel %vm581, %v2375, 0
    %v2472 = vsel %vm581, %v2469, 0
    %2474 = vmatprep.subr.mxu0 0.0
    %2475 = vmatpush1.xpose.msra.mxu0 0.0
    %2476 = vmatprep.subr.mxu0 0.0
    %2477 = vmatpush1.xpose.msra.mxu0 0.0
    %2478 = vmatprep.subr.mxu0 0.0
    %2479 = vmatpush1.xpose.msra.mxu0 0.0
    %2480 = vmatprep.subr.mxu0 0.0
    %2481 = vmatpush1.xpose.msra.mxu0 0.0
    %2482 = vmatprep.subr.mxu0 0.0
    %2483 = vmatpush1.xpose.msra.mxu0 0.0
    %2484 = vmatprep.subr.mxu0 0.0
    %2485 = vmatpush1.xpose.msra.mxu0 0.0
    %2486 = vmatprep.subr.mxu0 0.0
    %2487 = vmatpush1.xpose.msra.mxu0 0.0
    %2488 = vmatprep.subr.mxu0 0.0
    %2489 = vmatpush1.xpose.msra.mxu0 0.0
    %2490 = vmatprep.subr.mxu0 0.0
    %2491 = vmatpush1.xpose.msra.mxu0 0.0
    %2492 = vmatprep.subr.mxu0 0.0
    %2493 = vmatpush1.xpose.msra.mxu0 0.0
    %2494 = vmatprep.subr.mxu0 0.0
    %2495 = vmatpush1.xpose.msra.mxu0 0.0
    %2496 = vmatprep.subr.mxu0 0.0
    %2497 = vmatpush1.xpose.msra.mxu0 0.0
    %2498 = vmatprep.subr.mxu0 0.0
    %2499 = vmatpush1.xpose.msra.mxu0 0.0
    %2500 = vmatprep.subr.mxu0 0.0
    %2501 = vmatpush1.xpose.msra.mxu0 0.0
    %2502 = vmatprep.subr.mxu0 0.0
    %2503 = vmatpush1.xpose.msra.mxu0 0.0
    %2504 = vmatprep.subr.mxu0 0.0
    %2505 = vmatpush1.xpose.msra.mxu0 %v2472
    %2506 = vmatprep.subr.mxu0 0.0
    %2507 = vmatpush2.xpose.msra.mxu0 0.0
    %2508 = vmatprep.subr.mxu0 0.0
    %2509 = vmatpush2.xpose.msra.mxu0 0.0
    %2510 = vmatprep.subr.mxu0 0.0
    %2511 = vmatpush2.xpose.msra.mxu0 0.0
    %2512 = vmatprep.subr.mxu0 0.0
    %2513 = vmatpush2.xpose.msra.mxu0 0.0
    %2514 = vmatprep.subr.mxu0 0.0
    %2515 = vmatpush2.xpose.msra.mxu0 0.0
    %2516 = vmatprep.subr.mxu0 0.0
    %2517 = vmatpush2.xpose.msra.mxu0 0.0
    %2518 = vmatprep.subr.mxu0 0.0
    %2519 = vmatpush2.xpose.msra.mxu0 0.0
    %2520 = vmatprep.subr.mxu0 0.0
    %2521 = vmatpush2.xpose.msra.mxu0 0.0
    %2522 = vmatprep.subr.mxu0 0.0
    %2523 = vmatpush2.xpose.msra.mxu0 0.0
    %2524 = vmatprep.subr.mxu0 0.0
    %2525 = vmatpush2.xpose.msra.mxu0 0.0
    %2526 = vmatprep.subr.mxu0 0.0
    %2527 = vmatpush2.xpose.msra.mxu0 0.0
    %2528 = vmatprep.subr.mxu0 0.0
    %2529 = vmatpush2.xpose.msra.mxu0 0.0
    %2530 = vmatprep.subr.mxu0 0.0
    %2531 = vmatpush2.xpose.msra.mxu0 0.0
    %2532 = vmatprep.subr.mxu0 0.0
    %2533 = vmatpush2.xpose.msra.mxu0 0.0
    %2534 = vmatprep.subr.mxu0 0.0
    %2535 = vmatpush2.xpose.msra.mxu0 0.0
    %2536 = vmatprep.subr.mxu0 0.0
    %2537 = vmatpush2.xpose.msra.mxu0 0.0
    %2538 = vmatprep.mubr.f32.mxu0 0.0
    %2539 = vmatmul.mubr.f32.gmra.mxu0 %v2470
    %v2540 = vpop.f32.mrf.mxu0
    %v2541 = vadd.f32 0.0, %v2540
    %v2542 = vpop.f32.mrf.mxu0
    %2543 = vdwg.mxu0
    %2544 = vrot.lane.b32.xlu0 %v569, 64
    %v2545 = vpop.permute.xlu0 %2544
    %v2546 = vsel %vm581, %v2380, 0
    %v2548 = vsel %vm581, %v2545, 0
    %2550 = vmatprep.subr.mxu0 0.0
    %2551 = vmatpush1.xpose.msra.mxu0 0.0
    %2552 = vmatprep.subr.mxu0 0.0
    %2553 = vmatpush1.xpose.msra.mxu0 0.0
    %2554 = vmatprep.subr.mxu0 0.0
    %2555 = vmatpush1.xpose.msra.mxu0 0.0
    %2556 = vmatprep.subr.mxu0 0.0
    %2557 = vmatpush1.xpose.msra.mxu0 0.0
    %2558 = vmatprep.subr.mxu0 0.0
    %2559 = vmatpush1.xpose.msra.mxu0 0.0
    %2560 = vmatprep.subr.mxu0 0.0
    %2561 = vmatpush1.xpose.msra.mxu0 0.0
    %2562 = vmatprep.subr.mxu0 0.0
    %2563 = vmatpush1.xpose.msra.mxu0 0.0
    %2564 = vmatprep.subr.mxu0 0.0
    %2565 = vmatpush1.xpose.msra.mxu0 0.0
    %2566 = vmatprep.subr.mxu0 0.0
    %2567 = vmatpush1.xpose.msra.mxu0 0.0
    %2568 = vmatprep.subr.mxu0 0.0
    %2569 = vmatpush1.xpose.msra.mxu0 0.0
    %2570 = vmatprep.subr.mxu0 0.0
    %2571 = vmatpush1.xpose.msra.mxu0 0.0
    %2572 = vmatprep.subr.mxu0 0.0
    %2573 = vmatpush1.xpose.msra.mxu0 0.0
    %2574 = vmatprep.subr.mxu0 0.0
    %2575 = vmatpush1.xpose.msra.mxu0 0.0
    %2576 = vmatprep.subr.mxu0 0.0
    %2577 = vmatpush1.xpose.msra.mxu0 0.0
    %2578 = vmatprep.subr.mxu0 0.0
    %2579 = vmatpush1.xpose.msra.mxu0 0.0
    %2580 = vmatprep.subr.mxu0 0.0
    %2581 = vmatpush1.xpose.msra.mxu0 %v2548
    %2582 = vmatprep.subr.mxu0 0.0
    %2583 = vmatpush2.xpose.msra.mxu0 0.0
    %2584 = vmatprep.subr.mxu0 0.0
    %2585 = vmatpush2.xpose.msra.mxu0 0.0
    %2586 = vmatprep.subr.mxu0 0.0
    %2587 = vmatpush2.xpose.msra.mxu0 0.0
    %2588 = vmatprep.subr.mxu0 0.0
    %2589 = vmatpush2.xpose.msra.mxu0 0.0
    %2590 = vmatprep.subr.mxu0 0.0
    %2591 = vmatpush2.xpose.msra.mxu0 0.0
    %2592 = vmatprep.subr.mxu0 0.0
    %2593 = vmatpush2.xpose.msra.mxu0 0.0
    %2594 = vmatprep.subr.mxu0 0.0
    %2595 = vmatpush2.xpose.msra.mxu0 0.0
    %2596 = vmatprep.subr.mxu0 0.0
    %2597 = vmatpush2.xpose.msra.mxu0 0.0
    %2598 = vmatprep.subr.mxu0 0.0
    %2599 = vmatpush2.xpose.msra.mxu0 0.0
    %2600 = vmatprep.subr.mxu0 0.0
    %2601 = vmatpush2.xpose.msra.mxu0 0.0
    %2602 = vmatprep.subr.mxu0 0.0
    %2603 = vmatpush2.xpose.msra.mxu0 0.0
    %2604 = vmatprep.subr.mxu0 0.0
    %2605 = vmatpush2.xpose.msra.mxu0 0.0
    %2606 = vmatprep.subr.mxu0 0.0
    %2607 = vmatpush2.xpose.msra.mxu0 0.0
    %2608 = vmatprep.subr.mxu0 0.0
    %2609 = vmatpush2.xpose.msra.mxu0 0.0
    %2610 = vmatprep.subr.mxu0 0.0
    %2611 = vmatpush2.xpose.msra.mxu0 0.0
    %2612 = vmatprep.subr.mxu0 0.0
    %2613 = vmatpush2.xpose.msra.mxu0 0.0
    %2614 = vmatprep.mubr.f32.mxu0 0.0
    %2615 = vmatmul.mubr.f32.gmra.mxu0 %v2546
    %v2616 = vpop.f32.mrf.mxu0
    %v2617 = vadd.f32 0.0, %v2616
    %v2618 = vpop.f32.mrf.mxu0
    %2619 = vdwg.mxu0
    %2620 = vrot.lane.b32.xlu0 %v572, 64
    %v2621 = vpop.permute.xlu0 %2620
    %v2622 = vsel %vm581, %v2383, 0
    %v2624 = vsel %vm581, %v2621, 0
    %2626 = vmatprep.subr.mxu0 0.0
    %2627 = vmatpush1.xpose.msra.mxu0 0.0
    %2628 = vmatprep.subr.mxu0 0.0
    %2629 = vmatpush1.xpose.msra.mxu0 0.0
    %2630 = vmatprep.subr.mxu0 0.0
    %2631 = vmatpush1.xpose.msra.mxu0 0.0
    %2632 = vmatprep.subr.mxu0 0.0
    %2633 = vmatpush1.xpose.msra.mxu0 0.0
    %2634 = vmatprep.subr.mxu0 0.0
    %2635 = vmatpush1.xpose.msra.mxu0 0.0
    %2636 = vmatprep.subr.mxu0 0.0
    %2637 = vmatpush1.xpose.msra.mxu0 0.0
    %2638 = vmatprep.subr.mxu0 0.0
    %2639 = vmatpush1.xpose.msra.mxu0 0.0
    %2640 = vmatprep.subr.mxu0 0.0
    %2641 = vmatpush1.xpose.msra.mxu0 0.0
    %2642 = vmatprep.subr.mxu0 0.0
    %2643 = vmatpush1.xpose.msra.mxu0 0.0
    %2644 = vmatprep.subr.mxu0 0.0
    %2645 = vmatpush1.xpose.msra.mxu0 0.0
    %2646 = vmatprep.subr.mxu0 0.0
    %2647 = vmatpush1.xpose.msra.mxu0 0.0
    %2648 = vmatprep.subr.mxu0 0.0
    %2649 = vmatpush1.xpose.msra.mxu0 0.0
    %2650 = vmatprep.subr.mxu0 0.0
    %2651 = vmatpush1.xpose.msra.mxu0 0.0
    %2652 = vmatprep.subr.mxu0 0.0
    %2653 = vmatpush1.xpose.msra.mxu0 0.0
    %2654 = vmatprep.subr.mxu0 0.0
    %2655 = vmatpush1.xpose.msra.mxu0 0.0
    %2656 = vmatprep.subr.mxu0 0.0
    %2657 = vmatpush1.xpose.msra.mxu0 %v2624
    %2658 = vmatprep.subr.mxu0 0.0
    %2659 = vmatpush2.xpose.msra.mxu0 0.0
    %2660 = vmatprep.subr.mxu0 0.0
    %2661 = vmatpush2.xpose.msra.mxu0 0.0
    %2662 = vmatprep.subr.mxu0 0.0
    %2663 = vmatpush2.xpose.msra.mxu0 0.0
    %2664 = vmatprep.subr.mxu0 0.0
    %2665 = vmatpush2.xpose.msra.mxu0 0.0
    %2666 = vmatprep.subr.mxu0 0.0
    %2667 = vmatpush2.xpose.msra.mxu0 0.0
    %2668 = vmatprep.subr.mxu0 0.0
    %2669 = vmatpush2.xpose.msra.mxu0 0.0
    %2670 = vmatprep.subr.mxu0 0.0
    %2671 = vmatpush2.xpose.msra.mxu0 0.0
    %2672 = vmatprep.subr.mxu0 0.0
    %2673 = vmatpush2.xpose.msra.mxu0 0.0
    %2674 = vmatprep.subr.mxu0 0.0
    %2675 = vmatpush2.xpose.msra.mxu0 0.0
    %2676 = vmatprep.subr.mxu0 0.0
    %2677 = vmatpush2.xpose.msra.mxu0 0.0
    %2678 = vmatprep.subr.mxu0 0.0
    %2679 = vmatpush2.xpose.msra.mxu0 0.0
    %2680 = vmatprep.subr.mxu0 0.0
    %2681 = vmatpush2.xpose.msra.mxu0 0.0
    %2682 = vmatprep.subr.mxu0 0.0
    %2683 = vmatpush2.xpose.msra.mxu0 0.0
    %2684 = vmatprep.subr.mxu0 0.0
    %2685 = vmatpush2.xpose.msra.mxu0 0.0
    %2686 = vmatprep.subr.mxu0 0.0
    %2687 = vmatpush2.xpose.msra.mxu0 0.0
    %2688 = vmatprep.subr.mxu0 0.0
    %2689 = vmatpush2.xpose.msra.mxu0 0.0
    %2690 = vmatprep.mubr.f32.mxu0 0.0
    %2691 = vmatmul.mubr.f32.gmra.mxu0 %v2622
    %v2692 = vpop.f32.mrf.mxu0
    %v2693 = vadd.f32 0.0, %v2692
    %v2694 = vpop.f32.mrf.mxu0
    %2695 = vdwg.mxu0
    %2696 = vrot.lane.b32.xlu0 %v574, 64
    %v2697 = vpop.permute.xlu0 %2696
    %v2698 = vsel %vm581, %v2385, 0
    %v2700 = vsel %vm581, %v2697, 0
    %2702 = vmatprep.subr.mxu0 0.0
    %2703 = vmatpush1.xpose.msra.mxu0 0.0
    %2704 = vmatprep.subr.mxu0 0.0
    %2705 = vmatpush1.xpose.msra.mxu0 0.0
    %2706 = vmatprep.subr.mxu0 0.0
    %2707 = vmatpush1.xpose.msra.mxu0 0.0
    %2708 = vmatprep.subr.mxu0 0.0
    %2709 = vmatpush1.xpose.msra.mxu0 0.0
    %2710 = vmatprep.subr.mxu0 0.0
    %2711 = vmatpush1.xpose.msra.mxu0 0.0
    %2712 = vmatprep.subr.mxu0 0.0
    %2713 = vmatpush1.xpose.msra.mxu0 0.0
    %2714 = vmatprep.subr.mxu0 0.0
    %2715 = vmatpush1.xpose.msra.mxu0 0.0
    %2716 = vmatprep.subr.mxu0 0.0
    %2717 = vmatpush1.xpose.msra.mxu0 0.0
    %2718 = vmatprep.subr.mxu0 0.0
    %2719 = vmatpush1.xpose.msra.mxu0 0.0
    %2720 = vmatprep.subr.mxu0 0.0
    %2721 = vmatpush1.xpose.msra.mxu0 0.0
    %2722 = vmatprep.subr.mxu0 0.0
    %2723 = vmatpush1.xpose.msra.mxu0 0.0
    %2724 = vmatprep.subr.mxu0 0.0
    %2725 = vmatpush1.xpose.msra.mxu0 0.0
    %2726 = vmatprep.subr.mxu0 0.0
    %2727 = vmatpush1.xpose.msra.mxu0 0.0
    %2728 = vmatprep.subr.mxu0 0.0
    %2729 = vmatpush1.xpose.msra.mxu0 0.0
    %2730 = vmatprep.subr.mxu0 0.0
    %2731 = vmatpush1.xpose.msra.mxu0 0.0
    %2732 = vmatprep.subr.mxu0 0.0
    %2733 = vmatpush1.xpose.msra.mxu0 %v2700
    %2734 = vmatprep.subr.mxu0 0.0
    %2735 = vmatpush2.xpose.msra.mxu0 0.0
    %2736 = vmatprep.subr.mxu0 0.0
    %2737 = vmatpush2.xpose.msra.mxu0 0.0
    %2738 = vmatprep.subr.mxu0 0.0
    %2739 = vmatpush2.xpose.msra.mxu0 0.0
    %2740 = vmatprep.subr.mxu0 0.0
    %2741 = vmatpush2.xpose.msra.mxu0 0.0
    %2742 = vmatprep.subr.mxu0 0.0
    %2743 = vmatpush2.xpose.msra.mxu0 0.0
    %2744 = vmatprep.subr.mxu0 0.0
    %2745 = vmatpush2.xpose.msra.mxu0 0.0
    %2746 = vmatprep.subr.mxu0 0.0
    %2747 = vmatpush2.xpose.msra.mxu0 0.0
    %2748 = vmatprep.subr.mxu0 0.0
    %2749 = vmatpush2.xpose.msra.mxu0 0.0
    %2750 = vmatprep.subr.mxu0 0.0
    %2751 = vmatpush2.xpose.msra.mxu0 0.0
    %2752 = vmatprep.subr.mxu0 0.0
    %2753 = vmatpush2.xpose.msra.mxu0 0.0
    %2754 = vmatprep.subr.mxu0 0.0
    %2755 = vmatpush2.xpose.msra.mxu0 0.0
    %2756 = vmatprep.subr.mxu0 0.0
    %2757 = vmatpush2.xpose.msra.mxu0 0.0
    %2758 = vmatprep.subr.mxu0 0.0
    %2759 = vmatpush2.xpose.msra.mxu0 0.0
    %2760 = vmatprep.subr.mxu0 0.0
    %2761 = vmatpush2.xpose.msra.mxu0 0.0
    %2762 = vmatprep.subr.mxu0 0.0
    %2763 = vmatpush2.xpose.msra.mxu0 0.0
    %2764 = vmatprep.subr.mxu0 0.0
    %2765 = vmatpush2.xpose.msra.mxu0 0.0
    %2766 = vmatprep.mubr.f32.mxu0 0.0
    %2767 = vmatmul.mubr.f32.gmra.mxu0 %v2698
    %v2768 = vpop.f32.mrf.mxu0
    %v2769 = vadd.f32 0.0, %v2768
    %v2770 = vpop.f32.mrf.mxu0
    %2771 = vdwg.mxu0
    %2772 = vrot.lane.b32.xlu0 %v576, 64
    %v2773 = vpop.permute.xlu0 %2772
    %v2774 = vsel %vm581, %v2387, 0
    %v2776 = vsel %vm581, %v2773, 0
    %2778 = vmatprep.subr.mxu0 0.0
    %2779 = vmatpush1.xpose.msra.mxu0 0.0
    %2780 = vmatprep.subr.mxu0 0.0
    %2781 = vmatpush1.xpose.msra.mxu0 0.0
    %2782 = vmatprep.subr.mxu0 0.0
    %2783 = vmatpush1.xpose.msra.mxu0 0.0
    %2784 = vmatprep.subr.mxu0 0.0
    %2785 = vmatpush1.xpose.msra.mxu0 0.0
    %2786 = vmatprep.subr.mxu0 0.0
    %2787 = vmatpush1.xpose.msra.mxu0 0.0
    %2788 = vmatprep.subr.mxu0 0.0
    %2789 = vmatpush1.xpose.msra.mxu0 0.0
    %2790 = vmatprep.subr.mxu0 0.0
    %2791 = vmatpush1.xpose.msra.mxu0 0.0
    %2792 = vmatprep.subr.mxu0 0.0
    %2793 = vmatpush1.xpose.msra.mxu0 0.0
    %2794 = vmatprep.subr.mxu0 0.0
    %2795 = vmatpush1.xpose.msra.mxu0 0.0
    %2796 = vmatprep.subr.mxu0 0.0
    %2797 = vmatpush1.xpose.msra.mxu0 0.0
    %2798 = vmatprep.subr.mxu0 0.0
    %2799 = vmatpush1.xpose.msra.mxu0 0.0
    %2800 = vmatprep.subr.mxu0 0.0
    %2801 = vmatpush1.xpose.msra.mxu0 0.0
    %2802 = vmatprep.subr.mxu0 0.0
    %2803 = vmatpush1.xpose.msra.mxu0 0.0
    %2804 = vmatprep.subr.mxu0 0.0
    %2805 = vmatpush1.xpose.msra.mxu0 0.0
    %2806 = vmatprep.subr.mxu0 0.0
    %2807 = vmatpush1.xpose.msra.mxu0 0.0
    %2808 = vmatprep.subr.mxu0 0.0
    %2809 = vmatpush1.xpose.msra.mxu0 %v2776
    %2810 = vmatprep.subr.mxu0 0.0
    %2811 = vmatpush2.xpose.msra.mxu0 0.0
    %2812 = vmatprep.subr.mxu0 0.0
    %2813 = vmatpush2.xpose.msra.mxu0 0.0
    %2814 = vmatprep.subr.mxu0 0.0
    %2815 = vmatpush2.xpose.msra.mxu0 0.0
    %2816 = vmatprep.subr.mxu0 0.0
    %2817 = vmatpush2.xpose.msra.mxu0 0.0
    %2818 = vmatprep.subr.mxu0 0.0
    %2819 = vmatpush2.xpose.msra.mxu0 0.0
    %2820 = vmatprep.subr.mxu0 0.0
    %2821 = vmatpush2.xpose.msra.mxu0 0.0
    %2822 = vmatprep.subr.mxu0 0.0
    %2823 = vmatpush2.xpose.msra.mxu0 0.0
    %2824 = vmatprep.subr.mxu0 0.0
    %2825 = vmatpush2.xpose.msra.mxu0 0.0
    %2826 = vmatprep.subr.mxu0 0.0
    %2827 = vmatpush2.xpose.msra.mxu0 0.0
    %2828 = vmatprep.subr.mxu0 0.0
    %2829 = vmatpush2.xpose.msra.mxu0 0.0
    %2830 = vmatprep.subr.mxu0 0.0
    %2831 = vmatpush2.xpose.msra.mxu0 0.0
    %2832 = vmatprep.subr.mxu0 0.0
    %2833 = vmatpush2.xpose.msra.mxu0 0.0
    %2834 = vmatprep.subr.mxu0 0.0
    %2835 = vmatpush2.xpose.msra.mxu0 0.0
    %2836 = vmatprep.subr.mxu0 0.0
    %2837 = vmatpush2.xpose.msra.mxu0 0.0
    %2838 = vmatprep.subr.mxu0 0.0
    %2839 = vmatpush2.xpose.msra.mxu0 0.0
    %2840 = vmatprep.subr.mxu0 0.0
    %2841 = vmatpush2.xpose.msra.mxu0 0.0
    %2842 = vmatprep.mubr.f32.mxu0 0.0
    %2843 = vmatmul.mubr.f32.gmra.mxu0 %v2774
    %v2844 = vpop.f32.mrf.mxu0
    %v2845 = vadd.f32 0.0, %v2844
    %v2846 = vpop.f32.mrf.mxu0
    %2847 = vdwg.mxu0
    %2848 = vrot.lane.b32.xlu0 %v578, 64
    %v2849 = vpop.permute.xlu0 %2848
    %v2850 = vsel %vm581, %v2389, 0
    %v2852 = vsel %vm581, %v2849, 0
    %2854 = vmatprep.subr.mxu0 0.0
    %2855 = vmatpush1.xpose.msra.mxu0 0.0
    %2856 = vmatprep.subr.mxu0 0.0
    %2857 = vmatpush1.xpose.msra.mxu0 0.0
    %2858 = vmatprep.subr.mxu0 0.0
    %2859 = vmatpush1.xpose.msra.mxu0 0.0
    %2860 = vmatprep.subr.mxu0 0.0
    %2861 = vmatpush1.xpose.msra.mxu0 0.0
    %2862 = vmatprep.subr.mxu0 0.0
    %2863 = vmatpush1.xpose.msra.mxu0 0.0
    %2864 = vmatprep.subr.mxu0 0.0
    %2865 = vmatpush1.xpose.msra.mxu0 0.0
    %2866 = vmatprep.subr.mxu0 0.0
    %2867 = vmatpush1.xpose.msra.mxu0 0.0
    %2868 = vmatprep.subr.mxu0 0.0
    %2869 = vmatpush1.xpose.msra.mxu0 0.0
    %2870 = vmatprep.subr.mxu0 0.0
    %2871 = vmatpush1.xpose.msra.mxu0 0.0
    %2872 = vmatprep.subr.mxu0 0.0
    %2873 = vmatpush1.xpose.msra.mxu0 0.0
    %2874 = vmatprep.subr.mxu0 0.0
    %2875 = vmatpush1.xpose.msra.mxu0 0.0
    %2876 = vmatprep.subr.mxu0 0.0
    %2877 = vmatpush1.xpose.msra.mxu0 0.0
    %2878 = vmatprep.subr.mxu0 0.0
    %2879 = vmatpush1.xpose.msra.mxu0 0.0
    %2880 = vmatprep.subr.mxu0 0.0
    %2881 = vmatpush1.xpose.msra.mxu0 0.0
    %2882 = vmatprep.subr.mxu0 0.0
    %2883 = vmatpush1.xpose.msra.mxu0 0.0
    %2884 = vmatprep.subr.mxu0 0.0
    %2885 = vmatpush1.xpose.msra.mxu0 %v2852
    %2886 = vmatprep.subr.mxu0 0.0
    %2887 = vmatpush2.xpose.msra.mxu0 0.0
    %2888 = vmatprep.subr.mxu0 0.0
    %2889 = vmatpush2.xpose.msra.mxu0 0.0
    %2890 = vmatprep.subr.mxu0 0.0
    %2891 = vmatpush2.xpose.msra.mxu0 0.0
    %2892 = vmatprep.subr.mxu0 0.0
    %2893 = vmatpush2.xpose.msra.mxu0 0.0
    %2894 = vmatprep.subr.mxu0 0.0
    %2895 = vmatpush2.xpose.msra.mxu0 0.0
    %2896 = vmatprep.subr.mxu0 0.0
    %2897 = vmatpush2.xpose.msra.mxu0 0.0
    %2898 = vmatprep.subr.mxu0 0.0
    %2899 = vmatpush2.xpose.msra.mxu0 0.0
    %2900 = vmatprep.subr.mxu0 0.0
    %2901 = vmatpush2.xpose.msra.mxu0 0.0
    %2902 = vmatprep.subr.mxu0 0.0
    %2903 = vmatpush2.xpose.msra.mxu0 0.0
    %2904 = vmatprep.subr.mxu0 0.0
    %2905 = vmatpush2.xpose.msra.mxu0 0.0
    %2906 = vmatprep.subr.mxu0 0.0
    %2907 = vmatpush2.xpose.msra.mxu0 0.0
    %2908 = vmatprep.subr.mxu0 0.0
    %2909 = vmatpush2.xpose.msra.mxu0 0.0
    %2910 = vmatprep.subr.mxu0 0.0
    %2911 = vmatpush2.xpose.msra.mxu0 0.0
    %2912 = vmatprep.subr.mxu0 0.0
    %2913 = vmatpush2.xpose.msra.mxu0 0.0
    %2914 = vmatprep.subr.mxu0 0.0
    %2915 = vmatpush2.xpose.msra.mxu0 0.0
    %2916 = vmatprep.subr.mxu0 0.0
    %2917 = vmatpush2.xpose.msra.mxu0 0.0
    %2918 = vmatprep.mubr.f32.mxu0 0.0
    %2919 = vmatmul.mubr.f32.gmra.mxu0 %v2850
    %v2920 = vpop.f32.mrf.mxu0
    %v2921 = vadd.f32 0.0, %v2920
    %v2922 = vpop.f32.mrf.mxu0
    %2923 = vdwg.mxu0
    %2924 = vrot.lane.b32.xlu0 %v580, 64
    %v2925 = vpop.permute.xlu0 %2924
    %v2926 = vsel %vm581, %v2391, 0
    %v2928 = vsel %vm581, %v2925, 0
    %2930 = vmatprep.subr.mxu0 0.0
    %2931 = vmatpush1.xpose.msra.mxu0 0.0
    %2932 = vmatprep.subr.mxu0 0.0
    %2933 = vmatpush1.xpose.msra.mxu0 0.0
    %2934 = vmatprep.subr.mxu0 0.0
    %2935 = vmatpush1.xpose.msra.mxu0 0.0
    %2936 = vmatprep.subr.mxu0 0.0
    %2937 = vmatpush1.xpose.msra.mxu0 0.0
    %2938 = vmatprep.subr.mxu0 0.0
    %2939 = vmatpush1.xpose.msra.mxu0 0.0
    %2940 = vmatprep.subr.mxu0 0.0
    %2941 = vmatpush1.xpose.msra.mxu0 0.0
    %2942 = vmatprep.subr.mxu0 0.0
    %2943 = vmatpush1.xpose.msra.mxu0 0.0
    %2944 = vmatprep.subr.mxu0 0.0
    %2945 = vmatpush1.xpose.msra.mxu0 0.0
    %2946 = vmatprep.subr.mxu0 0.0
    %2947 = vmatpush1.xpose.msra.mxu0 0.0
    %2948 = vmatprep.subr.mxu0 0.0
    %2949 = vmatpush1.xpose.msra.mxu0 0.0
    %2950 = vmatprep.subr.mxu0 0.0
    %2951 = vmatpush1.xpose.msra.mxu0 0.0
    %2952 = vmatprep.subr.mxu0 0.0
    %2953 = vmatpush1.xpose.msra.mxu0 0.0
    %2954 = vmatprep.subr.mxu0 0.0
    %2955 = vmatpush1.xpose.msra.mxu0 0.0
    %2956 = vmatprep.subr.mxu0 0.0
    %2957 = vmatpush1.xpose.msra.mxu0 0.0
    %2958 = vmatprep.subr.mxu0 0.0
    %2959 = vmatpush1.xpose.msra.mxu0 0.0
    %2960 = vmatprep.subr.mxu0 0.0
    %2961 = vmatpush1.xpose.msra.mxu0 %v2928
    %2962 = vmatprep.subr.mxu0 0.0
    %2963 = vmatpush2.xpose.msra.mxu0 0.0
    %2964 = vmatprep.subr.mxu0 0.0
    %2965 = vmatpush2.xpose.msra.mxu0 0.0
    %2966 = vmatprep.subr.mxu0 0.0
    %2967 = vmatpush2.xpose.msra.mxu0 0.0
    %2968 = vmatprep.subr.mxu0 0.0
    %2969 = vmatpush2.xpose.msra.mxu0 0.0
    %2970 = vmatprep.subr.mxu0 0.0
    %2971 = vmatpush2.xpose.msra.mxu0 0.0
    %2972 = vmatprep.subr.mxu0 0.0
    %2973 = vmatpush2.xpose.msra.mxu0 0.0
    %2974 = vmatprep.subr.mxu0 0.0
    %2975 = vmatpush2.xpose.msra.mxu0 0.0
    %2976 = vmatprep.subr.mxu0 0.0
    %2977 = vmatpush2.xpose.msra.mxu0 0.0
    %2978 = vmatprep.subr.mxu0 0.0
    %2979 = vmatpush2.xpose.msra.mxu0 0.0
    %2980 = vmatprep.subr.mxu0 0.0
    %2981 = vmatpush2.xpose.msra.mxu0 0.0
    %2982 = vmatprep.subr.mxu0 0.0
    %2983 = vmatpush2.xpose.msra.mxu0 0.0
    %2984 = vmatprep.subr.mxu0 0.0
    %2985 = vmatpush2.xpose.msra.mxu0 0.0
    %2986 = vmatprep.subr.mxu0 0.0
    %2987 = vmatpush2.xpose.msra.mxu0 0.0
    %2988 = vmatprep.subr.mxu0 0.0
    %2989 = vmatpush2.xpose.msra.mxu0 0.0
    %2990 = vmatprep.subr.mxu0 0.0
    %2991 = vmatpush2.xpose.msra.mxu0 0.0
    %2992 = vmatprep.subr.mxu0 0.0
    %2993 = vmatpush2.xpose.msra.mxu0 0.0
    %2994 = vmatprep.mubr.f32.mxu0 0.0
    %2995 = vmatmul.mubr.f32.gmra.mxu0 %v2926
    %v2996 = vpop.f32.mrf.mxu0
    %v2997 = vadd.f32 0.0, %v2996
    %v2998 = vpop.f32.mrf.mxu0
    %2999 = vdwg.mxu0
    %v3000 = vmul.f32 %v2465, 0.35355338
    %v3001 = vmul.f32 %v2541, 0.35355338
    %v3002 = vmul.f32 %v2617, 0.35355338
    %v3003 = vmul.f32 %v2693, 0.35355338
    %v3004 = vmul.f32 %v2769, 0.35355338
    %v3005 = vmul.f32 %v2845, 0.35355338
    %v3006 = vmul.f32 %v2921, 0.35355338
    %v3007 = vmul.f32 %v2997, 0.35355338
    %v3008 = vsel %vm581, %v3000, -inf
    %3009 = vmax.xlane.f32.xlu0 %v3008
    %v3010 = vpop.xlane.xlu0 %3009
    %v3011 = vsel %vm581, %v3001, -inf
    %3012 = vmax.xlane.f32.xlu0 %v3011
    %v3013 = vpop.xlane.xlu0 %3012
    %v3014 = vsel %vm581, %v3002, -inf
    %3015 = vmax.xlane.f32.xlu0 %v3014
    %v3016 = vpop.xlane.xlu0 %3015
    %v3017 = vsel %vm581, %v3003, -inf
    %3018 = vmax.xlane.f32.xlu0 %v3017
    %v3019 = vpop.xlane.xlu0 %3018
    %v3020 = vsel %vm581, %v3004, -inf
    %3021 = vmax.xlane.f32.xlu0 %v3020
    %v3022 = vpop.xlane.xlu0 %3021
    %v3023 = vsel %vm581, %v3005, -inf
    %3024 = vmax.xlane.f32.xlu0 %v3023
    %v3025 = vpop.xlane.xlu0 %3024
    %v3026 = vsel %vm581, %v3006, -inf
    %3027 = vmax.xlane.f32.xlu0 %v3026
    %v3028 = vpop.xlane.xlu0 %3027
    %v3029 = vsel %vm581, %v3007, -inf
    %3030 = vmax.xlane.f32.xlu0 %v3029
    %v3031 = vpop.xlane.xlu0 %3030
    %v3032 = vsub.f32 %v3000, %v3010
    %v3033 = vsub.f32 %v3001, %v3013
    %v3034 = vsub.f32 %v3002, %v3016
    %v3035 = vsub.f32 %v3003, %v3019
    %v3036 = vsub.f32 %v3004, %v3022
    %v3037 = vsub.f32 %v3005, %v3025
    %v3038 = vsub.f32 %v3006, %v3028
    %v3039 = vsub.f32 %v3007, %v3031
    %v3040 = vmul.f32 %v3032, 1.442695
    %v3041 = vpow.pop %v3040
    %v3042 = vmul.f32 %v3033, 1.442695
    %v3043 = vpow.pop %v3042
    %v3044 = vmul.f32 %v3034, 1.442695
    %v3045 = vpow.pop %v3044
    %v3046 = vmul.f32 %v3035, 1.442695
    %v3047 = vpow.pop %v3046
    %v3048 = vmul.f32 %v3036, 1.442695
    %v3049 = vpow.pop %v3048
    %v3050 = vmul.f32 %v3037, 1.442695
    %v3051 = vpow.pop %v3050
    %v3052 = vmul.f32 %v3038, 1.442695
    %v3053 = vpow.pop %v3052
    %v3054 = vmul.f32 %v3039, 1.442695
    %v3055 = vpow.pop %v3054
    %v3056 = vsel %vm581, %v3041, 0.0
    %3057 = vadd.xlane.f32.xlu0 %v3056
    %v3058 = vpop.xlane.xlu0 %3057
    %v3059 = vsel %vm581, %v3043, 0.0
    %3060 = vadd.xlane.f32.xlu0 %v3059
    %v3061 = vpop.xlane.xlu0 %3060
    %v3062 = vsel %vm581, %v3045, 0.0
    %3063 = vadd.xlane.f32.xlu0 %v3062
    %v3064 = vpop.xlane.xlu0 %3063
    %v3065 = vsel %vm581, %v3047, 0.0
    %3066 = vadd.xlane.f32.xlu0 %v3065
    %v3067 = vpop.xlane.xlu0 %3066
    %v3068 = vsel %vm581, %v3049, 0.0
    %3069 = vadd.xlane.f32.xlu0 %v3068
    %v3070 = vpop.xlane.xlu0 %3069
    %v3071 = vsel %vm581, %v3051, 0.0
    %3072 = vadd.xlane.f32.xlu0 %v3071
    %v3073 = vpop.xlane.xlu0 %3072
    %v3074 = vsel %vm581, %v3053, 0.0
    %3075 = vadd.xlane.f32.xlu0 %v3074
    %v3076 = vpop.xlane.xlu0 %3075
    %v3077 = vsel %vm581, %v3055, 0.0
    %3078 = vadd.xlane.f32.xlu0 %v3077
    %v3079 = vpop.xlane.xlu0 %3078
    %3080 = vrot.lane.b32.xlu0 %v414, 32
    %v3081 = vpop.permute.xlu0 %3080
    %v3084 = vsel %vm581, %v3041, 0
    %3086 = vmatprep.subr.mxu0 0.0
    %3087 = vmatpush1.msra.mxu0 0.0
    %3088 = vmatprep.subr.mxu0 0.0
    %3089 = vmatpush1.msra.mxu0 0.0
    %3090 = vmatprep.subr.mxu0 0.0
    %3091 = vmatpush1.msra.mxu0 0.0
    %3092 = vmatprep.subr.mxu0 0.0
    %3093 = vmatpush1.msra.mxu0 0.0
    %3094 = vmatprep.subr.mxu0 0.0
    %3095 = vmatpush1.msra.mxu0 0.0
    %3096 = vmatprep.subr.mxu0 0.0
    %3097 = vmatpush1.msra.mxu0 0.0
    %3098 = vmatprep.subr.mxu0 0.0
    %3099 = vmatpush1.msra.mxu0 0.0
    %3100 = vmatprep.subr.mxu0 0.0
    %3101 = vmatpush1.msra.mxu0 0.0
    %3102 = vmatprep.subr.mxu0 0.0
    %3103 = vmatpush1.msra.mxu0 0.0
    %3104 = vmatprep.subr.mxu0 0.0
    %3105 = vmatpush1.msra.mxu0 0.0
    %3106 = vmatprep.subr.mxu0 0.0
    %3107 = vmatpush1.msra.mxu0 0.0
    %3108 = vmatprep.subr.mxu0 0.0
    %3109 = vmatpush1.msra.mxu0 0.0
    %3110 = vmatprep.subr.mxu0 0.0
    %3111 = vmatpush1.msra.mxu0 0.0
    %3112 = vmatprep.subr.mxu0 0.0
    %3113 = vmatpush1.msra.mxu0 0.0
    %3114 = vmatprep.subr.mxu0 0.0
    %3115 = vmatpush1.msra.mxu0 0.0
    %3116 = vmatprep.subr.mxu0 0.0
    %3117 = vmatpush1.msra.mxu0 %v3081
    %3118 = vmatprep.subr.mxu0 0.0
    %3119 = vmatpush2.msra.mxu0 0.0
    %3120 = vmatprep.subr.mxu0 0.0
    %3121 = vmatpush2.msra.mxu0 0.0
    %3122 = vmatprep.subr.mxu0 0.0
    %3123 = vmatpush2.msra.mxu0 0.0
    %3124 = vmatprep.subr.mxu0 0.0
    %3125 = vmatpush2.msra.mxu0 0.0
    %3126 = vmatprep.subr.mxu0 0.0
    %3127 = vmatpush2.msra.mxu0 0.0
    %3128 = vmatprep.subr.mxu0 0.0
    %3129 = vmatpush2.msra.mxu0 0.0
    %3130 = vmatprep.subr.mxu0 0.0
    %3131 = vmatpush2.msra.mxu0 0.0
    %3132 = vmatprep.subr.mxu0 0.0
    %3133 = vmatpush2.msra.mxu0 0.0
    %3134 = vmatprep.subr.mxu0 0.0
    %3135 = vmatpush2.msra.mxu0 0.0
    %3136 = vmatprep.subr.mxu0 0.0
    %3137 = vmatpush2.msra.mxu0 0.0
    %3138 = vmatprep.subr.mxu0 0.0
    %3139 = vmatpush2.msra.mxu0 0.0
    %3140 = vmatprep.subr.mxu0 0.0
    %3141 = vmatpush2.msra.mxu0 0.0
    %3142 = vmatprep.subr.mxu0 0.0
    %3143 = vmatpush2.msra.mxu0 0.0
    %3144 = vmatprep.subr.mxu0 0.0
    %3145 = vmatpush2.msra.mxu0 0.0
    %3146 = vmatprep.subr.mxu0 0.0
    %3147 = vmatpush2.msra.mxu0 0.0
    %3148 = vmatprep.subr.mxu0 0.0
    %3149 = vmatpush2.msra.mxu0 0.0
    %3150 = vmatprep.mubr.f32.mxu0 0.0
    %3151 = vmatmul.mubr.f32.gmra.mxu0 %v3084
    %v3152 = vpop.f32.mrf.mxu0
    %v3153 = vadd.f32 0.0, %v3152
    %v3154 = vpop.f32.mrf.mxu0
    %3155 = vdwg.mxu0
    %3156 = vrot.lane.b32.xlu0 %v419, 32
    %v3157 = vpop.permute.xlu0 %3156
    %v3160 = vsel %vm581, %v3043, 0
    %3162 = vmatprep.subr.mxu0 0.0
    %3163 = vmatpush1.msra.mxu0 0.0
    %3164 = vmatprep.subr.mxu0 0.0
    %3165 = vmatpush1.msra.mxu0 0.0
    %3166 = vmatprep.subr.mxu0 0.0
    %3167 = vmatpush1.msra.mxu0 0.0
    %3168 = vmatprep.subr.mxu0 0.0
    %3169 = vmatpush1.msra.mxu0 0.0
    %3170 = vmatprep.subr.mxu0 0.0
    %3171 = vmatpush1.msra.mxu0 0.0
    %3172 = vmatprep.subr.mxu0 0.0
    %3173 = vmatpush1.msra.mxu0 0.0
    %3174 = vmatprep.subr.mxu0 0.0
    %3175 = vmatpush1.msra.mxu0 0.0
    %3176 = vmatprep.subr.mxu0 0.0
    %3177 = vmatpush1.msra.mxu0 0.0
    %3178 = vmatprep.subr.mxu0 0.0
    %3179 = vmatpush1.msra.mxu0 0.0
    %3180 = vmatprep.subr.mxu0 0.0
    %3181 = vmatpush1.msra.mxu0 0.0
    %3182 = vmatprep.subr.mxu0 0.0
    %3183 = vmatpush1.msra.mxu0 0.0
    %3184 = vmatprep.subr.mxu0 0.0
    %3185 = vmatpush1.msra.mxu0 0.0
    %3186 = vmatprep.subr.mxu0 0.0
    %3187 = vmatpush1.msra.mxu0 0.0
    %3188 = vmatprep.subr.mxu0 0.0
    %3189 = vmatpush1.msra.mxu0 0.0
    %3190 = vmatprep.subr.mxu0 0.0
    %3191 = vmatpush1.msra.mxu0 0.0
    %3192 = vmatprep.subr.mxu0 0.0
    %3193 = vmatpush1.msra.mxu0 %v3157
    %3194 = vmatprep.subr.mxu0 0.0
    %3195 = vmatpush2.msra.mxu0 0.0
    %3196 = vmatprep.subr.mxu0 0.0
    %3197 = vmatpush2.msra.mxu0 0.0
    %3198 = vmatprep.subr.mxu0 0.0
    %3199 = vmatpush2.msra.mxu0 0.0
    %3200 = vmatprep.subr.mxu0 0.0
    %3201 = vmatpush2.msra.mxu0 0.0
    %3202 = vmatprep.subr.mxu0 0.0
    %3203 = vmatpush2.msra.mxu0 0.0
    %3204 = vmatprep.subr.mxu0 0.0
    %3205 = vmatpush2.msra.mxu0 0.0
    %3206 = vmatprep.subr.mxu0 0.0
    %3207 = vmatpush2.msra.mxu0 0.0
    %3208 = vmatprep.subr.mxu0 0.0
    %3209 = vmatpush2.msra.mxu0 0.0
    %3210 = vmatprep.subr.mxu0 0.0
    %3211 = vmatpush2.msra.mxu0 0.0
    %3212 = vmatprep.subr.mxu0 0.0
    %3213 = vmatpush2.msra.mxu0 0.0
    %3214 = vmatprep.subr.mxu0 0.0
    %3215 = vmatpush2.msra.mxu0 0.0
    %3216 = vmatprep.subr.mxu0 0.0
    %3217 = vmatpush2.msra.mxu0 0.0
    %3218 = vmatprep.subr.mxu0 0.0
    %3219 = vmatpush2.msra.mxu0 0.0
    %3220 = vmatprep.subr.mxu0 0.0
    %3221 = vmatpush2.msra.mxu0 0.0
    %3222 = vmatprep.subr.mxu0 0.0
    %3223 = vmatpush2.msra.mxu0 0.0
    %3224 = vmatprep.subr.mxu0 0.0
    %3225 = vmatpush2.msra.mxu0 0.0
    %3226 = vmatprep.mubr.f32.mxu0 0.0
    %3227 = vmatmul.mubr.f32.gmra.mxu0 %v3160
    %v3228 = vpop.f32.mrf.mxu0
    %v3229 = vadd.f32 0.0, %v3228
    %v3230 = vpop.f32.mrf.mxu0
    %3231 = vdwg.mxu0
    %3232 = vrot.lane.b32.xlu0 %v569, 32
    %v3233 = vpop.permute.xlu0 %3232
    %v3236 = vsel %vm581, %v3045, 0
    %3238 = vmatprep.subr.mxu0 0.0
    %3239 = vmatpush1.msra.mxu0 0.0
    %3240 = vmatprep.subr.mxu0 0.0
    %3241 = vmatpush1.msra.mxu0 0.0
    %3242 = vmatprep.subr.mxu0 0.0
    %3243 = vmatpush1.msra.mxu0 0.0
    %3244 = vmatprep.subr.mxu0 0.0
    %3245 = vmatpush1.msra.mxu0 0.0
    %3246 = vmatprep.subr.mxu0 0.0
    %3247 = vmatpush1.msra.mxu0 0.0
    %3248 = vmatprep.subr.mxu0 0.0
    %3249 = vmatpush1.msra.mxu0 0.0
    %3250 = vmatprep.subr.mxu0 0.0
    %3251 = vmatpush1.msra.mxu0 0.0
    %3252 = vmatprep.subr.mxu0 0.0
    %3253 = vmatpush1.msra.mxu0 0.0
    %3254 = vmatprep.subr.mxu0 0.0
    %3255 = vmatpush1.msra.mxu0 0.0
    %3256 = vmatprep.subr.mxu0 0.0
    %3257 = vmatpush1.msra.mxu0 0.0
    %3258 = vmatprep.subr.mxu0 0.0
    %3259 = vmatpush1.msra.mxu0 0.0
    %3260 = vmatprep.subr.mxu0 0.0
    %3261 = vmatpush1.msra.mxu0 0.0
    %3262 = vmatprep.subr.mxu0 0.0
    %3263 = vmatpush1.msra.mxu0 0.0
    %3264 = vmatprep.subr.mxu0 0.0
    %3265 = vmatpush1.msra.mxu0 0.0
    %3266 = vmatprep.subr.mxu0 0.0
    %3267 = vmatpush1.msra.mxu0 0.0
    %3268 = vmatprep.subr.mxu0 0.0
    %3269 = vmatpush1.msra.mxu0 %v3233
    %3270 = vmatprep.subr.mxu0 0.0
    %3271 = vmatpush2.msra.mxu0 0.0
    %3272 = vmatprep.subr.mxu0 0.0
    %3273 = vmatpush2.msra.mxu0 0.0
    %3274 = vmatprep.subr.mxu0 0.0
    %3275 = vmatpush2.msra.mxu0 0.0
    %3276 = vmatprep.subr.mxu0 0.0
    %3277 = vmatpush2.msra.mxu0 0.0
    %3278 = vmatprep.subr.mxu0 0.0
    %3279 = vmatpush2.msra.mxu0 0.0
    %3280 = vmatprep.subr.mxu0 0.0
    %3281 = vmatpush2.msra.mxu0 0.0
    %3282 = vmatprep.subr.mxu0 0.0
    %3283 = vmatpush2.msra.mxu0 0.0
    %3284 = vmatprep.subr.mxu0 0.0
    %3285 = vmatpush2.msra.mxu0 0.0
    %3286 = vmatprep.subr.mxu0 0.0
    %3287 = vmatpush2.msra.mxu0 0.0
    %3288 = vmatprep.subr.mxu0 0.0
    %3289 = vmatpush2.msra.mxu0 0.0
    %3290 = vmatprep.subr.mxu0 0.0
    %3291 = vmatpush2.msra.mxu0 0.0
    %3292 = vmatprep.subr.mxu0 0.0
    %3293 = vmatpush2.msra.mxu0 0.0
    %3294 = vmatprep.subr.mxu0 0.0
    %3295 = vmatpush2.msra.mxu0 0.0
    %3296 = vmatprep.subr.mxu0 0.0
    %3297 = vmatpush2.msra.mxu0 0.0
    %3298 = vmatprep.subr.mxu0 0.0
    %3299 = vmatpush2.msra.mxu0 0.0
    %3300 = vmatprep.subr.mxu0 0.0
    %3301 = vmatpush2.msra.mxu0 0.0
    %3302 = vmatprep.mubr.f32.mxu0 0.0
    %3303 = vmatmul.mubr.f32.gmra.mxu0 %v3236
    %v3304 = vpop.f32.mrf.mxu0
    %v3305 = vadd.f32 0.0, %v3304
    %v3306 = vpop.f32.mrf.mxu0
    %3307 = vdwg.mxu0
    %3308 = vrot.lane.b32.xlu0 %v572, 32
    %v3309 = vpop.permute.xlu0 %3308
    %v3312 = vsel %vm581, %v3047, 0
    %3314 = vmatprep.subr.mxu0 0.0
    %3315 = vmatpush1.msra.mxu0 0.0
    %3316 = vmatprep.subr.mxu0 0.0
    %3317 = vmatpush1.msra.mxu0 0.0
    %3318 = vmatprep.subr.mxu0 0.0
    %3319 = vmatpush1.msra.mxu0 0.0
    %3320 = vmatprep.subr.mxu0 0.0
    %3321 = vmatpush1.msra.mxu0 0.0
    %3322 = vmatprep.subr.mxu0 0.0
    %3323 = vmatpush1.msra.mxu0 0.0
    %3324 = vmatprep.subr.mxu0 0.0
    %3325 = vmatpush1.msra.mxu0 0.0
    %3326 = vmatprep.subr.mxu0 0.0
    %3327 = vmatpush1.msra.mxu0 0.0
    %3328 = vmatprep.subr.mxu0 0.0
    %3329 = vmatpush1.msra.mxu0 0.0
    %3330 = vmatprep.subr.mxu0 0.0
    %3331 = vmatpush1.msra.mxu0 0.0
    %3332 = vmatprep.subr.mxu0 0.0
    %3333 = vmatpush1.msra.mxu0 0.0
    %3334 = vmatprep.subr.mxu0 0.0
    %3335 = vmatpush1.msra.mxu0 0.0
    %3336 = vmatprep.subr.mxu0 0.0
    %3337 = vmatpush1.msra.mxu0 0.0
    %3338 = vmatprep.subr.mxu0 0.0
    %3339 = vmatpush1.msra.mxu0 0.0
    %3340 = vmatprep.subr.mxu0 0.0
    %3341 = vmatpush1.msra.mxu0 0.0
    %3342 = vmatprep.subr.mxu0 0.0
    %3343 = vmatpush1.msra.mxu0 0.0
    %3344 = vmatprep.subr.mxu0 0.0
    %3345 = vmatpush1.msra.mxu0 %v3309
    %3346 = vmatprep.subr.mxu0 0.0
    %3347 = vmatpush2.msra.mxu0 0.0
    %3348 = vmatprep.subr.mxu0 0.0
    %3349 = vmatpush2.msra.mxu0 0.0
    %3350 = vmatprep.subr.mxu0 0.0
    %3351 = vmatpush2.msra.mxu0 0.0
    %3352 = vmatprep.subr.mxu0 0.0
    %3353 = vmatpush2.msra.mxu0 0.0
    %3354 = vmatprep.subr.mxu0 0.0
    %3355 = vmatpush2.msra.mxu0 0.0
    %3356 = vmatprep.subr.mxu0 0.0
    %3357 = vmatpush2.msra.mxu0 0.0
    %3358 = vmatprep.subr.mxu0 0.0
    %3359 = vmatpush2.msra.mxu0 0.0
    %3360 = vmatprep.subr.mxu0 0.0
    %3361 = vmatpush2.msra.mxu0 0.0
    %3362 = vmatprep.subr.mxu0 0.0
    %3363 = vmatpush2.msra.mxu0 0.0
    %3364 = vmatprep.subr.mxu0 0.0
    %3365 = vmatpush2.msra.mxu0 0.0
    %3366 = vmatprep.subr.mxu0 0.0
    %3367 = vmatpush2.msra.mxu0 0.0
    %3368 = vmatprep.subr.mxu0 0.0
    %3369 = vmatpush2.msra.mxu0 0.0
    %3370 = vmatprep.subr.mxu0 0.0
    %3371 = vmatpush2.msra.mxu0 0.0
    %3372 = vmatprep.subr.mxu0 0.0
    %3373 = vmatpush2.msra.mxu0 0.0
    %3374 = vmatprep.subr.mxu0 0.0
    %3375 = vmatpush2.msra.mxu0 0.0
    %3376 = vmatprep.subr.mxu0 0.0
    %3377 = vmatpush2.msra.mxu0 0.0
    %3378 = vmatprep.mubr.f32.mxu0 0.0
    %3379 = vmatmul.mubr.f32.gmra.mxu0 %v3312
    %v3380 = vpop.f32.mrf.mxu0
    %v3381 = vadd.f32 0.0, %v3380
    %v3382 = vpop.f32.mrf.mxu0
    %3383 = vdwg.mxu0
    %3384 = vrot.lane.b32.xlu0 %v574, 32
    %v3385 = vpop.permute.xlu0 %3384
    %v3388 = vsel %vm581, %v3049, 0
    %3390 = vmatprep.subr.mxu0 0.0
    %3391 = vmatpush1.msra.mxu0 0.0
    %3392 = vmatprep.subr.mxu0 0.0
    %3393 = vmatpush1.msra.mxu0 0.0
    %3394 = vmatprep.subr.mxu0 0.0
    %3395 = vmatpush1.msra.mxu0 0.0
    %3396 = vmatprep.subr.mxu0 0.0
    %3397 = vmatpush1.msra.mxu0 0.0
    %3398 = vmatprep.subr.mxu0 0.0
    %3399 = vmatpush1.msra.mxu0 0.0
    %3400 = vmatprep.subr.mxu0 0.0
    %3401 = vmatpush1.msra.mxu0 0.0
    %3402 = vmatprep.subr.mxu0 0.0
    %3403 = vmatpush1.msra.mxu0 0.0
    %3404 = vmatprep.subr.mxu0 0.0
    %3405 = vmatpush1.msra.mxu0 0.0
    %3406 = vmatprep.subr.mxu0 0.0
    %3407 = vmatpush1.msra.mxu0 0.0
    %3408 = vmatprep.subr.mxu0 0.0
    %3409 = vmatpush1.msra.mxu0 0.0
    %3410 = vmatprep.subr.mxu0 0.0
    %3411 = vmatpush1.msra.mxu0 0.0
    %3412 = vmatprep.subr.mxu0 0.0
    %3413 = vmatpush1.msra.mxu0 0.0
    %3414 = vmatprep.subr.mxu0 0.0
    %3415 = vmatpush1.msra.mxu0 0.0
    %3416 = vmatprep.subr.mxu0 0.0
    %3417 = vmatpush1.msra.mxu0 0.0
    %3418 = vmatprep.subr.mxu0 0.0
    %3419 = vmatpush1.msra.mxu0 0.0
    %3420 = vmatprep.subr.mxu0 0.0
    %3421 = vmatpush1.msra.mxu0 %v3385
    %3422 = vmatprep.subr.mxu0 0.0
    %3423 = vmatpush2.msra.mxu0 0.0
    %3424 = vmatprep.subr.mxu0 0.0
    %3425 = vmatpush2.msra.mxu0 0.0
    %3426 = vmatprep.subr.mxu0 0.0
    %3427 = vmatpush2.msra.mxu0 0.0
    %3428 = vmatprep.subr.mxu0 0.0
    %3429 = vmatpush2.msra.mxu0 0.0
    %3430 = vmatprep.subr.mxu0 0.0
    %3431 = vmatpush2.msra.mxu0 0.0
    %3432 = vmatprep.subr.mxu0 0.0
    %3433 = vmatpush2.msra.mxu0 0.0
    %3434 = vmatprep.subr.mxu0 0.0
    %3435 = vmatpush2.msra.mxu0 0.0
    %3436 = vmatprep.subr.mxu0 0.0
    %3437 = vmatpush2.msra.mxu0 0.0
    %3438 = vmatprep.subr.mxu0 0.0
    %3439 = vmatpush2.msra.mxu0 0.0
    %3440 = vmatprep.subr.mxu0 0.0
    %3441 = vmatpush2.msra.mxu0 0.0
    %3442 = vmatprep.subr.mxu0 0.0
    %3443 = vmatpush2.msra.mxu0 0.0
    %3444 = vmatprep.subr.mxu0 0.0
    %3445 = vmatpush2.msra.mxu0 0.0
    %3446 = vmatprep.subr.mxu0 0.0
    %3447 = vmatpush2.msra.mxu0 0.0
    %3448 = vmatprep.subr.mxu0 0.0
    %3449 = vmatpush2.msra.mxu0 0.0
    %3450 = vmatprep.subr.mxu0 0.0
    %3451 = vmatpush2.msra.mxu0 0.0
    %3452 = vmatprep.subr.mxu0 0.0
    %3453 = vmatpush2.msra.mxu0 0.0
    %3454 = vmatprep.mubr.f32.mxu0 0.0
    %3455 = vmatmul.mubr.f32.gmra.mxu0 %v3388
    %v3456 = vpop.f32.mrf.mxu0
    %v3457 = vadd.f32 0.0, %v3456
    %v3458 = vpop.f32.mrf.mxu0
    %3459 = vdwg.mxu0
    %3460 = vrot.lane.b32.xlu0 %v576, 32
    %v3461 = vpop.permute.xlu0 %3460
    %v3464 = vsel %vm581, %v3051, 0
    %3466 = vmatprep.subr.mxu0 0.0
    %3467 = vmatpush1.msra.mxu0 0.0
    %3468 = vmatprep.subr.mxu0 0.0
    %3469 = vmatpush1.msra.mxu0 0.0
    %3470 = vmatprep.subr.mxu0 0.0
    %3471 = vmatpush1.msra.mxu0 0.0
    %3472 = vmatprep.subr.mxu0 0.0
    %3473 = vmatpush1.msra.mxu0 0.0
    %3474 = vmatprep.subr.mxu0 0.0
    %3475 = vmatpush1.msra.mxu0 0.0
    %3476 = vmatprep.subr.mxu0 0.0
    %3477 = vmatpush1.msra.mxu0 0.0
    %3478 = vmatprep.subr.mxu0 0.0
    %3479 = vmatpush1.msra.mxu0 0.0
    %3480 = vmatprep.subr.mxu0 0.0
    %3481 = vmatpush1.msra.mxu0 0.0
    %3482 = vmatprep.subr.mxu0 0.0
    %3483 = vmatpush1.msra.mxu0 0.0
    %3484 = vmatprep.subr.mxu0 0.0
    %3485 = vmatpush1.msra.mxu0 0.0
    %3486 = vmatprep.subr.mxu0 0.0
    %3487 = vmatpush1.msra.mxu0 0.0
    %3488 = vmatprep.subr.mxu0 0.0
    %3489 = vmatpush1.msra.mxu0 0.0
    %3490 = vmatprep.subr.mxu0 0.0
    %3491 = vmatpush1.msra.mxu0 0.0
    %3492 = vmatprep.subr.mxu0 0.0
    %3493 = vmatpush1.msra.mxu0 0.0
    %3494 = vmatprep.subr.mxu0 0.0
    %3495 = vmatpush1.msra.mxu0 0.0
    %3496 = vmatprep.subr.mxu0 0.0
    %3497 = vmatpush1.msra.mxu0 %v3461
    %3498 = vmatprep.subr.mxu0 0.0
    %3499 = vmatpush2.msra.mxu0 0.0
    %3500 = vmatprep.subr.mxu0 0.0
    %3501 = vmatpush2.msra.mxu0 0.0
    %3502 = vmatprep.subr.mxu0 0.0
    %3503 = vmatpush2.msra.mxu0 0.0
    %3504 = vmatprep.subr.mxu0 0.0
    %3505 = vmatpush2.msra.mxu0 0.0
    %3506 = vmatprep.subr.mxu0 0.0
    %3507 = vmatpush2.msra.mxu0 0.0
    %3508 = vmatprep.subr.mxu0 0.0
    %3509 = vmatpush2.msra.mxu0 0.0
    %3510 = vmatprep.subr.mxu0 0.0
    %3511 = vmatpush2.msra.mxu0 0.0
    %3512 = vmatprep.subr.mxu0 0.0
    %3513 = vmatpush2.msra.mxu0 0.0
    %3514 = vmatprep.subr.mxu0 0.0
    %3515 = vmatpush2.msra.mxu0 0.0
    %3516 = vmatprep.subr.mxu0 0.0
    %3517 = vmatpush2.msra.mxu0 0.0
    %3518 = vmatprep.subr.mxu0 0.0
    %3519 = vmatpush2.msra.mxu0 0.0
    %3520 = vmatprep.subr.mxu0 0.0
    %3521 = vmatpush2.msra.mxu0 0.0
    %3522 = vmatprep.subr.mxu0 0.0
    %3523 = vmatpush2.msra.mxu0 0.0
    %3524 = vmatprep.subr.mxu0 0.0
    %3525 = vmatpush2.msra.mxu0 0.0
    %3526 = vmatprep.subr.mxu0 0.0
    %3527 = vmatpush2.msra.mxu0 0.0
    %3528 = vmatprep.subr.mxu0 0.0
    %3529 = vmatpush2.msra.mxu0 0.0
    %3530 = vmatprep.mubr.f32.mxu0 0.0
    %3531 = vmatmul.mubr.f32.gmra.mxu0 %v3464
    %v3532 = vpop.f32.mrf.mxu0
    %v3533 = vadd.f32 0.0, %v3532
    %v3534 = vpop.f32.mrf.mxu0
    %3535 = vdwg.mxu0
    %3536 = vrot.lane.b32.xlu0 %v578, 32
    %v3537 = vpop.permute.xlu0 %3536
    %v3540 = vsel %vm581, %v3053, 0
    %3542 = vmatprep.subr.mxu0 0.0
    %3543 = vmatpush1.msra.mxu0 0.0
    %3544 = vmatprep.subr.mxu0 0.0
    %3545 = vmatpush1.msra.mxu0 0.0
    %3546 = vmatprep.subr.mxu0 0.0
    %3547 = vmatpush1.msra.mxu0 0.0
    %3548 = vmatprep.subr.mxu0 0.0
    %3549 = vmatpush1.msra.mxu0 0.0
    %3550 = vmatprep.subr.mxu0 0.0
    %3551 = vmatpush1.msra.mxu0 0.0
    %3552 = vmatprep.subr.mxu0 0.0
    %3553 = vmatpush1.msra.mxu0 0.0
    %3554 = vmatprep.subr.mxu0 0.0
    %3555 = vmatpush1.msra.mxu0 0.0
    %3556 = vmatprep.subr.mxu0 0.0
    %3557 = vmatpush1.msra.mxu0 0.0
    %3558 = vmatprep.subr.mxu0 0.0
    %3559 = vmatpush1.msra.mxu0 0.0
    %3560 = vmatprep.subr.mxu0 0.0
    %3561 = vmatpush1.msra.mxu0 0.0
    %3562 = vmatprep.subr.mxu0 0.0
    %3563 = vmatpush1.msra.mxu0 0.0
    %3564 = vmatprep.subr.mxu0 0.0
    %3565 = vmatpush1.msra.mxu0 0.0
    %3566 = vmatprep.subr.mxu0 0.0
    %3567 = vmatpush1.msra.mxu0 0.0
    %3568 = vmatprep.subr.mxu0 0.0
    %3569 = vmatpush1.msra.mxu0 0.0
    %3570 = vmatprep.subr.mxu0 0.0
    %3571 = vmatpush1.msra.mxu0 0.0
    %3572 = vmatprep.subr.mxu0 0.0
    %3573 = vmatpush1.msra.mxu0 %v3537
    %3574 = vmatprep.subr.mxu0 0.0
    %3575 = vmatpush2.msra.mxu0 0.0
    %3576 = vmatprep.subr.mxu0 0.0
    %3577 = vmatpush2.msra.mxu0 0.0
    %3578 = vmatprep.subr.mxu0 0.0
    %3579 = vmatpush2.msra.mxu0 0.0
    %3580 = vmatprep.subr.mxu0 0.0
    %3581 = vmatpush2.msra.mxu0 0.0
    %3582 = vmatprep.subr.mxu0 0.0
    %3583 = vmatpush2.msra.mxu0 0.0
    %3584 = vmatprep.subr.mxu0 0.0
    %3585 = vmatpush2.msra.mxu0 0.0
    %3586 = vmatprep.subr.mxu0 0.0
    %3587 = vmatpush2.msra.mxu0 0.0
    %3588 = vmatprep.subr.mxu0 0.0
    %3589 = vmatpush2.msra.mxu0 0.0
    %3590 = vmatprep.subr.mxu0 0.0
    %3591 = vmatpush2.msra.mxu0 0.0
    %3592 = vmatprep.subr.mxu0 0.0
    %3593 = vmatpush2.msra.mxu0 0.0
    %3594 = vmatprep.subr.mxu0 0.0
    %3595 = vmatpush2.msra.mxu0 0.0
    %3596 = vmatprep.subr.mxu0 0.0
    %3597 = vmatpush2.msra.mxu0 0.0
    %3598 = vmatprep.subr.mxu0 0.0
    %3599 = vmatpush2.msra.mxu0 0.0
    %3600 = vmatprep.subr.mxu0 0.0
    %3601 = vmatpush2.msra.mxu0 0.0
    %3602 = vmatprep.subr.mxu0 0.0
    %3603 = vmatpush2.msra.mxu0 0.0
    %3604 = vmatprep.subr.mxu0 0.0
    %3605 = vmatpush2.msra.mxu0 0.0
    %3606 = vmatprep.mubr.f32.mxu0 0.0
    %3607 = vmatmul.mubr.f32.gmra.mxu0 %v3540
    %v3608 = vpop.f32.mrf.mxu0
    %v3609 = vadd.f32 0.0, %v3608
    %v3610 = vpop.f32.mrf.mxu0
    %3611 = vdwg.mxu0
    %3612 = vrot.lane.b32.xlu0 %v580, 32
    %v3613 = vpop.permute.xlu0 %3612
    %v3616 = vsel %vm581, %v3055, 0
    %3618 = vmatprep.subr.mxu0 0.0
    %3619 = vmatpush1.msra.mxu0 0.0
    %3620 = vmatprep.subr.mxu0 0.0
    %3621 = vmatpush1.msra.mxu0 0.0
    %3622 = vmatprep.subr.mxu0 0.0
    %3623 = vmatpush1.msra.mxu0 0.0
    %3624 = vmatprep.subr.mxu0 0.0
    %3625 = vmatpush1.msra.mxu0 0.0
    %3626 = vmatprep.subr.mxu0 0.0
    %3627 = vmatpush1.msra.mxu0 0.0
    %3628 = vmatprep.subr.mxu0 0.0
    %3629 = vmatpush1.msra.mxu0 0.0
    %3630 = vmatprep.subr.mxu0 0.0
    %3631 = vmatpush1.msra.mxu0 0.0
    %3632 = vmatprep.subr.mxu0 0.0
    %3633 = vmatpush1.msra.mxu0 0.0
    %3634 = vmatprep.subr.mxu0 0.0
    %3635 = vmatpush1.msra.mxu0 0.0
    %3636 = vmatprep.subr.mxu0 0.0
    %3637 = vmatpush1.msra.mxu0 0.0
    %3638 = vmatprep.subr.mxu0 0.0
    %3639 = vmatpush1.msra.mxu0 0.0
    %3640 = vmatprep.subr.mxu0 0.0
    %3641 = vmatpush1.msra.mxu0 0.0
    %3642 = vmatprep.subr.mxu0 0.0
    %3643 = vmatpush1.msra.mxu0 0.0
    %3644 = vmatprep.subr.mxu0 0.0
    %3645 = vmatpush1.msra.mxu0 0.0
    %3646 = vmatprep.subr.mxu0 0.0
    %3647 = vmatpush1.msra.mxu0 0.0
    %3648 = vmatprep.subr.mxu0 0.0
    %3649 = vmatpush1.msra.mxu0 %v3613
    %3650 = vmatprep.subr.mxu0 0.0
    %3651 = vmatpush2.msra.mxu0 0.0
    %3652 = vmatprep.subr.mxu0 0.0
    %3653 = vmatpush2.msra.mxu0 0.0
    %3654 = vmatprep.subr.mxu0 0.0
    %3655 = vmatpush2.msra.mxu0 0.0
    %3656 = vmatprep.subr.mxu0 0.0
    %3657 = vmatpush2.msra.mxu0 0.0
    %3658 = vmatprep.subr.mxu0 0.0
    %3659 = vmatpush2.msra.mxu0 0.0
    %3660 = vmatprep.subr.mxu0 0.0
    %3661 = vmatpush2.msra.mxu0 0.0
    %3662 = vmatprep.subr.mxu0 0.0
    %3663 = vmatpush2.msra.mxu0 0.0
    %3664 = vmatprep.subr.mxu0 0.0
    %3665 = vmatpush2.msra.mxu0 0.0
    %3666 = vmatprep.subr.mxu0 0.0
    %3667 = vmatpush2.msra.mxu0 0.0
    %3668 = vmatprep.subr.mxu0 0.0
    %3669 = vmatpush2.msra.mxu0 0.0
    %3670 = vmatprep.subr.mxu0 0.0
    %3671 = vmatpush2.msra.mxu0 0.0
    %3672 = vmatprep.subr.mxu0 0.0
    %3673 = vmatpush2.msra.mxu0 0.0
    %3674 = vmatprep.subr.mxu0 0.0
    %3675 = vmatpush2.msra.mxu0 0.0
    %3676 = vmatprep.subr.mxu0 0.0
    %3677 = vmatpush2.msra.mxu0 0.0
    %3678 = vmatprep.subr.mxu0 0.0
    %3679 = vmatpush2.msra.mxu0 0.0
    %3680 = vmatprep.subr.mxu0 0.0
    %3681 = vmatpush2.msra.mxu0 0.0
    %3682 = vmatprep.mubr.f32.mxu0 0.0
    %3683 = vmatmul.mubr.f32.gmra.mxu0 %v3616
    %v3684 = vpop.f32.mrf.mxu0
    %v3685 = vadd.f32 0.0, %v3684
    %v3686 = vpop.f32.mrf.mxu0
    %3687 = vdwg.mxu0
    %v3688 = vrcp.pop %v3058
    %v3689 = vrcp.pop %v3061
    %v3690 = vrcp.pop %v3064
    %v3691 = vrcp.pop %v3067
    %v3692 = vrcp.pop %v3070
    %v3693 = vrcp.pop %v3073
    %v3694 = vrcp.pop %v3076
    %v3695 = vrcp.pop %v3079
    %v3696 = vmul.f32 %v3153, %v3688
    %v3697 = vmul.f32 %v3229, %v3689
    %v3698 = vmul.f32 %v3305, %v3690
    %v3699 = vmul.f32 %v3381, %v3691
    %v3700 = vmul.f32 %v3457, %v3692
    %v3701 = vmul.f32 %v3533, %v3693
    %v3702 = vmul.f32 %v3609, %v3694
    %v3703 = vmul.f32 %v3685, %v3695
    %3705 = vrot.lane.b32.xlu0 %v3698, 8
    %v3706 = vpop.permute.xlu0 %3705
    %3709 = vrot.lane.b32.xlu0 %v3700, 16
    %v3710 = vpop.permute.xlu0 %3709
    %3713 = vrot.lane.b32.xlu0 %v3702, 24
    %v3714 = vpop.permute.xlu0 %3713
    %v3716 = vsel %vm581, %v3696, %v3706
    %v3717 = vsel %vm1891, %v3716, %v3710
    %v3718 = vsel %vm1893, %v3717, %v3714
    %3720 = vrot.lane.b32.xlu0 %v3699, 8
    %v3721 = vpop.permute.xlu0 %3720
    %3724 = vrot.lane.b32.xlu0 %v3701, 16
    %v3725 = vpop.permute.xlu0 %3724
    %3728 = vrot.lane.b32.xlu0 %v3703, 24
    %v3729 = vpop.permute.xlu0 %3728
    %v3731 = vsel %vm581, %v3697, %v3721
    %v3732 = vsel %vm1891, %v3731, %v3725
    %v3733 = vsel %vm1893, %v3732, %v3729
    %v3734 = vld [vmem:[#allocation5 + $0x180] sm:$0xff]
    %v3735 = vld [vmem:[#allocation5 + $0x188] sm:$0xff]
    %v3736 = vld [vmem:[#allocation5 + $0x190] sm:$0xff]
    %v3737 = vld [vmem:[#allocation5 + $0x198] sm:$0xff]
    %v3738 = vlaneseq
    %v3739 = vshrl.u32 %v3738, 7
    %v3740 = vsub.s32 2, %v3739
    %v3741 = vrot.slane %v58, %v3740
    %v3743 = vsel %vm156, %v3718, 0
    %v3746 = vsel %vm156, %v3733, 0
    %3748 = vmatprep.subr.mxu0 0.0
    %3749 = vmatpush1.msra.mxu0 0.0
    %3750 = vmatprep.subr.mxu0 0.0
    %3751 = vmatpush1.msra.mxu0 0.0
    %3752 = vmatprep.subr.mxu0 0.0
    %3753 = vmatpush1.msra.mxu0 0.0
    %3754 = vmatprep.subr.mxu0 0.0
    %3755 = vmatpush1.msra.mxu0 0.0
    %3756 = vmatprep.subr.mxu0 0.0
    %3757 = vmatpush1.msra.mxu0 0.0
    %3758 = vmatprep.subr.mxu0 0.0
    %3759 = vmatpush1.msra.mxu0 0.0
    %3760 = vmatprep.subr.mxu0 0.0
    %3761 = vmatpush1.msra.mxu0 0.0
    %3762 = vmatprep.subr.mxu0 0.0
    %3763 = vmatpush1.msra.mxu0 0.0
    %3764 = vmatprep.subr.mxu0 0.0
    %3765 = vmatpush1.msra.mxu0 0.0
    %3766 = vmatprep.subr.mxu0 0.0
    %3767 = vmatpush1.msra.mxu0 0.0
    %3768 = vmatprep.subr.mxu0 0.0
    %3769 = vmatpush1.msra.mxu0 0.0
    %3770 = vmatprep.subr.mxu0 0.0
    %3771 = vmatpush1.msra.mxu0 0.0
    %3772 = vmatprep.subr.mxu0 0.0
    %3773 = vmatpush1.msra.mxu0 %v3737
    %3774 = vmatprep.subr.mxu0 0.0
    %3775 = vmatpush1.msra.mxu0 %v3736
    %3776 = vmatprep.subr.mxu0 0.0
    %3777 = vmatpush1.msra.mxu0 %v3735
    %3778 = vmatprep.subr.mxu0 0.0
    %3779 = vmatpush1.msra.mxu0 %v3734
    %3780 = vmatprep.subr.mxu0 0.0
    %3781 = vmatpush2.msra.mxu0 0.0
    %3782 = vmatprep.subr.mxu0 0.0
    %3783 = vmatpush2.msra.mxu0 0.0
    %3784 = vmatprep.subr.mxu0 0.0
    %3785 = vmatpush2.msra.mxu0 0.0
    %3786 = vmatprep.subr.mxu0 0.0
    %3787 = vmatpush2.msra.mxu0 0.0
    %3788 = vmatprep.subr.mxu0 0.0
    %3789 = vmatpush2.msra.mxu0 0.0
    %3790 = vmatprep.subr.mxu0 0.0
    %3791 = vmatpush2.msra.mxu0 0.0
    %3792 = vmatprep.subr.mxu0 0.0
    %3793 = vmatpush2.msra.mxu0 0.0
    %3794 = vmatprep.subr.mxu0 0.0
    %3795 = vmatpush2.msra.mxu0 0.0
    %3796 = vmatprep.subr.mxu0 0.0
    %3797 = vmatpush2.msra.mxu0 0.0
    %3798 = vmatprep.subr.mxu0 0.0
    %3799 = vmatpush2.msra.mxu0 0.0
    %3800 = vmatprep.subr.mxu0 0.0
    %3801 = vmatpush2.msra.mxu0 0.0
    %3802 = vmatprep.subr.mxu0 0.0
    %3803 = vmatpush2.msra.mxu0 0.0
    %3804 = vmatprep.subr.mxu0 0.0
    %3805 = vmatpush2.msra.mxu0 0.0
    %3806 = vmatprep.subr.mxu0 0.0
    %3807 = vmatpush2.msra.mxu0 0.0
    %3808 = vmatprep.subr.mxu0 0.0
    %3809 = vmatpush2.msra.mxu0 0.0
    %3810 = vmatprep.subr.mxu0 0.0
    %3811 = vmatpush2.msra.mxu0 0.0
    %3812 = vmatprep.mubr.f32.mxu0 0.0
    %3813 = vmatmul.mubr.f32.gmra.mxu0 %v3743
    %v3814 = vpop.f32.mrf.mxu0
    %v3815 = vadd.f32 %v3741, %v3814
    %v3816 = vpop.f32.mrf.mxu0
    %3817 = vmatprep.mubr.f32.mxu0 0.0
    %3818 = vmatmul.mubr.f32.gmra.mxu0 %v3746
    %v3819 = vpop.f32.mrf.mxu0
    %v3820 = vadd.f32 %v3741, %v3819
    %v3821 = vpop.f32.mrf.mxu0
    %3822 = vdwg.mxu0
    %v3823 = vadd.f32 %v2245, %v3815
    %v3824 = vadd.f32 %v2246, %v3820
    %v3825 = vsel %vm156, %v3823, 0.0
    %3826 = vadd.xlane.f32.xlu0 %v3825
    %v3827 = vpop.xlane.xlu0 %3826
    %v3828 = vsel %vm156, %v3824, 0.0
    %3829 = vadd.xlane.f32.xlu0 %v3828
    %v3830 = vpop.xlane.xlu0 %3829
    %v3831 = vmul.f32 %v3827, %v163
    %v3832 = vmul.f32 %v3830, %v163
    %v3833 = vmul.f32 %v3823, %v3823
    %v3834 = vmul.f32 %v3824, %v3824
    %v3835 = vsel %vm156, %v3833, 0.0
    %3836 = vadd.xlane.f32.xlu0 %v3835
    %v3837 = vpop.xlane.xlu0 %3836
    %v3838 = vsel %vm156, %v3834, 0.0
    %3839 = vadd.xlane.f32.xlu0 %v3838
    %v3840 = vpop.xlane.xlu0 %3839
    %v3841 = vmul.f32 %v3837, %v163
    %v3842 = vmul.f32 %v3840, %v163
    %v3843 = vmul.f32 %v3831, %v3831
    %v3844 = vmul.f32 %v3832, %v3832
    %v3845 = vsub.f32 %v3841, %v3843
    %v3846 = vsub.f32 %v3842, %v3844
    %v3847 = vsub.f32 %v3823, %v3831
    %v3848 = vsub.f32 %v3824, %v3832
    %v3849 = vadd.f32 %v3845, 1e-05
    %v3850 = vadd.f32 %v3846, 1e-05
    %v3851 = vrsqrt.pop %v3849
    %v3852 = vrsqrt.pop %v3850
    %v3853 = vmul.f32 %v3847, %v3851
    %v3854 = vmul.f32 %v3848, %v3852
    %v3855 = vlaneseq
    %v3856 = vshrl.u32 %v3855, 7
    %v3857 = vsub.s32 3, %v3856
    %v3858 = vrot.slane %v58, %v3857
    %v3859 = vmul.f32 %v3853, %v3858
    %v3860 = vmul.f32 %v3854, %v3858
    %v3861 = vlaneseq
    %v3862 = vshrl.u32 %v3861, 7
    %v3863 = vsub.s32 4, %v3862
    %v3864 = vrot.slane %v58, %v3863
    %v3865 = vadd.f32 %v3859, %v3864
    %v3866 = vadd.f32 %v3860, %v3864
    %v3867 = vld [vmem:[#allocation5 + $0x1a0] sm:$0xff]
    %v3868 = vld [vmem:[#allocation5 + $0x1a8] sm:$0xff]
    %v3869 = vld [vmem:[#allocation5 + $0x1b0] sm:$0xff]
    %v3870 = vld [vmem:[#allocation5 + $0x1b8] sm:$0xff]
    %v3871 = vlaneseq
    %v3872 = vshrl.u32 %v3871, 7
    %v3873 = vsub.s32 5, %v3872
    %v3874 = vrot.slane %v58, %v3873
    %v3876 = vsel %vm156, %v3865, 0
    %v3879 = vsel %vm156, %v3866, 0
    %3881 = vmatprep.subr.mxu0 0.0
    %3882 = vmatpush1.msra.mxu0 0.0
    %3883 = vmatprep.subr.mxu0 0.0
    %3884 = vmatpush1.msra.mxu0 0.0
    %3885 = vmatprep.subr.mxu0 0.0
    %3886 = vmatpush1.msra.mxu0 0.0
    %3887 = vmatprep.subr.mxu0 0.0
    %3888 = vmatpush1.msra.mxu0 0.0
    %3889 = vmatprep.subr.mxu0 0.0
    %3890 = vmatpush1.msra.mxu0 0.0
    %3891 = vmatprep.subr.mxu0 0.0
    %3892 = vmatpush1.msra.mxu0 0.0
    %3893 = vmatprep.subr.mxu0 0.0
    %3894 = vmatpush1.msra.mxu0 0.0
    %3895 = vmatprep.subr.mxu0 0.0
    %3896 = vmatpush1.msra.mxu0 0.0
    %3897 = vmatprep.subr.mxu0 0.0
    %3898 = vmatpush1.msra.mxu0 0.0
    %3899 = vmatprep.subr.mxu0 0.0
    %3900 = vmatpush1.msra.mxu0 0.0
    %3901 = vmatprep.subr.mxu0 0.0
    %3902 = vmatpush1.msra.mxu0 0.0
    %3903 = vmatprep.subr.mxu0 0.0
    %3904 = vmatpush1.msra.mxu0 0.0
    %3905 = vmatprep.subr.mxu0 0.0
    %3906 = vmatpush1.msra.mxu0 %v3870
    %3907 = vmatprep.subr.mxu0 0.0
    %3908 = vmatpush1.msra.mxu0 %v3869
    %3909 = vmatprep.subr.mxu0 0.0
    %3910 = vmatpush1.msra.mxu0 %v3868
    %3911 = vmatprep.subr.mxu0 0.0
    %3912 = vmatpush1.msra.mxu0 %v3867
    %3913 = vmatprep.subr.mxu0 0.0
    %3914 = vmatpush2.msra.mxu0 0.0
    %3915 = vmatprep.subr.mxu0 0.0
    %3916 = vmatpush2.msra.mxu0 0.0
    %3917 = vmatprep.subr.mxu0 0.0
    %3918 = vmatpush2.msra.mxu0 0.0
    %3919 = vmatprep.subr.mxu0 0.0
    %3920 = vmatpush2.msra.mxu0 0.0
    %3921 = vmatprep.subr.mxu0 0.0
    %3922 = vmatpush2.msra.mxu0 0.0
    %3923 = vmatprep.subr.mxu0 0.0
    %3924 = vmatpush2.msra.mxu0 0.0
    %3925 = vmatprep.subr.mxu0 0.0
    %3926 = vmatpush2.msra.mxu0 0.0
    %3927 = vmatprep.subr.mxu0 0.0
    %3928 = vmatpush2.msra.mxu0 0.0
    %3929 = vmatprep.subr.mxu0 0.0
    %3930 = vmatpush2.msra.mxu0 0.0
    %3931 = vmatprep.subr.mxu0 0.0
    %3932 = vmatpush2.msra.mxu0 0.0
    %3933 = vmatprep.subr.mxu0 0.0
    %3934 = vmatpush2.msra.mxu0 0.0
    %3935 = vmatprep.subr.mxu0 0.0
    %3936 = vmatpush2.msra.mxu0 0.0
    %3937 = vmatprep.subr.mxu0 0.0
    %3938 = vmatpush2.msra.mxu0 0.0
    %3939 = vmatprep.subr.mxu0 0.0
    %3940 = vmatpush2.msra.mxu0 0.0
    %3941 = vmatprep.subr.mxu0 0.0
    %3942 = vmatpush2.msra.mxu0 0.0
    %3943 = vmatprep.subr.mxu0 0.0
    %3944 = vmatpush2.msra.mxu0 0.0
    %3945 = vmatprep.mubr.f32.mxu0 0.0
    %3946 = vmatmul.mubr.f32.gmra.mxu0 %v3876
    %v3947 = vpop.f32.mrf.mxu0
    %v3948 = vadd.f32 %v3874, %v3947
    %v3949 = vpop.f32.mrf.mxu0
    %3950 = vmatprep.mubr.f32.mxu0 0.0
    %3951 = vmatmul.mubr.f32.gmra.mxu0 %v3879
    %v3952 = vpop.f32.mrf.mxu0
    %v3953 = vadd.f32 %v3874, %v3952
    %v3954 = vpop.f32.mrf.mxu0
    %3955 = vdwg.mxu0
    %v3956 = vmul.f32 %v3948, 0.5
    %v3957 = vmul.f32 %v3953, 0.5
    %v3958 = vmul.f32 %v3948, %v3948
    %v3959 = vmul.f32 %v3953, %v3953
    %v3960 = vmul.f32 %v3958, %v3948
    %v3961 = vmul.f32 %v3959, %v3953
    %v3962 = vmul.f32 %v3960, 0.044715
    %v3963 = vmul.f32 %v3961, 0.044715
    %v3964 = vadd.f32 %v3948, %v3962
    %v3965 = vadd.f32 %v3953, %v3963
    %v3966 = vmul.f32 %v3964, 0.7978846
    %v3967 = vmul.f32 %v3965, 0.7978846
    %v3968 = vtanh.pop %v3966
    %v3969 = vtanh.pop %v3967
    %v3970 = vadd.f32 %v3968, 1.0
    %v3971 = vadd.f32 %v3969, 1.0
    %v3972 = vmul.f32 %v3956, %v3970
    %v3973 = vmul.f32 %v3957, %v3971
    %v3974 = vld [vmem:[#allocation5 + $0x1c0] sm:$0xff]
    %v3975 = vld [vmem:[#allocation5 + $0x1c8] sm:$0xff]
    %v3976 = vld [vmem:[#allocation5 + $0x1d0] sm:$0xff]
    %v3977 = vld [vmem:[#allocation5 + $0x1d8] sm:$0xff]
    %v3978 = vld [vmem:[#allocation5 + $0x1e0] sm:$0xff]
    %v3979 = vld [vmem:[#allocation5 + $0x1e8] sm:$0xff]
    %v3980 = vld [vmem:[#allocation5 + $0x1f0] sm:$0xff]
    %v3981 = vld [vmem:[#allocation5 + $0x1f8] sm:$0xff]
    %v3982 = vld [vmem:[#allocation5 + $0x200] sm:$0xff]
    %v3983 = vld [vmem:[#allocation5 + $0x208] sm:$0xff]
    %v3984 = vld [vmem:[#allocation5 + $0x210] sm:$0xff]
    %v3985 = vld [vmem:[#allocation5 + $0x218] sm:$0xff]
    %v3986 = vld [vmem:[#allocation5 + $0x220] sm:$0xff]
    %v3987 = vld [vmem:[#allocation5 + $0x228] sm:$0xff]
    %v3988 = vld [vmem:[#allocation5 + $0x230] sm:$0xff]
    %v3989 = vld [vmem:[#allocation5 + $0x238] sm:$0xff]
    %v3990 = vlaneseq
    %v3991 = vshrl.u32 %v3990, 7
    %v3992 = vsub.s32 6, %v3991
    %v3993 = vrot.slane %v58, %v3992
    %3994 = vmatprep.subr.mxu0 0.0
    %3995 = vmatpush1.msra.mxu0 %v3989
    %3996 = vmatprep.subr.mxu0 0.0
    %3997 = vmatpush1.msra.mxu0 %v3988
    %3998 = vmatprep.subr.mxu0 0.0
    %3999 = vmatpush1.msra.mxu0 %v3987
    %4000 = vmatprep.subr.mxu0 0.0
    %4001 = vmatpush1.msra.mxu0 %v3986
    %4002 = vmatprep.subr.mxu0 0.0
    %4003 = vmatpush1.msra.mxu0 %v3985
    %4004 = vmatprep.subr.mxu0 0.0
    %4005 = vmatpush1.msra.mxu0 %v3984
    %4006 = vmatprep.subr.mxu0 0.0
    %4007 = vmatpush1.msra.mxu0 %v3983
    %4008 = vmatprep.subr.mxu0 0.0
    %4009 = vmatpush1.msra.mxu0 %v3982
    %4010 = vmatprep.subr.mxu0 0.0
    %4011 = vmatpush1.msra.mxu0 %v3981
    %4012 = vmatprep.subr.mxu0 0.0
    %4013 = vmatpush1.msra.mxu0 %v3980
    %4014 = vmatprep.subr.mxu0 0.0
    %4015 = vmatpush1.msra.mxu0 %v3979
    %4016 = vmatprep.subr.mxu0 0.0
    %4017 = vmatpush1.msra.mxu0 %v3978
    %4018 = vmatprep.subr.mxu0 0.0
    %4019 = vmatpush1.msra.mxu0 %v3977
    %4020 = vmatprep.subr.mxu0 0.0
    %4021 = vmatpush1.msra.mxu0 %v3976
    %4022 = vmatprep.subr.mxu0 0.0
    %4023 = vmatpush1.msra.mxu0 %v3975
    %4024 = vmatprep.subr.mxu0 0.0
    %4025 = vmatpush1.msra.mxu0 %v3974
    %4026 = vmatprep.subr.mxu0 0.0
    %4027 = vmatpush2.msra.mxu0 0.0
    %4028 = vmatprep.subr.mxu0 0.0
    %4029 = vmatpush2.msra.mxu0 0.0
    %4030 = vmatprep.subr.mxu0 0.0
    %4031 = vmatpush2.msra.mxu0 0.0
    %4032 = vmatprep.subr.mxu0 0.0
    %4033 = vmatpush2.msra.mxu0 0.0
    %4034 = vmatprep.subr.mxu0 0.0
    %4035 = vmatpush2.msra.mxu0 0.0
    %4036 = vmatprep.subr.mxu0 0.0
    %4037 = vmatpush2.msra.mxu0 0.0
    %4038 = vmatprep.subr.mxu0 0.0
    %4039 = vmatpush2.msra.mxu0 0.0
    %4040 = vmatprep.subr.mxu0 0.0
    %4041 = vmatpush2.msra.mxu0 0.0
    %4042 = vmatprep.subr.mxu0 0.0
    %4043 = vmatpush2.msra.mxu0 0.0
    %4044 = vmatprep.subr.mxu0 0.0
    %4045 = vmatpush2.msra.mxu0 0.0
    %4046 = vmatprep.subr.mxu0 0.0
    %4047 = vmatpush2.msra.mxu0 0.0
    %4048 = vmatprep.subr.mxu0 0.0
    %4049 = vmatpush2.msra.mxu0 0.0
    %4050 = vmatprep.subr.mxu0 0.0
    %4051 = vmatpush2.msra.mxu0 0.0
    %4052 = vmatprep.subr.mxu0 0.0
    %4053 = vmatpush2.msra.mxu0 0.0
    %4054 = vmatprep.subr.mxu0 0.0
    %4055 = vmatpush2.msra.mxu0 0.0
    %4056 = vmatprep.subr.mxu0 0.0
    %4057 = vmatpush2.msra.mxu0 0.0
    %4058 = vmatprep.mubr.f32.mxu0 0.0
    %4059 = vmatmul.mubr.f32.gmra.mxu0 %v3972
    %v4060 = vpop.f32.mrf.mxu0
    %v4061 = vadd.f32 %v3993, %v4060
    %v4062 = vpop.f32.mrf.mxu0
    %4063 = vmatprep.mubr.f32.mxu0 0.0
    %4064 = vmatmul.mubr.f32.gmra.mxu0 %v3973
    %v4065 = vpop.f32.mrf.mxu0
    %v4066 = vadd.f32 %v3993, %v4065
    %v4067 = vpop.f32.mrf.mxu0
    %4068 = vdwg.mxu0
    %v4069 = vadd.f32 %v3823, %v4061
    %v4070 = vadd.f32 %v3824, %v4066
    %v4071 = vld [vmem:[#allocation5 + $0x240] sm:$0xff]
    %v4072 = vld [vmem:[#allocation5 + $0x248] sm:$0xff]
    %v4073 = vld [vmem:[#allocation5 + $0x250] sm:$0xff]
    %v4074 = vld [vmem:[#allocation5 + $0x258] sm:$0xff]
    %v4075 = vlaneseq
    %v4076 = vshrl.u32 %v4075, 7
    %v4077 = vsub.s32 7, %v4076
    %v4078 = vrot.slane %v58, %v4077
    %v4080 = vsel %vm156, %v4069, 0
    %v4083 = vsel %vm156, %v4070, 0
    %4085 = vmatprep.subr.mxu0 0.0
    %4086 = vmatpush1.msra.mxu0 0.0
    %4087 = vmatprep.subr.mxu0 0.0
    %4088 = vmatpush1.msra.mxu0 0.0
    %4089 = vmatprep.subr.mxu0 0.0
    %4090 = vmatpush1.msra.mxu0 0.0
    %4091 = vmatprep.subr.mxu0 0.0
    %4092 = vmatpush1.msra.mxu0 0.0
    %4093 = vmatprep.subr.mxu0 0.0
    %4094 = vmatpush1.msra.mxu0 0.0
    %4095 = vmatprep.subr.mxu0 0.0
    %4096 = vmatpush1.msra.mxu0 0.0
    %4097 = vmatprep.subr.mxu0 0.0
    %4098 = vmatpush1.msra.mxu0 0.0
    %4099 = vmatprep.subr.mxu0 0.0
    %4100 = vmatpush1.msra.mxu0 0.0
    %4101 = vmatprep.subr.mxu0 0.0
    %4102 = vmatpush1.msra.mxu0 0.0
    %4103 = vmatprep.subr.mxu0 0.0
    %4104 = vmatpush1.msra.mxu0 0.0
    %4105 = vmatprep.subr.mxu0 0.0
    %4106 = vmatpush1.msra.mxu0 0.0
    %4107 = vmatprep.subr.mxu0 0.0
    %4108 = vmatpush1.msra.mxu0 0.0
    %4109 = vmatprep.subr.mxu0 0.0
    %4110 = vmatpush1.msra.mxu0 %v4074
    %4111 = vmatprep.subr.mxu0 0.0
    %4112 = vmatpush1.msra.mxu0 %v4073
    %4113 = vmatprep.subr.mxu0 0.0
    %4114 = vmatpush1.msra.mxu0 %v4072
    %4115 = vmatprep.subr.mxu0 0.0
    %4116 = vmatpush1.msra.mxu0 %v4071
    %4117 = vmatprep.subr.mxu0 0.0
    %4118 = vmatpush2.msra.mxu0 0.0
    %4119 = vmatprep.subr.mxu0 0.0
    %4120 = vmatpush2.msra.mxu0 0.0
    %4121 = vmatprep.subr.mxu0 0.0
    %4122 = vmatpush2.msra.mxu0 0.0
    %4123 = vmatprep.subr.mxu0 0.0
    %4124 = vmatpush2.msra.mxu0 0.0
    %4125 = vmatprep.subr.mxu0 0.0
    %4126 = vmatpush2.msra.mxu0 0.0
    %4127 = vmatprep.subr.mxu0 0.0
    %4128 = vmatpush2.msra.mxu0 0.0
    %4129 = vmatprep.subr.mxu0 0.0
    %4130 = vmatpush2.msra.mxu0 0.0
    %4131 = vmatprep.subr.mxu0 0.0
    %4132 = vmatpush2.msra.mxu0 0.0
    %4133 = vmatprep.subr.mxu0 0.0
    %4134 = vmatpush2.msra.mxu0 0.0
    %4135 = vmatprep.subr.mxu0 0.0
    %4136 = vmatpush2.msra.mxu0 0.0
    %4137 = vmatprep.subr.mxu0 0.0
    %4138 = vmatpush2.msra.mxu0 0.0
    %4139 = vmatprep.subr.mxu0 0.0
    %4140 = vmatpush2.msra.mxu0 0.0
    %4141 = vmatprep.subr.mxu0 0.0
    %4142 = vmatpush2.msra.mxu0 0.0
    %4143 = vmatprep.subr.mxu0 0.0
    %4144 = vmatpush2.msra.mxu0 0.0
    %4145 = vmatprep.subr.mxu0 0.0
    %4146 = vmatpush2.msra.mxu0 0.0
    %4147 = vmatprep.subr.mxu0 0.0
    %4148 = vmatpush2.msra.mxu0 0.0
    %4149 = vmatprep.mubr.f32.mxu0 0.0
    %4150 = vmatmul.mubr.f32.gmra.mxu0 %v4080
    %v4151 = vpop.f32.mrf.mxu0
    %v4152 = vadd.f32 %v4078, %v4151
    %v4153 = vpop.f32.mrf.mxu0
    %4154 = vmatprep.mubr.f32.mxu0 0.0
    %4155 = vmatmul.mubr.f32.gmra.mxu0 %v4083
    %v4156 = vpop.f32.mrf.mxu0
    %v4157 = vadd.f32 %v4078, %v4156
    %v4158 = vpop.f32.mrf.mxu0
    %4159 = vdwg.mxu0
    %v4160 = vmax.f32 %v4152, 0.0
    %v4161 = vmax.f32 %v4157, 0.0
    %v4162 = vld [vmem:[#allocation5 + $0x260] sm:$0xff]
    %v4163 = vld [vmem:[#allocation5 + $0x268] sm:$0xff]
    %v4164 = vld [vmem:[#allocation5 + $0x270] sm:$0xff]
    %v4165 = vld [vmem:[#allocation5 + $0x278] sm:$0xff]
    %v4166 = vld [vmem:[#allocation5 + $0x280] sm:$0xff]
    %v4167 = vld [vmem:[#allocation5 + $0x288] sm:$0xff]
    %v4168 = vld [vmem:[#allocation5 + $0x290] sm:$0xff]
    %v4169 = vld [vmem:[#allocation5 + $0x298] sm:$0xff]
    %v4170 = vlaneseq
    %v4171 = vshrl.u32 %v4170, 7
    %v4172 = vsub.s32 0, %v4171
    %v4173 = vrot.slane %v59, %v4172
    %v4175 = vsel %vm74, %v4160, 0
    %v4178 = vsel %vm74, %v4161, 0
    %4180 = vmatprep.subr.mxu0 0.0
    %4181 = vmatpush1.msra.mxu0 0.0
    %4182 = vmatprep.subr.mxu0 0.0
    %4183 = vmatpush1.msra.mxu0 0.0
    %4184 = vmatprep.subr.mxu0 0.0
    %4185 = vmatpush1.msra.mxu0 0.0
    %4186 = vmatprep.subr.mxu0 0.0
    %4187 = vmatpush1.msra.mxu0 0.0
    %4188 = vmatprep.subr.mxu0 0.0
    %4189 = vmatpush1.msra.mxu0 0.0
    %4190 = vmatprep.subr.mxu0 0.0
    %4191 = vmatpush1.msra.mxu0 0.0
    %4192 = vmatprep.subr.mxu0 0.0
    %4193 = vmatpush1.msra.mxu0 0.0
    %4194 = vmatprep.subr.mxu0 0.0
    %4195 = vmatpush1.msra.mxu0 0.0
    %4196 = vmatprep.subr.mxu0 0.0
    %4197 = vmatpush1.msra.mxu0 %v4169
    %4198 = vmatprep.subr.mxu0 0.0
    %4199 = vmatpush1.msra.mxu0 %v4168
    %4200 = vmatprep.subr.mxu0 0.0
    %4201 = vmatpush1.msra.mxu0 %v4167
    %4202 = vmatprep.subr.mxu0 0.0
    %4203 = vmatpush1.msra.mxu0 %v4166
    %4204 = vmatprep.subr.mxu0 0.0
    %4205 = vmatpush1.msra.mxu0 %v4165
    %4206 = vmatprep.subr.mxu0 0.0
    %4207 = vmatpush1.msra.mxu0 %v4164
    %4208 = vmatprep.subr.mxu0 0.0
    %4209 = vmatpush1.msra.mxu0 %v4163
    %4210 = vmatprep.subr.mxu0 0.0
    %4211 = vmatpush1.msra.mxu0 %v4162
    %4212 = vmatprep.subr.mxu0 0.0
    %4213 = vmatpush2.msra.mxu0 0.0
    %4214 = vmatprep.subr.mxu0 0.0
    %4215 = vmatpush2.msra.mxu0 0.0
    %4216 = vmatprep.subr.mxu0 0.0
    %4217 = vmatpush2.msra.mxu0 0.0
    %4218 = vmatprep.subr.mxu0 0.0
    %4219 = vmatpush2.msra.mxu0 0.0
    %4220 = vmatprep.subr.mxu0 0.0
    %4221 = vmatpush2.msra.mxu0 0.0
    %4222 = vmatprep.subr.mxu0 0.0
    %4223 = vmatpush2.msra.mxu0 0.0
    %4224 = vmatprep.subr.mxu0 0.0
    %4225 = vmatpush2.msra.mxu0 0.0
    %4226 = vmatprep.subr.mxu0 0.0
    %4227 = vmatpush2.msra.mxu0 0.0
    %4228 = vmatprep.subr.mxu0 0.0
    %4229 = vmatpush2.msra.mxu0 0.0
    %4230 = vmatprep.subr.mxu0 0.0
    %4231 = vmatpush2.msra.mxu0 0.0
    %4232 = vmatprep.subr.mxu0 0.0
    %4233 = vmatpush2.msra.mxu0 0.0
    %4234 = vmatprep.subr.mxu0 0.0
    %4235 = vmatpush2.msra.mxu0 0.0
    %4236 = vmatprep.subr.mxu0 0.0
    %4237 = vmatpush2.msra.mxu0 0.0
    %4238 = vmatprep.subr.mxu0 0.0
    %4239 = vmatpush2.msra.mxu0 0.0
    %4240 = vmatprep.subr.mxu0 0.0
    %4241 = vmatpush2.msra.mxu0 0.0
    %4242 = vmatprep.subr.mxu0 0.0
    %4243 = vmatpush2.msra.mxu0 0.0
    %4244 = vmatprep.mubr.f32.mxu0 0.0
    %4245 = vmatmul.mubr.f32.gmra.mxu0 %v4175
    %v4246 = vpop.f32.mrf.mxu0
    %v4247 = vadd.f32 %v4173, %v4246
    %v4248 = vpop.f32.mrf.mxu0
    %4249 = vmatprep.mubr.f32.mxu0 0.0
    %4250 = vmatmul.mubr.f32.gmra.mxu0 %v4178
    %v4251 = vpop.f32.mrf.mxu0
    %v4252 = vadd.f32 %v4173, %v4251
    %v4253 = vpop.f32.mrf.mxu0
    %4254 = vdwg.mxu0
    %4255 = vadd.xlane.f32.xlu0 %v4247
    %v4256 = vpop.xlane.xlu0 %4255
    %4257 = vadd.xlane.f32.xlu0 %v4252
    %v4258 = vpop.xlane.xlu0 %4257
    %v4259 = vrcp.pop 128.0
    %v4260 = vmul.f32 %v4256, %v4259
    %v4261 = vmul.f32 %v4258, %v4259
    %v4262 = vmul.f32 %v4247, %v4247
    %v4263 = vmul.f32 %v4252, %v4252
    %4264 = vadd.xlane.f32.xlu0 %v4262
    %v4265 = vpop.xlane.xlu0 %4264
    %4266 = vadd.xlane.f32.xlu0 %v4263
    %v4267 = vpop.xlane.xlu0 %4266
    %v4268 = vmul.f32 %v4265, %v4259
    %v4269 = vmul.f32 %v4267, %v4259
    %v4270 = vmul.f32 %v4260, %v4260
    %v4271 = vmul.f32 %v4261, %v4261
    %v4272 = vsub.f32 %v4268, %v4270
    %v4273 = vsub.f32 %v4269, %v4271
    %v4274 = vsub.f32 %v4247, %v4260
    %v4275 = vsub.f32 %v4252, %v4261
    %v4276 = vadd.f32 %v4272, 1e-05
    %v4277 = vadd.f32 %v4273, 1e-05
    %v4278 = vrsqrt.pop %v4276
    %v4279 = vrsqrt.pop %v4277
    %v4280 = vmul.f32 %v4274, %v4278
    %v4281 = vmul.f32 %v4275, %v4279
    %v4282 = vlaneseq
    %v4283 = vshrl.u32 %v4282, 7
    %v4284 = vsub.s32 1, %v4283
    %v4285 = vrot.slane %v59, %v4284
    %v4286 = vmul.f32 %v4280, %v4285
    %v4287 = vmul.f32 %v4281, %v4285
    %v4288 = vlaneseq
    %v4289 = vshrl.u32 %v4288, 7
    %v4290 = vsub.s32 2, %v4289
    %v4291 = vrot.slane %v59, %v4290
    %v4292 = vadd.f32 %v4286, %v4291
    %v4293 = vadd.f32 %v4287, %v4291
    %4294 = vst [vmem:[#allocation8] sm:$0xff] %v4292
    %4295 = vst [vmem:[#allocation8 + $0x8] sm:$0xff] %v4293
    // Predicated region
    $region26: #{tpu_custom_call.1} parent=1 // pred_check
      _
    $region27: #{tpu_custom_call.1} parent=1 // pred_check_branch
      %4297 = sbr.rel (0) target = $region29
    $region28: #{tpu_custom_call.1} parent=1 // pred_region
      %s4299 = ssub.s32 256, 256
      %4300 = vsyncadd [#allocation4], %s4299
      %s4301 = sshll.u32 [#allocation8], 4
      %s4302 = int_to_ptr.vmem [resolvable:$true] %s4301
      %4307 = dma.vmem_to_hbm [thread:$0]  %s4302, 256, %s3, [#allocation4], 128, 128, 8
    $region29: #{tpu_custom_call.1} parent=1 // pred_fallthru
      _
    // Predicated region
    $region30: #{tpu_custom_call.1} parent=1 // pred_check
      _
    $region31: #{tpu_custom_call.1} parent=1 // pred_check_branch
      %4309 = sbr.rel (0) target = $region33
    $region32: #{tpu_custom_call.1} parent=1 // pred_region
      %4310 = dma.done [#allocation4], 256
    $region33: #{tpu_custom_call.1} parent=1 // pred_fallthru
      _
    %4311 = vsyncpa [#allocation3], 1
    %4312 = vsyncpa [#allocation6], 1
    %4313 = vsyncpa [#allocation4], 1

</llo_original>
